<compile_context>
chip_gen: v7x
topology: tpu7x:2x2x1
jax: 0.10.0
libtpu: 0.0.40
codegen_flags: <defaults>
</compile_context>

<pallas_src>
import jax
import jax.numpy as jnp
from jax.experimental import pallas as pl
from jax.experimental.pallas import tpu as pltpu

# ---- small synthetic "bert-base"-like config (lane-aligned) ------------------
HIDDEN = 128         # config.hidden_size (padded to the 128-lane width)
HEADS = 4            # config.num_attention_heads
HEAD_DIM = HIDDEN // HEADS
INTER = 4 * HIDDEN   # config.intermediate_size
TOTAL_LAYERS = 6     # config.num_hidden_layers (small)
CUT_LAYER = 4
NUM_SERVER_LAYERS = TOTAL_LAYERS - CUT_LAYER
NUM_CLASSES = 2
CLS_PAD = 128        # lane-dense classifier output width (sliced to 2 in glue)
LN_EPS = 1e-12
ATTN_SCALE = 1.0 / (HEAD_DIM ** 0.5)
_GELU_C = 0.7978845608028654  # sqrt(2/pi)


# ---------------------------- fused Pallas kernel ----------------------------
def _layernorm(y, gamma, beta):
    mean = jnp.mean(y, axis=-1, keepdims=True)
    var = jnp.mean(jnp.square(y - mean), axis=-1, keepdims=True)
    return (y - mean) * jax.lax.rsqrt(var + LN_EPS) * gamma + beta


def _gelu_tanh(y):
    # tanh-approx GELU (EUP). HF BERT uses exact erf GELU; the difference is well
    # below the bf16-matmul comparison tolerance used for this synthetic model.
    return 0.5 * y * (1.0 + jnp.tanh(_GELU_C * (y + 0.044715 * (y * y * y))))


def _bert_server_kernel(
    x_ref,        # (S, H)         f32   this batch element's hidden states
    mask_ref,     # (HEADS, S, S)  f32   additive attention mask (0 / -10000)
    qkv_w_ref,    # (L, H, 3H)     bf16  concatenated Q|K|V (scale folded into Q)
    qkv_b_ref,    # (L, 1, 3H)     f32
    ao_w_ref,     # (L, H, H)      bf16  attention output projection
    ao_b_ref,     # (L, 1, H)      f32
    ln1_g_ref,    # (L, 1, H)      f32
    ln1_b_ref,    # (L, 1, H)      f32
    i_w_ref,      # (L, H, INTER)  bf16  FFN intermediate
    i_b_ref,      # (L, 1, INTER)  f32
    o_w_ref,      # (L, INTER, H)  bf16  FFN output
    o_b_ref,      # (L, 1, H)      f32
    ln2_g_ref,    # (L, 1, H)      f32
    ln2_b_ref,    # (L, 1, H)      f32
    pool_w_ref,   # (H, H)         bf16  pooler
    pool_b_ref,   # (1, H)         f32
    cls_w_ref,    # (H, CLS_PAD)   bf16  classifier (zero-padded cols)
    cls_b_ref,    # (1, CLS_PAD)   f32
    logits_ref,   # (1, CLS_PAD)   f32   output for this batch element
):
    f32 = jnp.float32
    bf16 = jnp.bfloat16

    x = x_ref[...]                       # (S, H) f32
    mask = mask_ref[...]                 # (HEADS, S, S) loaded once, reused per layer

    for li in range(NUM_SERVER_LAYERS):
        # ---- fused QKV projection: one MXU pass, bf16 inputs, f32 accumulate
        qkv = jnp.dot(x.astype(bf16), qkv_w_ref[li],
                      preferred_element_type=f32) + qkv_b_ref[li]        # (S, 3H)
        q = qkv[:, 0 * HIDDEN:1 * HIDDEN]        # lane-aligned 128-wide slices
        k = qkv[:, 1 * HIDDEN:2 * HIDDEN]
        v = qkv[:, 2 * HIDDEN:3 * HIDDEN]

        # ---- head split (S, H) -> (HEADS, S, Dh): leading-axis stack of lane
        # slices (avoids a lane-splitting reshape/transpose in-kernel).
        qh = jnp.stack([q[:, h * HEAD_DIM:(h + 1) * HEAD_DIM] for h in range(HEADS)], 0)
        kh = jnp.stack([k[:, h * HEAD_DIM:(h + 1) * HEAD_DIM] for h in range(HEADS)], 0)
        vh = jnp.stack([v[:, h * HEAD_DIM:(h + 1) * HEAD_DIM] for h in range(HEADS)], 0)

        # ---- batched attention over all heads (1/sqrt(Dh) already in W_q)
        s = jnp.einsum('hqd,hkd->hqk', qh, kh,
                       preferred_element_type=f32) + mask                # (HEADS,S,S)
        m = jnp.max(s, axis=-1, keepdims=True)
        p = jnp.exp(s - m)
        denom = jnp.sum(p, axis=-1, keepdims=True)
        p = p * pl.reciprocal(denom, approx=True)                        # EUP recip
        ctx = jnp.einsum('hqk,hkd->hqd', p, vh,
                         preferred_element_type=f32)                     # (HEADS,S,Dh)
        ctx = jnp.concatenate([ctx[h] for h in range(HEADS)], axis=-1)   # (S, H)

        # ---- attention output projection + residual + LayerNorm (f32)
        attn_out = jnp.dot(ctx.astype(bf16), ao_w_ref[li],
                           preferred_element_type=f32) + ao_b_ref[li]
        x = _layernorm(attn_out + x, ln1_g_ref[li], ln1_b_ref[li])

        # ---- FFN (tanh GELU) + residual + LayerNorm (f32)
        inter = jnp.dot(x.astype(bf16), i_w_ref[li],
                        preferred_element_type=f32) + i_b_ref[li]
        inter = _gelu_tanh(inter)
        ffn = jnp.dot(inter.astype(bf16), o_w_ref[li],
                      preferred_element_type=f32) + o_b_ref[li]
        x = _layernorm(ffn + x, ln2_g_ref[li], ln2_b_ref[li])

    # ---- pooler (tanh on [CLS] token, i.e. row 0 of this element) + classifier
    cls_tok = x[0:1, :]                                                  # (1, H)
    pooled = jnp.tanh(
        jnp.dot(cls_tok.astype(bf16), pool_w_ref[...],
                preferred_element_type=f32) + pool_b_ref[...])           # (1, H)
    logits = jnp.dot(pooled.astype(bf16), cls_w_ref[...],
                     preferred_element_type=f32) + cls_b_ref[...]        # (1, CLS_PAD)
    logits_ref[...] = logits.astype(logits_ref.dtype)


# ---------------------------- parameters -------------------------------------
def init_params(key):
    """Deterministic synthetic parameters, pre-packed for the fused kernel."""
    def lin(k, fan_in, fan_out):
        w = 0.02 * jax.random.normal(k, (fan_in, fan_out), jnp.float32)
        b = jnp.zeros((fan_out,), jnp.float32)
        return w, b

    keys = jax.random.split(key, NUM_SERVER_LAYERS + 2)
    qkv_w, qkv_b, ao_w, ao_b = [], [], [], []
    i_w, i_b, o_w, o_b = [], [], [], []
    ln1_g, ln1_b, ln2_g, ln2_b = [], [], [], []
    for li in range(NUM_SERVER_LAYERS):
        ks = jax.random.split(keys[li], 6)
        qw, qb = lin(ks[0], HIDDEN, HIDDEN)
        kw, kb = lin(ks[1], HIDDEN, HIDDEN)
        vw, vb = lin(ks[2], HIDDEN, HIDDEN)
        # fold the attention scale into the Q projection (zero runtime cost)
        qw = qw * ATTN_SCALE
        qb = qb * ATTN_SCALE
        aow, aob = lin(ks[3], HIDDEN, HIDDEN)
        iw, ib = lin(ks[4], HIDDEN, INTER)
        ow, ob = lin(ks[5], INTER, HIDDEN)
        qkv_w.append(jnp.concatenate([qw, kw, vw], axis=1))       # (H, 3H)
        qkv_b.append(jnp.concatenate([qb, kb, vb])[None, :])      # (1, 3H)
        ao_w.append(aow); ao_b.append(aob[None, :])
        i_w.append(iw);   i_b.append(ib[None, :])
        o_w.append(ow);   o_b.append(ob[None, :])
        ln1_g.append(jnp.ones((1, HIDDEN), jnp.float32))
        ln1_b.append(jnp.zeros((1, HIDDEN), jnp.float32))
        ln2_g.append(jnp.ones((1, HIDDEN), jnp.float32))
        ln2_b.append(jnp.zeros((1, HIDDEN), jnp.float32))

    pw, pb = lin(keys[-2], HIDDEN, HIDDEN)
    cw, cb = lin(keys[-1], HIDDEN, NUM_CLASSES)
    cw_pad = jnp.zeros((HIDDEN, CLS_PAD), jnp.float32).at[:, :NUM_CLASSES].set(cw)
    cb_pad = jnp.zeros((1, CLS_PAD), jnp.float32).at[:, :NUM_CLASSES].set(cb)

    bf16 = jnp.bfloat16
    return dict(
        qkv_w=jnp.stack(qkv_w).astype(bf16), qkv_b=jnp.stack(qkv_b),
        ao_w=jnp.stack(ao_w).astype(bf16),   ao_b=jnp.stack(ao_b),
        ln1_g=jnp.stack(ln1_g), ln1_b=jnp.stack(ln1_b),
        i_w=jnp.stack(i_w).astype(bf16),     i_b=jnp.stack(i_b),
        o_w=jnp.stack(o_w).astype(bf16),     o_b=jnp.stack(o_b),
        ln2_g=jnp.stack(ln2_g), ln2_b=jnp.stack(ln2_b),
        pool_w=pw.astype(bf16), pool_b=pb[None, :],
        cls_w=cw_pad.astype(bf16), cls_b=cb_pad,
    )


_WEIGHT_ORDER = ("qkv_w", "qkv_b", "ao_w", "ao_b", "ln1_g", "ln1_b",
                 "i_w", "i_b", "o_w", "o_b", "ln2_g", "ln2_b",
                 "pool_w", "pool_b", "cls_w", "cls_b")


def _full_spec(arr):
    """Full-array VMEM block with a constant index_map: DMA'd once, resident."""
    idx_maps = {2: lambda b: (0, 0), 3: lambda b: (0, 0, 0)}
    return pl.BlockSpec(arr.shape, idx_maps[arr.ndim])


# ---------------------------- forward (glue) ----------------------------------
def bert_server_forward(params, hidden_states, attention_mask, labels=None):
    B, S, H = hidden_states.shape
    assert H == HIDDEN
    # extended additive mask, pre-broadcast once to (B, HEADS, S, S)
    ext = (1.0 - attention_mask.astype(jnp.float32)) * -10000.0          # (B, S)
    mask = jnp.broadcast_to(ext[:, None, None, :], (B, HEADS, S, S))

    weights = [params[n] for n in _WEIGHT_ORDER]

    in_specs = [
        pl.BlockSpec((None, S, HIDDEN), lambda b: (b, 0, 0)),            # hidden states
        pl.BlockSpec((None, HEADS, S, S), lambda b: (b, 0, 0, 0)),       # mask
    ] + [_full_spec(w) for w in weights]

    flops = 2 * B * (NUM_SERVER_LAYERS * (S * HIDDEN * 3 * HIDDEN
                                          + 2 * HEADS * S * S * HEAD_DIM
                                          + S * HIDDEN * HIDDEN
                                          + 2 * S * HIDDEN * INTER)
                     + 2 * HIDDEN * HIDDEN)
    transcend = B * (NUM_SERVER_LAYERS * (HEADS * S * S + S * INTER) + HIDDEN)
    bytes_acc = (sum(int(w.size) * w.dtype.itemsize for w in weights)
                 + hidden_states.size * 4 + mask.size * 4 + B * CLS_PAD * 4)

    logits_pad = pl.pallas_call(
        _bert_server_kernel,
        grid=(B,),
        out_shape=jax.ShapeDtypeStruct((B, 1, CLS_PAD), jnp.float32),
        in_specs=in_specs,
        out_specs=pl.BlockSpec((None, 1, CLS_PAD), lambda b: (b, 0, 0)),
        compiler_params=pltpu.CompilerParams(
            dimension_semantics=("parallel",),       # v7x: shard batch across 2 TCs
            vmem_limit_bytes=32 * 1024 * 1024),
        cost_estimate=pl.CostEstimate(flops=int(flops),
                                      transcendentals=int(transcend),
                                      bytes_accessed=int(bytes_acc)),
    )(hidden_states, mask, *weights)

    logits = logits_pad[:, 0, :NUM_CLASSES]                              # (B, 2)
    loss = None
    if labels is not None:
        # CrossEntropyLoss (mean over batch) — tiny, done in plain JAX glue
        logp = jax.nn.log_softmax(logits, axis=-1)
        loss = -jnp.mean(jnp.take_along_axis(logp, labels[:, None], axis=-1))
    return logits, loss


# ------------------------------- main ----------------------------------------
if __name__ == "__main__":
    B, S = 2, 8
    key = jax.random.PRNGKey(0)
    k_param, k_hidden, k_label = jax.random.split(key, 3)

    params = init_params(k_param)
    hidden_states = jax.random.normal(k_hidden, (B, S, HIDDEN), jnp.float32)
    attention_mask = jnp.ones((B, S), jnp.int32).at[1, 6:].set(0)  # some padding
    labels = jax.random.randint(k_label, (B,), 0, NUM_CLASSES)

    fwd = jax.jit(bert_server_forward)
    logits, loss = fwd(params, hidden_states, attention_mask, labels)
    jax.block_until_ready((logits, loss))
    assert logits.shape == (B, NUM_CLASSES)
    assert loss.shape == ()
    print("KERNEL_OK")
</pallas_src>

<mosaic_0001>
module attributes {stable_mosaic.version = 11 : i64} {
  func.func @_bert_server_kernel(%arg0: i32, %arg1: memref<1x8x128xf32, #tpu.memory_space<vmem>>, %arg2: memref<1x4x8x8xf32, #tpu.memory_space<vmem>>, %arg3: memref<2x128x384xbf16, #tpu.memory_space<vmem>>, %arg4: memref<2x1x384xf32, #tpu.memory_space<vmem>>, %arg5: memref<2x128x128xbf16, #tpu.memory_space<vmem>>, %arg6: memref<2x1x128xf32, #tpu.memory_space<vmem>>, %arg7: memref<2x1x128xf32, #tpu.memory_space<vmem>>, %arg8: memref<2x1x128xf32, #tpu.memory_space<vmem>>, %arg9: memref<2x128x512xbf16, #tpu.memory_space<vmem>>, %arg10: memref<2x1x512xf32, #tpu.memory_space<vmem>>, %arg11: memref<2x512x128xbf16, #tpu.memory_space<vmem>>, %arg12: memref<2x1x128xf32, #tpu.memory_space<vmem>>, %arg13: memref<2x1x128xf32, #tpu.memory_space<vmem>>, %arg14: memref<2x1x128xf32, #tpu.memory_space<vmem>>, %arg15: memref<128x128xbf16, #tpu.memory_space<vmem>>, %arg16: memref<1x128xf32, #tpu.memory_space<vmem>>, %arg17: memref<128x128xbf16, #tpu.memory_space<vmem>>, %arg18: memref<1x128xf32, #tpu.memory_space<vmem>>, %arg19: memref<1x1x128xf32, #tpu.memory_space<vmem>>) attributes {dimension_semantics = [#tpu.dimension_semantics<parallel>], iteration_bounds = array<i64: 2>, scalar_prefetch = 0 : i64, scratch_operands = 0 : i64, tpu.core_type = #tpu.core_type<tc>, window_params = [{transform_indices = @transform_0, window_bounds = array<i64: 1, 8, 128>}, {transform_indices = @transform_1, window_bounds = array<i64: 1, 4, 8, 8>}, {pipeline_mode = #tpu.pipeline_mode<synchronous>, transform_indices = @transform_2, window_bounds = array<i64: 2, 128, 384>}, {pipeline_mode = #tpu.pipeline_mode<synchronous>, transform_indices = @transform_3, window_bounds = array<i64: 2, 1, 384>}, {pipeline_mode = #tpu.pipeline_mode<synchronous>, transform_indices = @transform_4, window_bounds = array<i64: 2, 128, 128>}, {pipeline_mode = #tpu.pipeline_mode<synchronous>, transform_indices = @transform_5, window_bounds = array<i64: 2, 1, 128>}, {pipeline_mode = #tpu.pipeline_mode<synchronous>, transform_indices = @transform_6, window_bounds = array<i64: 2, 1, 128>}, {pipeline_mode = #tpu.pipeline_mode<synchronous>, transform_indices = @transform_7, window_bounds = array<i64: 2, 1, 128>}, {pipeline_mode = #tpu.pipeline_mode<synchronous>, transform_indices = @transform_8, window_bounds = array<i64: 2, 128, 512>}, {pipeline_mode = #tpu.pipeline_mode<synchronous>, transform_indices = @transform_9, window_bounds = array<i64: 2, 1, 512>}, {pipeline_mode = #tpu.pipeline_mode<synchronous>, transform_indices = @transform_10, window_bounds = array<i64: 2, 512, 128>}, {pipeline_mode = #tpu.pipeline_mode<synchronous>, transform_indices = @transform_11, window_bounds = array<i64: 2, 1, 128>}, {pipeline_mode = #tpu.pipeline_mode<synchronous>, transform_indices = @transform_12, window_bounds = array<i64: 2, 1, 128>}, {pipeline_mode = #tpu.pipeline_mode<synchronous>, transform_indices = @transform_13, window_bounds = array<i64: 2, 1, 128>}, {pipeline_mode = #tpu.pipeline_mode<synchronous>, transform_indices = @transform_14, window_bounds = array<i64: 128, 128>}, {pipeline_mode = #tpu.pipeline_mode<synchronous>, transform_indices = @transform_15, window_bounds = array<i64: 1, 128>}, {pipeline_mode = #tpu.pipeline_mode<synchronous>, transform_indices = @transform_16, window_bounds = array<i64: 128, 128>}, {pipeline_mode = #tpu.pipeline_mode<synchronous>, transform_indices = @transform_17, window_bounds = array<i64: 1, 128>}, {transform_indices = @transform_18, window_bounds = array<i64: 1, 1, 128>}]} {
    %c0 = arith.constant 0 : index
    %c0_0 = arith.constant 0 : index
    %c0_1 = arith.constant 0 : index
    %0 = vector.load %arg1[%c0, %c0_0, %c0_1] : memref<1x8x128xf32, #tpu.memory_space<vmem>>, vector<1x8x128xf32>
    %1 = vector.shape_cast %0 : vector<1x8x128xf32> to vector<8x128xf32>
    %c0_2 = arith.constant 0 : index
    %c0_3 = arith.constant 0 : index
    %c0_4 = arith.constant 0 : index
    %c0_5 = arith.constant 0 : index
    %2 = vector.load %arg2[%c0_2, %c0_3, %c0_4, %c0_5] : memref<1x4x8x8xf32, #tpu.memory_space<vmem>>, vector<1x4x8x8xf32>
    %3 = vector.shape_cast %2 : vector<1x4x8x8xf32> to vector<4x8x8xf32>
    %4 = arith.truncf %1 : vector<8x128xf32> to vector<8x128xbf16>
    %c0_6 = arith.constant 0 : index
    %c0_7 = arith.constant 0 : index
    %c0_8 = arith.constant 0 : index
    %5 = vector.load %arg3[%c0_6, %c0_7, %c0_8] : memref<2x128x384xbf16, #tpu.memory_space<vmem>>, vector<1x128x384xbf16>
    %6 = vector.shape_cast %5 : vector<1x128x384xbf16> to vector<128x384xbf16>
    %cst = arith.constant dense<0.000000e+00> : vector<8x384xf32>
    %7 = tpu.matmul %4, %6, %cst {dimension_numbers = #tpu.dot_dimension_numbers<[1], [0], [0], [1], [0, 0, 1, 1], [], []>} : vector<8x128xbf16>, vector<128x384xbf16>, vector<8x384xf32> -> vector<8x384xf32>
    %c0_9 = arith.constant 0 : index
    %c0_10 = arith.constant 0 : index
    %c0_11 = arith.constant 0 : index
    %8 = vector.load %arg4[%c0_9, %c0_10, %c0_11] : memref<2x1x384xf32, #tpu.memory_space<vmem>>, vector<1x1x384xf32>
    %9 = vector.shape_cast %8 : vector<1x1x384xf32> to vector<1x384xf32>
    %10 = vector.broadcast %9 : vector<1x384xf32> to vector<8x384xf32>
    %11 = arith.addf %7, %10 : vector<8x384xf32>
    %12 = vector.extract_strided_slice %11 {offsets = [0, 0], sizes = [8, 128], strides = [1, 1]} : vector<8x384xf32> to vector<8x128xf32>
    %13 = vector.extract_strided_slice %11 {offsets = [0, 128], sizes = [8, 128], strides = [1, 1]} : vector<8x384xf32> to vector<8x128xf32>
    %14 = vector.extract_strided_slice %11 {offsets = [0, 256], sizes = [8, 128], strides = [1, 1]} : vector<8x384xf32> to vector<8x128xf32>
    %15 = vector.extract_strided_slice %12 {offsets = [0, 0], sizes = [8, 32], strides = [1, 1]} : vector<8x128xf32> to vector<8x32xf32>
    %16 = vector.extract_strided_slice %12 {offsets = [0, 32], sizes = [8, 32], strides = [1, 1]} : vector<8x128xf32> to vector<8x32xf32>
    %17 = vector.extract_strided_slice %12 {offsets = [0, 64], sizes = [8, 32], strides = [1, 1]} : vector<8x128xf32> to vector<8x32xf32>
    %18 = vector.extract_strided_slice %12 {offsets = [0, 96], sizes = [8, 32], strides = [1, 1]} : vector<8x128xf32> to vector<8x32xf32>
    %19 = vector.shape_cast %15 : vector<8x32xf32> to vector<1x8x32xf32>
    %20 = vector.shape_cast %16 : vector<8x32xf32> to vector<1x8x32xf32>
    %21 = vector.shape_cast %17 : vector<8x32xf32> to vector<1x8x32xf32>
    %22 = vector.shape_cast %18 : vector<8x32xf32> to vector<1x8x32xf32>
    %23 = tpu.concatenate %19, %20, %21, %22 in 0 : vector<1x8x32xf32>, vector<1x8x32xf32>, vector<1x8x32xf32>, vector<1x8x32xf32> -> vector<4x8x32xf32>
    %24 = vector.extract_strided_slice %13 {offsets = [0, 0], sizes = [8, 32], strides = [1, 1]} : vector<8x128xf32> to vector<8x32xf32>
    %25 = vector.extract_strided_slice %13 {offsets = [0, 32], sizes = [8, 32], strides = [1, 1]} : vector<8x128xf32> to vector<8x32xf32>
    %26 = vector.extract_strided_slice %13 {offsets = [0, 64], sizes = [8, 32], strides = [1, 1]} : vector<8x128xf32> to vector<8x32xf32>
    %27 = vector.extract_strided_slice %13 {offsets = [0, 96], sizes = [8, 32], strides = [1, 1]} : vector<8x128xf32> to vector<8x32xf32>
    %28 = vector.shape_cast %24 : vector<8x32xf32> to vector<1x8x32xf32>
    %29 = vector.shape_cast %25 : vector<8x32xf32> to vector<1x8x32xf32>
    %30 = vector.shape_cast %26 : vector<8x32xf32> to vector<1x8x32xf32>
    %31 = vector.shape_cast %27 : vector<8x32xf32> to vector<1x8x32xf32>
    %32 = tpu.concatenate %28, %29, %30, %31 in 0 : vector<1x8x32xf32>, vector<1x8x32xf32>, vector<1x8x32xf32>, vector<1x8x32xf32> -> vector<4x8x32xf32>
    %33 = vector.extract_strided_slice %14 {offsets = [0, 0], sizes = [8, 32], strides = [1, 1]} : vector<8x128xf32> to vector<8x32xf32>
    %34 = vector.extract_strided_slice %14 {offsets = [0, 32], sizes = [8, 32], strides = [1, 1]} : vector<8x128xf32> to vector<8x32xf32>
    %35 = vector.extract_strided_slice %14 {offsets = [0, 64], sizes = [8, 32], strides = [1, 1]} : vector<8x128xf32> to vector<8x32xf32>
    %36 = vector.extract_strided_slice %14 {offsets = [0, 96], sizes = [8, 32], strides = [1, 1]} : vector<8x128xf32> to vector<8x32xf32>
    %37 = vector.shape_cast %33 : vector<8x32xf32> to vector<1x8x32xf32>
    %38 = vector.shape_cast %34 : vector<8x32xf32> to vector<1x8x32xf32>
    %39 = vector.shape_cast %35 : vector<8x32xf32> to vector<1x8x32xf32>
    %40 = vector.shape_cast %36 : vector<8x32xf32> to vector<1x8x32xf32>
    %41 = tpu.concatenate %37, %38, %39, %40 in 0 : vector<1x8x32xf32>, vector<1x8x32xf32>, vector<1x8x32xf32>, vector<1x8x32xf32> -> vector<4x8x32xf32>
    "tpu.trace_start"() <{level = 10 : i32, message = "hqd,hkd->hqk"}> : () -> ()
    %cst_12 = arith.constant dense<0.000000e+00> : vector<4x8x8xf32>
    %42 = tpu.matmul %23, %32, %cst_12 {dimension_numbers = #tpu.dot_dimension_numbers<[2], [2], [1], [1], [0, 0, 0, 1, 1, 1], [0], [0]>} : vector<4x8x32xf32>, vector<4x8x32xf32>, vector<4x8x8xf32> -> vector<4x8x8xf32>
    "tpu.trace_stop"() : () -> ()
    %43 = arith.addf %42, %3 : vector<4x8x8xf32>
    %cst_13 = arith.constant dense<0xFF800000> : vector<4x8xf32>
    %44 = vector.multi_reduction <maximumf>, %43, %cst_13 [2] : vector<4x8x8xf32> to vector<4x8xf32>
    %45 = vector.shape_cast %44 : vector<4x8xf32> to vector<4x8x1xf32>
    %46 = vector.broadcast %45 : vector<4x8x1xf32> to vector<4x8x8xf32>
    %47 = arith.subf %43, %46 : vector<4x8x8xf32>
    %48 = math.exp %47 : vector<4x8x8xf32>
    %cst_14 = arith.constant dense<0.000000e+00> : vector<4x8xf32>
    %49 = vector.multi_reduction <add>, %48, %cst_14 [2] : vector<4x8x8xf32> to vector<4x8xf32>
    %50 = vector.shape_cast %49 : vector<4x8xf32> to vector<4x8x1xf32>
    %51 = tpu.reciprocal %50 {approx = true} : vector<4x8x1xf32> -> vector<4x8x1xf32>
    %52 = vector.broadcast %51 : vector<4x8x1xf32> to vector<4x8x8xf32>
    %53 = arith.mulf %48, %52 : vector<4x8x8xf32>
    "tpu.trace_start"() <{level = 10 : i32, message = "hqk,hkd->hqd"}> : () -> ()
    %cst_15 = arith.constant dense<0.000000e+00> : vector<4x8x32xf32>
    %54 = tpu.matmul %53, %41, %cst_15 {dimension_numbers = #tpu.dot_dimension_numbers<[2], [1], [1], [2], [0, 0, 0, 1, 1, 2], [0], [0]>} : vector<4x8x8xf32>, vector<4x8x32xf32>, vector<4x8x32xf32> -> vector<4x8x32xf32>
    "tpu.trace_stop"() : () -> ()
    %55 = vector.extract_strided_slice %54 {offsets = [0, 0, 0], sizes = [1, 8, 32], strides = [1, 1, 1]} : vector<4x8x32xf32> to vector<1x8x32xf32>
    %56 = vector.shape_cast %55 : vector<1x8x32xf32> to vector<8x32xf32>
    %57 = vector.extract_strided_slice %54 {offsets = [1, 0, 0], sizes = [1, 8, 32], strides = [1, 1, 1]} : vector<4x8x32xf32> to vector<1x8x32xf32>
    %58 = vector.shape_cast %57 : vector<1x8x32xf32> to vector<8x32xf32>
    %59 = vector.extract_strided_slice %54 {offsets = [2, 0, 0], sizes = [1, 8, 32], strides = [1, 1, 1]} : vector<4x8x32xf32> to vector<1x8x32xf32>
    %60 = vector.shape_cast %59 : vector<1x8x32xf32> to vector<8x32xf32>
    %61 = vector.extract_strided_slice %54 {offsets = [3, 0, 0], sizes = [1, 8, 32], strides = [1, 1, 1]} : vector<4x8x32xf32> to vector<1x8x32xf32>
    %62 = vector.shape_cast %61 : vector<1x8x32xf32> to vector<8x32xf32>
    %63 = tpu.concatenate %56, %58, %60, %62 in 1 : vector<8x32xf32>, vector<8x32xf32>, vector<8x32xf32>, vector<8x32xf32> -> vector<8x128xf32>
    %64 = arith.truncf %63 : vector<8x128xf32> to vector<8x128xbf16>
    %c0_16 = arith.constant 0 : index
    %c0_17 = arith.constant 0 : index
    %c0_18 = arith.constant 0 : index
    %65 = vector.load %arg5[%c0_16, %c0_17, %c0_18] : memref<2x128x128xbf16, #tpu.memory_space<vmem>>, vector<1x128x128xbf16>
    %66 = vector.shape_cast %65 : vector<1x128x128xbf16> to vector<128x128xbf16>
    %cst_19 = arith.constant dense<0.000000e+00> : vector<8x128xf32>
    %67 = tpu.matmul %64, %66, %cst_19 {dimension_numbers = #tpu.dot_dimension_numbers<[1], [0], [0], [1], [0, 0, 1, 1], [], []>} : vector<8x128xbf16>, vector<128x128xbf16>, vector<8x128xf32> -> vector<8x128xf32>
    %c0_20 = arith.constant 0 : index
    %c0_21 = arith.constant 0 : index
    %c0_22 = arith.constant 0 : index
    %68 = vector.load %arg6[%c0_20, %c0_21, %c0_22] : memref<2x1x128xf32, #tpu.memory_space<vmem>>, vector<1x1x128xf32>
    %69 = vector.shape_cast %68 : vector<1x1x128xf32> to vector<1x128xf32>
    %70 = vector.broadcast %69 : vector<1x128xf32> to vector<8x128xf32>
    %71 = arith.addf %67, %70 : vector<8x128xf32>
    %72 = arith.addf %71, %1 : vector<8x128xf32>
    %c0_23 = arith.constant 0 : index
    %c0_24 = arith.constant 0 : index
    %c0_25 = arith.constant 0 : index
    %73 = vector.load %arg7[%c0_23, %c0_24, %c0_25] : memref<2x1x128xf32, #tpu.memory_space<vmem>>, vector<1x1x128xf32>
    %74 = vector.shape_cast %73 : vector<1x1x128xf32> to vector<1x128xf32>
    %c0_26 = arith.constant 0 : index
    %c0_27 = arith.constant 0 : index
    %c0_28 = arith.constant 0 : index
    %75 = vector.load %arg8[%c0_26, %c0_27, %c0_28] : memref<2x1x128xf32, #tpu.memory_space<vmem>>, vector<1x1x128xf32>
    %76 = vector.shape_cast %75 : vector<1x1x128xf32> to vector<1x128xf32>
    %cst_29 = arith.constant dense<0.000000e+00> : vector<8xf32>
    %77 = vector.multi_reduction <add>, %72, %cst_29 [1] : vector<8x128xf32> to vector<8xf32>
    %78 = vector.shape_cast %77 : vector<8xf32> to vector<8x1xf32>
    %cst_30 = arith.constant 1.280000e+02 : f32
    %79 = vector.broadcast %cst_30 : f32 to vector<8x1xf32>
    %80 = arith.divf %78, %79 : vector<8x1xf32>
    %81 = vector.broadcast %80 : vector<8x1xf32> to vector<8x128xf32>
    %82 = arith.subf %72, %81 : vector<8x128xf32>
    %83 = arith.mulf %82, %82 : vector<8x128xf32>
    %cst_31 = arith.constant dense<0.000000e+00> : vector<8xf32>
    %84 = vector.multi_reduction <add>, %83, %cst_31 [1] : vector<8x128xf32> to vector<8xf32>
    %85 = vector.shape_cast %84 : vector<8xf32> to vector<8x1xf32>
    %cst_32 = arith.constant 1.280000e+02 : f32
    %86 = vector.broadcast %cst_32 : f32 to vector<8x1xf32>
    %87 = arith.divf %85, %86 : vector<8x1xf32>
    %88 = vector.broadcast %80 : vector<8x1xf32> to vector<8x128xf32>
    %89 = arith.subf %72, %88 : vector<8x128xf32>
    %cst_33 = arith.constant 9.99999996E-13 : f32
    %90 = vector.broadcast %cst_33 : f32 to vector<8x1xf32>
    %91 = arith.addf %87, %90 : vector<8x1xf32>
    %92 = math.rsqrt %91 : vector<8x1xf32>
    %93 = vector.broadcast %92 : vector<8x1xf32> to vector<8x128xf32>
    %94 = arith.mulf %89, %93 : vector<8x128xf32>
    %95 = vector.broadcast %74 : vector<1x128xf32> to vector<8x128xf32>
    %96 = arith.mulf %94, %95 : vector<8x128xf32>
    %97 = vector.broadcast %76 : vector<1x128xf32> to vector<8x128xf32>
    %98 = arith.addf %96, %97 : vector<8x128xf32>
    %99 = arith.truncf %98 : vector<8x128xf32> to vector<8x128xbf16>
    %c0_34 = arith.constant 0 : index
    %c0_35 = arith.constant 0 : index
    %c0_36 = arith.constant 0 : index
    %100 = vector.load %arg9[%c0_34, %c0_35, %c0_36] : memref<2x128x512xbf16, #tpu.memory_space<vmem>>, vector<1x128x512xbf16>
    %101 = vector.shape_cast %100 : vector<1x128x512xbf16> to vector<128x512xbf16>
    %cst_37 = arith.constant dense<0.000000e+00> : vector<8x512xf32>
    %102 = tpu.matmul %99, %101, %cst_37 {dimension_numbers = #tpu.dot_dimension_numbers<[1], [0], [0], [1], [0, 0, 1, 1], [], []>} : vector<8x128xbf16>, vector<128x512xbf16>, vector<8x512xf32> -> vector<8x512xf32>
    %c0_38 = arith.constant 0 : index
    %c0_39 = arith.constant 0 : index
    %c0_40 = arith.constant 0 : index
    %103 = vector.load %arg10[%c0_38, %c0_39, %c0_40] : memref<2x1x512xf32, #tpu.memory_space<vmem>>, vector<1x1x512xf32>
    %104 = vector.shape_cast %103 : vector<1x1x512xf32> to vector<1x512xf32>
    %105 = vector.broadcast %104 : vector<1x512xf32> to vector<8x512xf32>
    %106 = arith.addf %102, %105 : vector<8x512xf32>
    %cst_41 = arith.constant 5.000000e-01 : f32
    %107 = vector.broadcast %cst_41 : f32 to vector<8x512xf32>
    %108 = arith.mulf %107, %106 : vector<8x512xf32>
    %109 = arith.mulf %106, %106 : vector<8x512xf32>
    %110 = arith.mulf %109, %106 : vector<8x512xf32>
    %cst_42 = arith.constant 4.471500e-02 : f32
    %111 = vector.broadcast %cst_42 : f32 to vector<8x512xf32>
    %112 = arith.mulf %111, %110 : vector<8x512xf32>
    %113 = arith.addf %106, %112 : vector<8x512xf32>
    %cst_43 = arith.constant 0.797884583 : f32
    %114 = vector.broadcast %cst_43 : f32 to vector<8x512xf32>
    %115 = arith.mulf %114, %113 : vector<8x512xf32>
    %116 = math.tanh %115 : vector<8x512xf32>
    %cst_44 = arith.constant 1.000000e+00 : f32
    %117 = vector.broadcast %cst_44 : f32 to vector<8x512xf32>
    %118 = arith.addf %117, %116 : vector<8x512xf32>
    %119 = arith.mulf %108, %118 : vector<8x512xf32>
    %120 = arith.truncf %119 : vector<8x512xf32> to vector<8x512xbf16>
    %c0_45 = arith.constant 0 : index
    %c0_46 = arith.constant 0 : index
    %c0_47 = arith.constant 0 : index
    %121 = vector.load %arg11[%c0_45, %c0_46, %c0_47] : memref<2x512x128xbf16, #tpu.memory_space<vmem>>, vector<1x512x128xbf16>
    %122 = vector.shape_cast %121 : vector<1x512x128xbf16> to vector<512x128xbf16>
    %cst_48 = arith.constant dense<0.000000e+00> : vector<8x128xf32>
    %123 = tpu.matmul %120, %122, %cst_48 {dimension_numbers = #tpu.dot_dimension_numbers<[1], [0], [0], [1], [0, 0, 1, 1], [], []>} : vector<8x512xbf16>, vector<512x128xbf16>, vector<8x128xf32> -> vector<8x128xf32>
    %c0_49 = arith.constant 0 : index
    %c0_50 = arith.constant 0 : index
    %c0_51 = arith.constant 0 : index
    %124 = vector.load %arg12[%c0_49, %c0_50, %c0_51] : memref<2x1x128xf32, #tpu.memory_space<vmem>>, vector<1x1x128xf32>
    %125 = vector.shape_cast %124 : vector<1x1x128xf32> to vector<1x128xf32>
    %126 = vector.broadcast %125 : vector<1x128xf32> to vector<8x128xf32>
    %127 = arith.addf %123, %126 : vector<8x128xf32>
    %128 = arith.addf %127, %98 : vector<8x128xf32>
    %c0_52 = arith.constant 0 : index
    %c0_53 = arith.constant 0 : index
    %c0_54 = arith.constant 0 : index
    %129 = vector.load %arg13[%c0_52, %c0_53, %c0_54] : memref<2x1x128xf32, #tpu.memory_space<vmem>>, vector<1x1x128xf32>
    %130 = vector.shape_cast %129 : vector<1x1x128xf32> to vector<1x128xf32>
    %c0_55 = arith.constant 0 : index
    %c0_56 = arith.constant 0 : index
    %c0_57 = arith.constant 0 : index
    %131 = vector.load %arg14[%c0_55, %c0_56, %c0_57] : memref<2x1x128xf32, #tpu.memory_space<vmem>>, vector<1x1x128xf32>
    %132 = vector.shape_cast %131 : vector<1x1x128xf32> to vector<1x128xf32>
    %cst_58 = arith.constant dense<0.000000e+00> : vector<8xf32>
    %133 = vector.multi_reduction <add>, %128, %cst_58 [1] : vector<8x128xf32> to vector<8xf32>
    %134 = vector.shape_cast %133 : vector<8xf32> to vector<8x1xf32>
    %cst_59 = arith.constant 1.280000e+02 : f32
    %135 = vector.broadcast %cst_59 : f32 to vector<8x1xf32>
    %136 = arith.divf %134, %135 : vector<8x1xf32>
    %137 = vector.broadcast %136 : vector<8x1xf32> to vector<8x128xf32>
    %138 = arith.subf %128, %137 : vector<8x128xf32>
    %139 = arith.mulf %138, %138 : vector<8x128xf32>
    %cst_60 = arith.constant dense<0.000000e+00> : vector<8xf32>
    %140 = vector.multi_reduction <add>, %139, %cst_60 [1] : vector<8x128xf32> to vector<8xf32>
    %141 = vector.shape_cast %140 : vector<8xf32> to vector<8x1xf32>
    %cst_61 = arith.constant 1.280000e+02 : f32
    %142 = vector.broadcast %cst_61 : f32 to vector<8x1xf32>
    %143 = arith.divf %141, %142 : vector<8x1xf32>
    %144 = vector.broadcast %136 : vector<8x1xf32> to vector<8x128xf32>
    %145 = arith.subf %128, %144 : vector<8x128xf32>
    %cst_62 = arith.constant 9.99999996E-13 : f32
    %146 = vector.broadcast %cst_62 : f32 to vector<8x1xf32>
    %147 = arith.addf %143, %146 : vector<8x1xf32>
    %148 = math.rsqrt %147 : vector<8x1xf32>
    %149 = vector.broadcast %148 : vector<8x1xf32> to vector<8x128xf32>
    %150 = arith.mulf %145, %149 : vector<8x128xf32>
    %151 = vector.broadcast %130 : vector<1x128xf32> to vector<8x128xf32>
    %152 = arith.mulf %150, %151 : vector<8x128xf32>
    %153 = vector.broadcast %132 : vector<1x128xf32> to vector<8x128xf32>
    %154 = arith.addf %152, %153 : vector<8x128xf32>
    %155 = arith.truncf %154 : vector<8x128xf32> to vector<8x128xbf16>
    %c1 = arith.constant 1 : index
    %c0_63 = arith.constant 0 : index
    %c0_64 = arith.constant 0 : index
    %156 = vector.load %arg3[%c1, %c0_63, %c0_64] : memref<2x128x384xbf16, #tpu.memory_space<vmem>>, vector<1x128x384xbf16>
    %157 = vector.shape_cast %156 : vector<1x128x384xbf16> to vector<128x384xbf16>
    %cst_65 = arith.constant dense<0.000000e+00> : vector<8x384xf32>
    %158 = tpu.matmul %155, %157, %cst_65 {dimension_numbers = #tpu.dot_dimension_numbers<[1], [0], [0], [1], [0, 0, 1, 1], [], []>} : vector<8x128xbf16>, vector<128x384xbf16>, vector<8x384xf32> -> vector<8x384xf32>
    %c1_66 = arith.constant 1 : index
    %c0_67 = arith.constant 0 : index
    %c0_68 = arith.constant 0 : index
    %159 = vector.load %arg4[%c1_66, %c0_67, %c0_68] : memref<2x1x384xf32, #tpu.memory_space<vmem>>, vector<1x1x384xf32>
    %160 = vector.shape_cast %159 : vector<1x1x384xf32> to vector<1x384xf32>
    %161 = vector.broadcast %160 : vector<1x384xf32> to vector<8x384xf32>
    %162 = arith.addf %158, %161 : vector<8x384xf32>
    %163 = vector.extract_strided_slice %162 {offsets = [0, 0], sizes = [8, 128], strides = [1, 1]} : vector<8x384xf32> to vector<8x128xf32>
    %164 = vector.extract_strided_slice %162 {offsets = [0, 128], sizes = [8, 128], strides = [1, 1]} : vector<8x384xf32> to vector<8x128xf32>
    %165 = vector.extract_strided_slice %162 {offsets = [0, 256], sizes = [8, 128], strides = [1, 1]} : vector<8x384xf32> to vector<8x128xf32>
    %166 = vector.extract_strided_slice %163 {offsets = [0, 0], sizes = [8, 32], strides = [1, 1]} : vector<8x128xf32> to vector<8x32xf32>
    %167 = vector.extract_strided_slice %163 {offsets = [0, 32], sizes = [8, 32], strides = [1, 1]} : vector<8x128xf32> to vector<8x32xf32>
    %168 = vector.extract_strided_slice %163 {offsets = [0, 64], sizes = [8, 32], strides = [1, 1]} : vector<8x128xf32> to vector<8x32xf32>
    %169 = vector.extract_strided_slice %163 {offsets = [0, 96], sizes = [8, 32], strides = [1, 1]} : vector<8x128xf32> to vector<8x32xf32>
    %170 = vector.shape_cast %166 : vector<8x32xf32> to vector<1x8x32xf32>
    %171 = vector.shape_cast %167 : vector<8x32xf32> to vector<1x8x32xf32>
    %172 = vector.shape_cast %168 : vector<8x32xf32> to vector<1x8x32xf32>
    %173 = vector.shape_cast %169 : vector<8x32xf32> to vector<1x8x32xf32>
    %174 = tpu.concatenate %170, %171, %172, %173 in 0 : vector<1x8x32xf32>, vector<1x8x32xf32>, vector<1x8x32xf32>, vector<1x8x32xf32> -> vector<4x8x32xf32>
    %175 = vector.extract_strided_slice %164 {offsets = [0, 0], sizes = [8, 32], strides = [1, 1]} : vector<8x128xf32> to vector<8x32xf32>
    %176 = vector.extract_strided_slice %164 {offsets = [0, 32], sizes = [8, 32], strides = [1, 1]} : vector<8x128xf32> to vector<8x32xf32>
    %177 = vector.extract_strided_slice %164 {offsets = [0, 64], sizes = [8, 32], strides = [1, 1]} : vector<8x128xf32> to vector<8x32xf32>
    %178 = vector.extract_strided_slice %164 {offsets = [0, 96], sizes = [8, 32], strides = [1, 1]} : vector<8x128xf32> to vector<8x32xf32>
    %179 = vector.shape_cast %175 : vector<8x32xf32> to vector<1x8x32xf32>
    %180 = vector.shape_cast %176 : vector<8x32xf32> to vector<1x8x32xf32>
    %181 = vector.shape_cast %177 : vector<8x32xf32> to vector<1x8x32xf32>
    %182 = vector.shape_cast %178 : vector<8x32xf32> to vector<1x8x32xf32>
    %183 = tpu.concatenate %179, %180, %181, %182 in 0 : vector<1x8x32xf32>, vector<1x8x32xf32>, vector<1x8x32xf32>, vector<1x8x32xf32> -> vector<4x8x32xf32>
    %184 = vector.extract_strided_slice %165 {offsets = [0, 0], sizes = [8, 32], strides = [1, 1]} : vector<8x128xf32> to vector<8x32xf32>
    %185 = vector.extract_strided_slice %165 {offsets = [0, 32], sizes = [8, 32], strides = [1, 1]} : vector<8x128xf32> to vector<8x32xf32>
    %186 = vector.extract_strided_slice %165 {offsets = [0, 64], sizes = [8, 32], strides = [1, 1]} : vector<8x128xf32> to vector<8x32xf32>
    %187 = vector.extract_strided_slice %165 {offsets = [0, 96], sizes = [8, 32], strides = [1, 1]} : vector<8x128xf32> to vector<8x32xf32>
    %188 = vector.shape_cast %184 : vector<8x32xf32> to vector<1x8x32xf32>
    %189 = vector.shape_cast %185 : vector<8x32xf32> to vector<1x8x32xf32>
    %190 = vector.shape_cast %186 : vector<8x32xf32> to vector<1x8x32xf32>
    %191 = vector.shape_cast %187 : vector<8x32xf32> to vector<1x8x32xf32>
    %192 = tpu.concatenate %188, %189, %190, %191 in 0 : vector<1x8x32xf32>, vector<1x8x32xf32>, vector<1x8x32xf32>, vector<1x8x32xf32> -> vector<4x8x32xf32>
    "tpu.trace_start"() <{level = 10 : i32, message = "hqd,hkd->hqk"}> : () -> ()
    %cst_69 = arith.constant dense<0.000000e+00> : vector<4x8x8xf32>
    %193 = tpu.matmul %174, %183, %cst_69 {dimension_numbers = #tpu.dot_dimension_numbers<[2], [2], [1], [1], [0, 0, 0, 1, 1, 1], [0], [0]>} : vector<4x8x32xf32>, vector<4x8x32xf32>, vector<4x8x8xf32> -> vector<4x8x8xf32>
    "tpu.trace_stop"() : () -> ()
    %194 = arith.addf %193, %3 : vector<4x8x8xf32>
    %cst_70 = arith.constant dense<0xFF800000> : vector<4x8xf32>
    %195 = vector.multi_reduction <maximumf>, %194, %cst_70 [2] : vector<4x8x8xf32> to vector<4x8xf32>
    %196 = vector.shape_cast %195 : vector<4x8xf32> to vector<4x8x1xf32>
    %197 = vector.broadcast %196 : vector<4x8x1xf32> to vector<4x8x8xf32>
    %198 = arith.subf %194, %197 : vector<4x8x8xf32>
    %199 = math.exp %198 : vector<4x8x8xf32>
    %cst_71 = arith.constant dense<0.000000e+00> : vector<4x8xf32>
    %200 = vector.multi_reduction <add>, %199, %cst_71 [2] : vector<4x8x8xf32> to vector<4x8xf32>
    %201 = vector.shape_cast %200 : vector<4x8xf32> to vector<4x8x1xf32>
    %202 = tpu.reciprocal %201 {approx = true} : vector<4x8x1xf32> -> vector<4x8x1xf32>
    %203 = vector.broadcast %202 : vector<4x8x1xf32> to vector<4x8x8xf32>
    %204 = arith.mulf %199, %203 : vector<4x8x8xf32>
    "tpu.trace_start"() <{level = 10 : i32, message = "hqk,hkd->hqd"}> : () -> ()
    %cst_72 = arith.constant dense<0.000000e+00> : vector<4x8x32xf32>
    %205 = tpu.matmul %204, %192, %cst_72 {dimension_numbers = #tpu.dot_dimension_numbers<[2], [1], [1], [2], [0, 0, 0, 1, 1, 2], [0], [0]>} : vector<4x8x8xf32>, vector<4x8x32xf32>, vector<4x8x32xf32> -> vector<4x8x32xf32>
    "tpu.trace_stop"() : () -> ()
    %206 = vector.extract_strided_slice %205 {offsets = [0, 0, 0], sizes = [1, 8, 32], strides = [1, 1, 1]} : vector<4x8x32xf32> to vector<1x8x32xf32>
    %207 = vector.shape_cast %206 : vector<1x8x32xf32> to vector<8x32xf32>
    %208 = vector.extract_strided_slice %205 {offsets = [1, 0, 0], sizes = [1, 8, 32], strides = [1, 1, 1]} : vector<4x8x32xf32> to vector<1x8x32xf32>
    %209 = vector.shape_cast %208 : vector<1x8x32xf32> to vector<8x32xf32>
    %210 = vector.extract_strided_slice %205 {offsets = [2, 0, 0], sizes = [1, 8, 32], strides = [1, 1, 1]} : vector<4x8x32xf32> to vector<1x8x32xf32>
    %211 = vector.shape_cast %210 : vector<1x8x32xf32> to vector<8x32xf32>
    %212 = vector.extract_strided_slice %205 {offsets = [3, 0, 0], sizes = [1, 8, 32], strides = [1, 1, 1]} : vector<4x8x32xf32> to vector<1x8x32xf32>
    %213 = vector.shape_cast %212 : vector<1x8x32xf32> to vector<8x32xf32>
    %214 = tpu.concatenate %207, %209, %211, %213 in 1 : vector<8x32xf32>, vector<8x32xf32>, vector<8x32xf32>, vector<8x32xf32> -> vector<8x128xf32>
    %215 = arith.truncf %214 : vector<8x128xf32> to vector<8x128xbf16>
    %c1_73 = arith.constant 1 : index
    %c0_74 = arith.constant 0 : index
    %c0_75 = arith.constant 0 : index
    %216 = vector.load %arg5[%c1_73, %c0_74, %c0_75] : memref<2x128x128xbf16, #tpu.memory_space<vmem>>, vector<1x128x128xbf16>
    %217 = vector.shape_cast %216 : vector<1x128x128xbf16> to vector<128x128xbf16>
    %cst_76 = arith.constant dense<0.000000e+00> : vector<8x128xf32>
    %218 = tpu.matmul %215, %217, %cst_76 {dimension_numbers = #tpu.dot_dimension_numbers<[1], [0], [0], [1], [0, 0, 1, 1], [], []>} : vector<8x128xbf16>, vector<128x128xbf16>, vector<8x128xf32> -> vector<8x128xf32>
    %c1_77 = arith.constant 1 : index
    %c0_78 = arith.constant 0 : index
    %c0_79 = arith.constant 0 : index
    %219 = vector.load %arg6[%c1_77, %c0_78, %c0_79] : memref<2x1x128xf32, #tpu.memory_space<vmem>>, vector<1x1x128xf32>
    %220 = vector.shape_cast %219 : vector<1x1x128xf32> to vector<1x128xf32>
    %221 = vector.broadcast %220 : vector<1x128xf32> to vector<8x128xf32>
    %222 = arith.addf %218, %221 : vector<8x128xf32>
    %223 = arith.addf %222, %154 : vector<8x128xf32>
    %c1_80 = arith.constant 1 : index
    %c0_81 = arith.constant 0 : index
    %c0_82 = arith.constant 0 : index
    %224 = vector.load %arg7[%c1_80, %c0_81, %c0_82] : memref<2x1x128xf32, #tpu.memory_space<vmem>>, vector<1x1x128xf32>
    %225 = vector.shape_cast %224 : vector<1x1x128xf32> to vector<1x128xf32>
    %c1_83 = arith.constant 1 : index
    %c0_84 = arith.constant 0 : index
    %c0_85 = arith.constant 0 : index
    %226 = vector.load %arg8[%c1_83, %c0_84, %c0_85] : memref<2x1x128xf32, #tpu.memory_space<vmem>>, vector<1x1x128xf32>
    %227 = vector.shape_cast %226 : vector<1x1x128xf32> to vector<1x128xf32>
    %cst_86 = arith.constant dense<0.000000e+00> : vector<8xf32>
    %228 = vector.multi_reduction <add>, %223, %cst_86 [1] : vector<8x128xf32> to vector<8xf32>
    %229 = vector.shape_cast %228 : vector<8xf32> to vector<8x1xf32>
    %cst_87 = arith.constant 1.280000e+02 : f32
    %230 = vector.broadcast %cst_87 : f32 to vector<8x1xf32>
    %231 = arith.divf %229, %230 : vector<8x1xf32>
    %232 = vector.broadcast %231 : vector<8x1xf32> to vector<8x128xf32>
    %233 = arith.subf %223, %232 : vector<8x128xf32>
    %234 = arith.mulf %233, %233 : vector<8x128xf32>
    %cst_88 = arith.constant dense<0.000000e+00> : vector<8xf32>
    %235 = vector.multi_reduction <add>, %234, %cst_88 [1] : vector<8x128xf32> to vector<8xf32>
    %236 = vector.shape_cast %235 : vector<8xf32> to vector<8x1xf32>
    %cst_89 = arith.constant 1.280000e+02 : f32
    %237 = vector.broadcast %cst_89 : f32 to vector<8x1xf32>
    %238 = arith.divf %236, %237 : vector<8x1xf32>
    %239 = vector.broadcast %231 : vector<8x1xf32> to vector<8x128xf32>
    %240 = arith.subf %223, %239 : vector<8x128xf32>
    %cst_90 = arith.constant 9.99999996E-13 : f32
    %241 = vector.broadcast %cst_90 : f32 to vector<8x1xf32>
    %242 = arith.addf %238, %241 : vector<8x1xf32>
    %243 = math.rsqrt %242 : vector<8x1xf32>
    %244 = vector.broadcast %243 : vector<8x1xf32> to vector<8x128xf32>
    %245 = arith.mulf %240, %244 : vector<8x128xf32>
    %246 = vector.broadcast %225 : vector<1x128xf32> to vector<8x128xf32>
    %247 = arith.mulf %245, %246 : vector<8x128xf32>
    %248 = vector.broadcast %227 : vector<1x128xf32> to vector<8x128xf32>
    %249 = arith.addf %247, %248 : vector<8x128xf32>
    %250 = arith.truncf %249 : vector<8x128xf32> to vector<8x128xbf16>
    %c1_91 = arith.constant 1 : index
    %c0_92 = arith.constant 0 : index
    %c0_93 = arith.constant 0 : index
    %251 = vector.load %arg9[%c1_91, %c0_92, %c0_93] : memref<2x128x512xbf16, #tpu.memory_space<vmem>>, vector<1x128x512xbf16>
    %252 = vector.shape_cast %251 : vector<1x128x512xbf16> to vector<128x512xbf16>
    %cst_94 = arith.constant dense<0.000000e+00> : vector<8x512xf32>
    %253 = tpu.matmul %250, %252, %cst_94 {dimension_numbers = #tpu.dot_dimension_numbers<[1], [0], [0], [1], [0, 0, 1, 1], [], []>} : vector<8x128xbf16>, vector<128x512xbf16>, vector<8x512xf32> -> vector<8x512xf32>
    %c1_95 = arith.constant 1 : index
    %c0_96 = arith.constant 0 : index
    %c0_97 = arith.constant 0 : index
    %254 = vector.load %arg10[%c1_95, %c0_96, %c0_97] : memref<2x1x512xf32, #tpu.memory_space<vmem>>, vector<1x1x512xf32>
    %255 = vector.shape_cast %254 : vector<1x1x512xf32> to vector<1x512xf32>
    %256 = vector.broadcast %255 : vector<1x512xf32> to vector<8x512xf32>
    %257 = arith.addf %253, %256 : vector<8x512xf32>
    %cst_98 = arith.constant 5.000000e-01 : f32
    %258 = vector.broadcast %cst_98 : f32 to vector<8x512xf32>
    %259 = arith.mulf %258, %257 : vector<8x512xf32>
    %260 = arith.mulf %257, %257 : vector<8x512xf32>
    %261 = arith.mulf %260, %257 : vector<8x512xf32>
    %cst_99 = arith.constant 4.471500e-02 : f32
    %262 = vector.broadcast %cst_99 : f32 to vector<8x512xf32>
    %263 = arith.mulf %262, %261 : vector<8x512xf32>
    %264 = arith.addf %257, %263 : vector<8x512xf32>
    %cst_100 = arith.constant 0.797884583 : f32
    %265 = vector.broadcast %cst_100 : f32 to vector<8x512xf32>
    %266 = arith.mulf %265, %264 : vector<8x512xf32>
    %267 = math.tanh %266 : vector<8x512xf32>
    %cst_101 = arith.constant 1.000000e+00 : f32
    %268 = vector.broadcast %cst_101 : f32 to vector<8x512xf32>
    %269 = arith.addf %268, %267 : vector<8x512xf32>
    %270 = arith.mulf %259, %269 : vector<8x512xf32>
    %271 = arith.truncf %270 : vector<8x512xf32> to vector<8x512xbf16>
    %c1_102 = arith.constant 1 : index
    %c0_103 = arith.constant 0 : index
    %c0_104 = arith.constant 0 : index
    %272 = vector.load %arg11[%c1_102, %c0_103, %c0_104] : memref<2x512x128xbf16, #tpu.memory_space<vmem>>, vector<1x512x128xbf16>
    %273 = vector.shape_cast %272 : vector<1x512x128xbf16> to vector<512x128xbf16>
    %cst_105 = arith.constant dense<0.000000e+00> : vector<8x128xf32>
    %274 = tpu.matmul %271, %273, %cst_105 {dimension_numbers = #tpu.dot_dimension_numbers<[1], [0], [0], [1], [0, 0, 1, 1], [], []>} : vector<8x512xbf16>, vector<512x128xbf16>, vector<8x128xf32> -> vector<8x128xf32>
    %c1_106 = arith.constant 1 : index
    %c0_107 = arith.constant 0 : index
    %c0_108 = arith.constant 0 : index
    %275 = vector.load %arg12[%c1_106, %c0_107, %c0_108] : memref<2x1x128xf32, #tpu.memory_space<vmem>>, vector<1x1x128xf32>
    %276 = vector.shape_cast %275 : vector<1x1x128xf32> to vector<1x128xf32>
    %277 = vector.broadcast %276 : vector<1x128xf32> to vector<8x128xf32>
    %278 = arith.addf %274, %277 : vector<8x128xf32>
    %279 = arith.addf %278, %249 : vector<8x128xf32>
    %c1_109 = arith.constant 1 : index
    %c0_110 = arith.constant 0 : index
    %c0_111 = arith.constant 0 : index
    %280 = vector.load %arg13[%c1_109, %c0_110, %c0_111] : memref<2x1x128xf32, #tpu.memory_space<vmem>>, vector<1x1x128xf32>
    %281 = vector.shape_cast %280 : vector<1x1x128xf32> to vector<1x128xf32>
    %c1_112 = arith.constant 1 : index
    %c0_113 = arith.constant 0 : index
    %c0_114 = arith.constant 0 : index
    %282 = vector.load %arg14[%c1_112, %c0_113, %c0_114] : memref<2x1x128xf32, #tpu.memory_space<vmem>>, vector<1x1x128xf32>
    %283 = vector.shape_cast %282 : vector<1x1x128xf32> to vector<1x128xf32>
    %cst_115 = arith.constant dense<0.000000e+00> : vector<8xf32>
    %284 = vector.multi_reduction <add>, %279, %cst_115 [1] : vector<8x128xf32> to vector<8xf32>
    %285 = vector.shape_cast %284 : vector<8xf32> to vector<8x1xf32>
    %cst_116 = arith.constant 1.280000e+02 : f32
    %286 = vector.broadcast %cst_116 : f32 to vector<8x1xf32>
    %287 = arith.divf %285, %286 : vector<8x1xf32>
    %288 = vector.broadcast %287 : vector<8x1xf32> to vector<8x128xf32>
    %289 = arith.subf %279, %288 : vector<8x128xf32>
    %290 = arith.mulf %289, %289 : vector<8x128xf32>
    %cst_117 = arith.constant dense<0.000000e+00> : vector<8xf32>
    %291 = vector.multi_reduction <add>, %290, %cst_117 [1] : vector<8x128xf32> to vector<8xf32>
    %292 = vector.shape_cast %291 : vector<8xf32> to vector<8x1xf32>
    %cst_118 = arith.constant 1.280000e+02 : f32
    %293 = vector.broadcast %cst_118 : f32 to vector<8x1xf32>
    %294 = arith.divf %292, %293 : vector<8x1xf32>
    %295 = vector.broadcast %287 : vector<8x1xf32> to vector<8x128xf32>
    %296 = arith.subf %279, %295 : vector<8x128xf32>
    %cst_119 = arith.constant 9.99999996E-13 : f32
    %297 = vector.broadcast %cst_119 : f32 to vector<8x1xf32>
    %298 = arith.addf %294, %297 : vector<8x1xf32>
    %299 = math.rsqrt %298 : vector<8x1xf32>
    %300 = vector.broadcast %299 : vector<8x1xf32> to vector<8x128xf32>
    %301 = arith.mulf %296, %300 : vector<8x128xf32>
    %302 = vector.broadcast %281 : vector<1x128xf32> to vector<8x128xf32>
    %303 = arith.mulf %301, %302 : vector<8x128xf32>
    %304 = vector.broadcast %283 : vector<1x128xf32> to vector<8x128xf32>
    %305 = arith.addf %303, %304 : vector<8x128xf32>
    %306 = vector.extract_strided_slice %305 {offsets = [0, 0], sizes = [1, 128], strides = [1, 1]} : vector<8x128xf32> to vector<1x128xf32>
    %307 = arith.truncf %306 : vector<1x128xf32> to vector<1x128xbf16>
    %c0_120 = arith.constant 0 : index
    %c0_121 = arith.constant 0 : index
    %308 = vector.load %arg15[%c0_120, %c0_121] : memref<128x128xbf16, #tpu.memory_space<vmem>>, vector<128x128xbf16>
    %cst_122 = arith.constant dense<0.000000e+00> : vector<1x128xf32>
    %309 = tpu.matmul %307, %308, %cst_122 {dimension_numbers = #tpu.dot_dimension_numbers<[1], [0], [0], [1], [0, 0, 1, 1], [], []>} : vector<1x128xbf16>, vector<128x128xbf16>, vector<1x128xf32> -> vector<1x128xf32>
    %c0_123 = arith.constant 0 : index
    %c0_124 = arith.constant 0 : index
    %310 = vector.load %arg16[%c0_123, %c0_124] : memref<1x128xf32, #tpu.memory_space<vmem>>, vector<1x128xf32>
    %311 = arith.addf %309, %310 : vector<1x128xf32>
    %312 = math.tanh %311 : vector<1x128xf32>
    %313 = arith.truncf %312 : vector<1x128xf32> to vector<1x128xbf16>
    %c0_125 = arith.constant 0 : index
    %c0_126 = arith.constant 0 : index
    %314 = vector.load %arg17[%c0_125, %c0_126] : memref<128x128xbf16, #tpu.memory_space<vmem>>, vector<128x128xbf16>
    %cst_127 = arith.constant dense<0.000000e+00> : vector<1x128xf32>
    %315 = tpu.matmul %313, %314, %cst_127 {dimension_numbers = #tpu.dot_dimension_numbers<[1], [0], [0], [1], [0, 0, 1, 1], [], []>} : vector<1x128xbf16>, vector<128x128xbf16>, vector<1x128xf32> -> vector<1x128xf32>
    %c0_128 = arith.constant 0 : index
    %c0_129 = arith.constant 0 : index
    %316 = vector.load %arg18[%c0_128, %c0_129] : memref<1x128xf32, #tpu.memory_space<vmem>>, vector<1x128xf32>
    %317 = arith.addf %315, %316 : vector<1x128xf32>
    %c0_130 = arith.constant 0 : index
    %c0_131 = arith.constant 0 : index
    %c0_132 = arith.constant 0 : index
    %318 = vector.load %arg19[%c0_130, %c0_131, %c0_132] : memref<1x1x128xf32, #tpu.memory_space<vmem>>, vector<1x1x128xf32>
    %319 = vector.shape_cast %318 : vector<1x1x128xf32> to vector<1x128xf32>
    %320 = vector.shape_cast %317 : vector<1x128xf32> to vector<1x1x128xf32>
    tpu.vector_store %arg19[%c0_130, %c0_131, %c0_132], %320 {strides = array<i32>} : memref<1x1x128xf32, #tpu.memory_space<vmem>>, vector<1x1x128xf32>,
    return
  }
  func.func @transform_0(%arg0: i32) -> (i32, i32, i32) {
    %c0_i32 = arith.constant 0 : i32
    %c0_i32_0 = arith.constant 0 : i32
    %c0_i32_1 = arith.constant 0 : i32
    return %arg0, %c0_i32, %c0_i32_0 : i32, i32, i32
  }
  func.func @transform_1(%arg0: i32) -> (i32, i32, i32, i32) {
    %c0_i32 = arith.constant 0 : i32
    %c0_i32_0 = arith.constant 0 : i32
    %c0_i32_1 = arith.constant 0 : i32
    %c0_i32_2 = arith.constant 0 : i32
    return %arg0, %c0_i32, %c0_i32_0, %c0_i32_1 : i32, i32, i32, i32
  }
  func.func @transform_2(%arg0: i32) -> (i32, i32, i32) {
    %c0_i32 = arith.constant 0 : i32
    %c0_i32_0 = arith.constant 0 : i32
    %c0_i32_1 = arith.constant 0 : i32
    %c0_i32_2 = arith.constant 0 : i32
    return %c0_i32, %c0_i32_0, %c0_i32_1 : i32, i32, i32
  }
  func.func @transform_3(%arg0: i32) -> (i32, i32, i32) {
    %c0_i32 = arith.constant 0 : i32
    %c0_i32_0 = arith.constant 0 : i32
    %c0_i32_1 = arith.constant 0 : i32
    %c0_i32_2 = arith.constant 0 : i32
    return %c0_i32, %c0_i32_0, %c0_i32_1 : i32, i32, i32
  }
  func.func @transform_4(%arg0: i32) -> (i32, i32, i32) {
    %c0_i32 = arith.constant 0 : i32
    %c0_i32_0 = arith.constant 0 : i32
    %c0_i32_1 = arith.constant 0 : i32
    %c0_i32_2 = arith.constant 0 : i32
    return %c0_i32, %c0_i32_0, %c0_i32_1 : i32, i32, i32
  }
  func.func @transform_5(%arg0: i32) -> (i32, i32, i32) {
    %c0_i32 = arith.constant 0 : i32
    %c0_i32_0 = arith.constant 0 : i32
    %c0_i32_1 = arith.constant 0 : i32
    %c0_i32_2 = arith.constant 0 : i32
    return %c0_i32, %c0_i32_0, %c0_i32_1 : i32, i32, i32
  }
  func.func @transform_6(%arg0: i32) -> (i32, i32, i32) {
    %c0_i32 = arith.constant 0 : i32
    %c0_i32_0 = arith.constant 0 : i32
    %c0_i32_1 = arith.constant 0 : i32
    %c0_i32_2 = arith.constant 0 : i32
    return %c0_i32, %c0_i32_0, %c0_i32_1 : i32, i32, i32
  }
  func.func @transform_7(%arg0: i32) -> (i32, i32, i32) {
    %c0_i32 = arith.constant 0 : i32
    %c0_i32_0 = arith.constant 0 : i32
    %c0_i32_1 = arith.constant 0 : i32
    %c0_i32_2 = arith.constant 0 : i32
    return %c0_i32, %c0_i32_0, %c0_i32_1 : i32, i32, i32
  }
  func.func @transform_8(%arg0: i32) -> (i32, i32, i32) {
    %c0_i32 = arith.constant 0 : i32
    %c0_i32_0 = arith.constant 0 : i32
    %c0_i32_1 = arith.constant 0 : i32
    %c0_i32_2 = arith.constant 0 : i32
    return %c0_i32, %c0_i32_0, %c0_i32_1 : i32, i32, i32
  }
  func.func @transform_9(%arg0: i32) -> (i32, i32, i32) {
    %c0_i32 = arith.constant 0 : i32
    %c0_i32_0 = arith.constant 0 : i32
    %c0_i32_1 = arith.constant 0 : i32
    %c0_i32_2 = arith.constant 0 : i32
    return %c0_i32, %c0_i32_0, %c0_i32_1 : i32, i32, i32
  }
  func.func @transform_10(%arg0: i32) -> (i32, i32, i32) {
    %c0_i32 = arith.constant 0 : i32
    %c0_i32_0 = arith.constant 0 : i32
    %c0_i32_1 = arith.constant 0 : i32
    %c0_i32_2 = arith.constant 0 : i32
    return %c0_i32, %c0_i32_0, %c0_i32_1 : i32, i32, i32
  }
  func.func @transform_11(%arg0: i32) -> (i32, i32, i32) {
    %c0_i32 = arith.constant 0 : i32
    %c0_i32_0 = arith.constant 0 : i32
    %c0_i32_1 = arith.constant 0 : i32
    %c0_i32_2 = arith.constant 0 : i32
    return %c0_i32, %c0_i32_0, %c0_i32_1 : i32, i32, i32
  }
  func.func @transform_12(%arg0: i32) -> (i32, i32, i32) {
    %c0_i32 = arith.constant 0 : i32
    %c0_i32_0 = arith.constant 0 : i32
    %c0_i32_1 = arith.constant 0 : i32
    %c0_i32_2 = arith.constant 0 : i32
    return %c0_i32, %c0_i32_0, %c0_i32_1 : i32, i32, i32
  }
  func.func @transform_13(%arg0: i32) -> (i32, i32, i32) {
    %c0_i32 = arith.constant 0 : i32
    %c0_i32_0 = arith.constant 0 : i32
    %c0_i32_1 = arith.constant 0 : i32
    %c0_i32_2 = arith.constant 0 : i32
    return %c0_i32, %c0_i32_0, %c0_i32_1 : i32, i32, i32
  }
  func.func @transform_14(%arg0: i32) -> (i32, i32) {
    %c0_i32 = arith.constant 0 : i32
    %c0_i32_0 = arith.constant 0 : i32
    %c0_i32_1 = arith.constant 0 : i32
    return %c0_i32, %c0_i32_0 : i32, i32
  }
  func.func @transform_15(%arg0: i32) -> (i32, i32) {
    %c0_i32 = arith.constant 0 : i32
    %c0_i32_0 = arith.constant 0 : i32
    %c0_i32_1 = arith.constant 0 : i32
    return %c0_i32, %c0_i32_0 : i32, i32
  }
  func.func @transform_16(%arg0: i32) -> (i32, i32) {
    %c0_i32 = arith.constant 0 : i32
    %c0_i32_0 = arith.constant 0 : i32
    %c0_i32_1 = arith.constant 0 : i32
    return %c0_i32, %c0_i32_0 : i32, i32
  }
  func.func @transform_17(%arg0: i32) -> (i32, i32) {
    %c0_i32 = arith.constant 0 : i32
    %c0_i32_0 = arith.constant 0 : i32
    %c0_i32_1 = arith.constant 0 : i32
    return %c0_i32, %c0_i32_0 : i32, i32
  }
  func.func @transform_18(%arg0: i32) -> (i32, i32, i32) {
    %c0_i32 = arith.constant 0 : i32
    %c0_i32_0 = arith.constant 0 : i32
    %c0_i32_1 = arith.constant 0 : i32
    return %arg0, %c0_i32, %c0_i32_0 : i32, i32, i32
  }
}

</mosaic_0001>

<llo_original>
// kernel: bert_server_forward.1
$region0: #{bert_server_forward.1}
  #allocation0 [shape = 'u32[]', space=smem, size = 0x4, offset = 0x4, fixed_abs, tag = 'smem constant byte address 0x4 - core index']
  #allocation1 [shape = 'u32[144,128]{1,0:T(1,128)}', space=vmem, size = 0x12000, scoped, tag = 'internal scratch']
  %s0 = inlined_call_operand.vmem [shape: f32[2,8,128], index: 0, kind: input, shape index: {}]
  %s1 = inlined_call_operand.vmem [shape: f32[2,4,8,8], index: 1, kind: input, shape index: {}]
  %s2 = inlined_call_operand.hbm [shape: bf16[2,128,384], index: 2, kind: input, shape index: {}]
  %s3 = inlined_call_operand.hbm [shape: f32[2,1,384], index: 3, kind: input, shape index: {}]
  %s4 = inlined_call_operand.hbm [shape: bf16[2,128,128], index: 4, kind: input, shape index: {}]
  %s5 = inlined_call_operand.vmem [shape: f32[2,1,128], index: 5, kind: input, shape index: {}]
  %s6 = inlined_call_operand.vmem [shape: f32[2,1,128], index: 6, kind: input, shape index: {}]
  %s7 = inlined_call_operand.vmem [shape: f32[2,1,128], index: 7, kind: input, shape index: {}]
  %s8 = inlined_call_operand.hbm [shape: bf16[2,128,512], index: 8, kind: input, shape index: {}]
  %s9 = inlined_call_operand.vmem [shape: f32[2,1,512], index: 9, kind: input, shape index: {}]
  %s10 = inlined_call_operand.hbm [shape: bf16[2,512,128], index: 10, kind: input, shape index: {}]
  %s11 = inlined_call_operand.hbm [shape: f32[2,1,128], index: 11, kind: input, shape index: {}]
  %s12 = inlined_call_operand.hbm [shape: f32[2,1,128], index: 12, kind: input, shape index: {}]
  %s13 = inlined_call_operand.vmem [shape: f32[2,1,128], index: 13, kind: input, shape index: {}]
  %s14 = inlined_call_operand.vmem [shape: bf16[128,128], index: 14, kind: input, shape index: {}]
  %s15 = inlined_call_operand.hbm [shape: f32[1,128], index: 15, kind: input, shape index: {}]
  %s16 = inlined_call_operand.hbm [shape: bf16[128,128], index: 16, kind: input, shape index: {}]
  %s17 = inlined_call_operand.vmem [shape: f32[1,128], index: 17, kind: input, shape index: {}]
  %s18 = inlined_call_operand.vmem [shape: f32[2,1,128], index: 18, kind: output, shape index: {}]
  %s19 = sld [smem:[#allocation0]]
  $region141: #{bert_server_forward.1} parent=0
    _
  %s21 = ssub.s32 1, %s19
  %s22 = scalar_select 0, %s21, %s19
  $region1: #{bert_server_forward.1} parent=0
    #allocation2 [shape = 'u8[196608]{0}', space=vmem, size = 0x30000, scoped, tag = 'input window, operand 2, single buffered']
    #allocation3 [shape = 's32[2]{0}', space=sflag, size = 0x8, scoped, tag = 'scoped memory for bert_server_forward.1']
    #allocation4 [shape = 'u8[3072]{0}', space=vmem, size = 0xc00, scoped, tag = 'input window, operand 3, single buffered']
    #allocation5 [shape = 's32[1]{0}', space=sflag, size = 0x4, scoped, tag = 'scoped memory for bert_server_forward.1']
    #allocation6 [shape = 'u8[65536]{0}', space=vmem, size = 0x10000, scoped, tag = 'input window, operand 4, single buffered']
    #allocation7 [shape = 'u8[262144]{0}', space=vmem, size = 0x40000, scoped, tag = 'input window, operand 8, single buffered']
    #allocation8 [shape = 's32[1]{0}', space=sflag, size = 0x4, scoped, tag = 'scoped memory for bert_server_forward.1']
    #allocation9 [shape = 'u8[262144]{0}', space=vmem, size = 0x40000, scoped, tag = 'input window, operand 10, single buffered']
    #allocation10 [shape = 'u8[1024]{0}', space=vmem, size = 0x400, scoped, tag = 'input window, operand 11, single buffered']
    #allocation11 [shape = 's32[1]{0}', space=sflag, size = 0x4, scoped, tag = 'scoped memory for bert_server_forward.1']
    #allocation12 [shape = 'u8[1024]{0}', space=vmem, size = 0x400, scoped, tag = 'input window, operand 12, single buffered']
    #allocation13 [shape = 'u8[512]{0}', space=vmem, size = 0x400, scoped, tag = 'input window, operand 15, single buffered']
    #allocation14 [shape = 's32[1]{0}', space=sflag, size = 0x4, scoped, tag = 'scoped memory for bert_server_forward.1']
    #allocation15 [shape = 'u8[32768]{0}', space=vmem, size = 0x8000, scoped, tag = 'input window, operand 16, single buffered']
    %23 = vsyncpa [#allocation3], 0
    %24 = vsyncpa [#allocation5], 0
    %25 = vsyncpa [#allocation8], 0
    %26 = vsyncpa [#allocation11], 0
    %27 = vsyncpa [#allocation14], 0
    loop: start=0, step=1, limit=4
    $region2: #{bert_server_forward.1} parent=1 // loop_pre_header
      _
    $region3: #{bert_server_forward.1} parent=1 // loop_header
      %s29 = sphi 0, %s33
      %p30 = scmp.ge.s32.totalorder %s29, 4
      %s39 = sphi 0, %s41
      %s42 = sphi 0, %s39
      %s43 = sphi 0, %s42
      %s59 = sphi 0, %s43
      %s65 = sphi 0, %s67
      %s68 = sphi 0, %s65
      %s69 = sphi 0, %s68
      %s85 = sphi 0, %s69
      %s89 = sphi 0, %s89
      %s91 = sphi 0, %s89
      %s92 = sphi 0, %s91
      %s106 = sphi 0, %s92
      %s110 = sphi 0, %s110
      %s112 = sphi 0, %s110
      %s113 = sphi 0, %s112
      %s127 = sphi 0, %s113
      %s131 = sphi 0, %s131
      %s133 = sphi 0, %s131
      %s134 = sphi 0, %s133
      %s148 = sphi 0, %s134
      %s152 = sphi 0, %s152
      %s154 = sphi 0, %s152
      %s155 = sphi 0, %s154
      %s169 = sphi 0, %s155
      %s173 = sphi 0, %s173
      %s175 = sphi 0, %s173
      %s176 = sphi 0, %s175
      %s190 = sphi 0, %s176
      %s194 = sphi 0, %s194
      %s196 = sphi 0, %s194
      %s197 = sphi 0, %s196
      %s211 = sphi 0, %s197
      %s215 = sphi 0, %s215
      %s217 = sphi 0, %s215
      %s218 = sphi 0, %s217
      %s232 = sphi 0, %s218
      %s236 = sphi 0, %s236
      %s238 = sphi 0, %s236
      %s239 = sphi 0, %s238
      %s253 = sphi 0, %s239
      %s257 = sphi 0, %s257
      %s259 = sphi 0, %s257
      %s260 = sphi 0, %s259
      %s274 = sphi 0, %s260
      %s278 = sphi 0, %s278
      %s280 = sphi 0, %s278
      %s281 = sphi 0, %s280
      %s295 = sphi 0, %s281
      %s299 = sphi 0, %s299
      %s301 = sphi 0, %s299
      %s302 = sphi 0, %s301
      %s316 = sphi 0, %s302
      %s320 = sphi 0, %s320
      %s322 = sphi 0, %s320
      %s323 = sphi 0, %s322
      %s337 = sphi 0, %s323
      %s341 = sphi 0, %s341
      %s343 = sphi 0, %s341
      %s344 = sphi 0, %s343
      %s358 = sphi 0, %s344
      %s362 = sphi 0, %s362
      %s364 = sphi 0, %s362
      %s365 = sphi 0, %s364
      %s379 = sphi 0, %s365
      %s383 = sphi 0, %s383
      %s385 = sphi 0, %s383
      %s386 = sphi 0, %s385
      %s400 = sphi 0, %s386
      %s404 = sphi 0, %s404
      %s406 = sphi 0, %s404
      %s407 = sphi 0, %s406
      %s421 = sphi 0, %s407
      %s427 = sphi 0, %s429
      %s430 = sphi 0, %s427
      %s431 = sphi 0, %s430
      %s447 = sphi 0, %s431
    $region4: #{bert_server_forward.1} parent=1 // loop_header_branch
      %32 = sbr.rel (%p30) target = $region8
    $region5: #{bert_server_forward.1} parent=1 // loop_body
      %s34 = ssub.s32 %s29, 1
      %s35 = ssub.s32 %s29, 2
      %s36 = sadd.s32 %s29, 1
      %s37 = ssub.s32 %s29, %s36
      %p38 = scmp.eq.s32.totalorder %s37, 0
      %s40 = sadd.s32 %s39, 1
      %s41 = scalar_select %p38, %s39, %s40
      %p44 = pneg %p38
      %p45 = scmp.eq.s32.totalorder %s29, 1
      %p46 = por %p44, %p45
      %p47 = scmp.ne.s32.totalorder %s39, %s42
      %p48 = scmp.eq.s32.totalorder %s29, 0
      %p49 = por %p47, %p48
      %p50 = scmp.ne.s32.totalorder %s39, %s42
      %p51 = scmp.eq.s32.totalorder %s34, 1
      %p52 = por %p50, %p51
      %p53 = scmp.ne.s32.totalorder %s42, %s43
      %p54 = scmp.eq.s32.totalorder %s34, 0
      %p55 = por %p53, %p54
      %p56 = scmp.ne.s32.totalorder %s42, %s43
      %p57 = scmp.eq.s32.totalorder %s35, 1
      %p58 = por %p56, %p57
      %p60 = scmp.ne.s32.totalorder %s43, %s59
      %p61 = scmp.eq.s32.totalorder %s35, 0
      %p62 = por %p60, %p61
      %s63 = ssub.s32 %s29, %s36
      %p64 = scmp.eq.s32.totalorder %s63, 0
      %s66 = sadd.s32 %s65, 1
      %s67 = scalar_select %p64, %s65, %s66
      %p70 = pneg %p64
      %p71 = scmp.eq.s32.totalorder %s29, 1
      %p72 = por %p70, %p71
      %p73 = scmp.ne.s32.totalorder %s65, %s68
      %p74 = scmp.eq.s32.totalorder %s29, 0
      %p75 = por %p73, %p74
      %p76 = scmp.ne.s32.totalorder %s65, %s68
      %p77 = scmp.eq.s32.totalorder %s34, 1
      %p78 = por %p76, %p77
      %p79 = scmp.ne.s32.totalorder %s68, %s69
      %p80 = scmp.eq.s32.totalorder %s34, 0
      %p81 = por %p79, %p80
      %p82 = scmp.ne.s32.totalorder %s68, %s69
      %p83 = scmp.eq.s32.totalorder %s35, 1
      %p84 = por %p82, %p83
      %p86 = scmp.ne.s32.totalorder %s69, %s85
      %p87 = scmp.eq.s32.totalorder %s35, 0
      %p88 = por %p86, %p87
      %s90 = sadd.s32 %s89, 1
      %p93 = scmp.eq.s32.totalorder %s29, 1
      %p94 = scmp.ne.s32.totalorder %s89, %s91
      %p95 = scmp.eq.s32.totalorder %s29, 0
      %p96 = por %p94, %p95
      %p97 = scmp.ne.s32.totalorder %s89, %s91
      %p98 = scmp.eq.s32.totalorder %s34, 1
      %p99 = por %p97, %p98
      %p100 = scmp.ne.s32.totalorder %s91, %s92
      %p101 = scmp.eq.s32.totalorder %s34, 0
      %p102 = por %p100, %p101
      %p103 = scmp.ne.s32.totalorder %s91, %s92
      %p104 = scmp.eq.s32.totalorder %s35, 1
      %p105 = por %p103, %p104
      %p107 = scmp.ne.s32.totalorder %s92, %s106
      %p108 = scmp.eq.s32.totalorder %s35, 0
      %p109 = por %p107, %p108
      %s111 = sadd.s32 %s110, 1
      %p114 = scmp.eq.s32.totalorder %s29, 1
      %p115 = scmp.ne.s32.totalorder %s110, %s112
      %p116 = scmp.eq.s32.totalorder %s29, 0
      %p117 = por %p115, %p116
      %p118 = scmp.ne.s32.totalorder %s110, %s112
      %p119 = scmp.eq.s32.totalorder %s34, 1
      %p120 = por %p118, %p119
      %p121 = scmp.ne.s32.totalorder %s112, %s113
      %p122 = scmp.eq.s32.totalorder %s34, 0
      %p123 = por %p121, %p122
      %p124 = scmp.ne.s32.totalorder %s112, %s113
      %p125 = scmp.eq.s32.totalorder %s35, 1
      %p126 = por %p124, %p125
      %p128 = scmp.ne.s32.totalorder %s113, %s127
      %p129 = scmp.eq.s32.totalorder %s35, 0
      %p130 = por %p128, %p129
      %s132 = sadd.s32 %s131, 1
      %p135 = scmp.eq.s32.totalorder %s29, 1
      %p136 = scmp.ne.s32.totalorder %s131, %s133
      %p137 = scmp.eq.s32.totalorder %s29, 0
      %p138 = por %p136, %p137
      %p139 = scmp.ne.s32.totalorder %s131, %s133
      %p140 = scmp.eq.s32.totalorder %s34, 1
      %p141 = por %p139, %p140
      %p142 = scmp.ne.s32.totalorder %s133, %s134
      %p143 = scmp.eq.s32.totalorder %s34, 0
      %p144 = por %p142, %p143
      %p145 = scmp.ne.s32.totalorder %s133, %s134
      %p146 = scmp.eq.s32.totalorder %s35, 1
      %p147 = por %p145, %p146
      %p149 = scmp.ne.s32.totalorder %s134, %s148
      %p150 = scmp.eq.s32.totalorder %s35, 0
      %p151 = por %p149, %p150
      %s153 = sadd.s32 %s152, 1
      %p156 = scmp.eq.s32.totalorder %s29, 1
      %p157 = scmp.ne.s32.totalorder %s152, %s154
      %p158 = scmp.eq.s32.totalorder %s29, 0
      %p159 = por %p157, %p158
      %p160 = scmp.ne.s32.totalorder %s152, %s154
      %p161 = scmp.eq.s32.totalorder %s34, 1
      %p162 = por %p160, %p161
      %p163 = scmp.ne.s32.totalorder %s154, %s155
      %p164 = scmp.eq.s32.totalorder %s34, 0
      %p165 = por %p163, %p164
      %p166 = scmp.ne.s32.totalorder %s154, %s155
      %p167 = scmp.eq.s32.totalorder %s35, 1
      %p168 = por %p166, %p167
      %p170 = scmp.ne.s32.totalorder %s155, %s169
      %p171 = scmp.eq.s32.totalorder %s35, 0
      %p172 = por %p170, %p171
      %s174 = sadd.s32 %s173, 1
      %p177 = scmp.eq.s32.totalorder %s29, 1
      %p178 = scmp.ne.s32.totalorder %s173, %s175
      %p179 = scmp.eq.s32.totalorder %s29, 0
      %p180 = por %p178, %p179
      %p181 = scmp.ne.s32.totalorder %s173, %s175
      %p182 = scmp.eq.s32.totalorder %s34, 1
      %p183 = por %p181, %p182
      %p184 = scmp.ne.s32.totalorder %s175, %s176
      %p185 = scmp.eq.s32.totalorder %s34, 0
      %p186 = por %p184, %p185
      %p187 = scmp.ne.s32.totalorder %s175, %s176
      %p188 = scmp.eq.s32.totalorder %s35, 1
      %p189 = por %p187, %p188
      %p191 = scmp.ne.s32.totalorder %s176, %s190
      %p192 = scmp.eq.s32.totalorder %s35, 0
      %p193 = por %p191, %p192
      %s195 = sadd.s32 %s194, 1
      %p198 = scmp.eq.s32.totalorder %s29, 1
      %p199 = scmp.ne.s32.totalorder %s194, %s196
      %p200 = scmp.eq.s32.totalorder %s29, 0
      %p201 = por %p199, %p200
      %p202 = scmp.ne.s32.totalorder %s194, %s196
      %p203 = scmp.eq.s32.totalorder %s34, 1
      %p204 = por %p202, %p203
      %p205 = scmp.ne.s32.totalorder %s196, %s197
      %p206 = scmp.eq.s32.totalorder %s34, 0
      %p207 = por %p205, %p206
      %p208 = scmp.ne.s32.totalorder %s196, %s197
      %p209 = scmp.eq.s32.totalorder %s35, 1
      %p210 = por %p208, %p209
      %p212 = scmp.ne.s32.totalorder %s197, %s211
      %p213 = scmp.eq.s32.totalorder %s35, 0
      %p214 = por %p212, %p213
      %s216 = sadd.s32 %s215, 1
      %p219 = scmp.eq.s32.totalorder %s29, 1
      %p220 = scmp.ne.s32.totalorder %s215, %s217
      %p221 = scmp.eq.s32.totalorder %s29, 0
      %p222 = por %p220, %p221
      %p223 = scmp.ne.s32.totalorder %s215, %s217
      %p224 = scmp.eq.s32.totalorder %s34, 1
      %p225 = por %p223, %p224
      %p226 = scmp.ne.s32.totalorder %s217, %s218
      %p227 = scmp.eq.s32.totalorder %s34, 0
      %p228 = por %p226, %p227
      %p229 = scmp.ne.s32.totalorder %s217, %s218
      %p230 = scmp.eq.s32.totalorder %s35, 1
      %p231 = por %p229, %p230
      %p233 = scmp.ne.s32.totalorder %s218, %s232
      %p234 = scmp.eq.s32.totalorder %s35, 0
      %p235 = por %p233, %p234
      %s237 = sadd.s32 %s236, 1
      %p240 = scmp.eq.s32.totalorder %s29, 1
      %p241 = scmp.ne.s32.totalorder %s236, %s238
      %p242 = scmp.eq.s32.totalorder %s29, 0
      %p243 = por %p241, %p242
      %p244 = scmp.ne.s32.totalorder %s236, %s238
      %p245 = scmp.eq.s32.totalorder %s34, 1
      %p246 = por %p244, %p245
      %p247 = scmp.ne.s32.totalorder %s238, %s239
      %p248 = scmp.eq.s32.totalorder %s34, 0
      %p249 = por %p247, %p248
      %p250 = scmp.ne.s32.totalorder %s238, %s239
      %p251 = scmp.eq.s32.totalorder %s35, 1
      %p252 = por %p250, %p251
      %p254 = scmp.ne.s32.totalorder %s239, %s253
      %p255 = scmp.eq.s32.totalorder %s35, 0
      %p256 = por %p254, %p255
      %s258 = sadd.s32 %s257, 1
      %p261 = scmp.eq.s32.totalorder %s29, 1
      %p262 = scmp.ne.s32.totalorder %s257, %s259
      %p263 = scmp.eq.s32.totalorder %s29, 0
      %p264 = por %p262, %p263
      %p265 = scmp.ne.s32.totalorder %s257, %s259
      %p266 = scmp.eq.s32.totalorder %s34, 1
      %p267 = por %p265, %p266
      %p268 = scmp.ne.s32.totalorder %s259, %s260
      %p269 = scmp.eq.s32.totalorder %s34, 0
      %p270 = por %p268, %p269
      %p271 = scmp.ne.s32.totalorder %s259, %s260
      %p272 = scmp.eq.s32.totalorder %s35, 1
      %p273 = por %p271, %p272
      %p275 = scmp.ne.s32.totalorder %s260, %s274
      %p276 = scmp.eq.s32.totalorder %s35, 0
      %p277 = por %p275, %p276
      %s279 = sadd.s32 %s278, 1
      %p282 = scmp.eq.s32.totalorder %s29, 1
      %p283 = scmp.ne.s32.totalorder %s278, %s280
      %p284 = scmp.eq.s32.totalorder %s29, 0
      %p285 = por %p283, %p284
      %p286 = scmp.ne.s32.totalorder %s278, %s280
      %p287 = scmp.eq.s32.totalorder %s34, 1
      %p288 = por %p286, %p287
      %p289 = scmp.ne.s32.totalorder %s280, %s281
      %p290 = scmp.eq.s32.totalorder %s34, 0
      %p291 = por %p289, %p290
      %p292 = scmp.ne.s32.totalorder %s280, %s281
      %p293 = scmp.eq.s32.totalorder %s35, 1
      %p294 = por %p292, %p293
      %p296 = scmp.ne.s32.totalorder %s281, %s295
      %p297 = scmp.eq.s32.totalorder %s35, 0
      %p298 = por %p296, %p297
      %s300 = sadd.s32 %s299, 1
      %p303 = scmp.eq.s32.totalorder %s29, 1
      %p304 = scmp.ne.s32.totalorder %s299, %s301
      %p305 = scmp.eq.s32.totalorder %s29, 0
      %p306 = por %p304, %p305
      %p307 = scmp.ne.s32.totalorder %s299, %s301
      %p308 = scmp.eq.s32.totalorder %s34, 1
      %p309 = por %p307, %p308
      %p310 = scmp.ne.s32.totalorder %s301, %s302
      %p311 = scmp.eq.s32.totalorder %s34, 0
      %p312 = por %p310, %p311
      %p313 = scmp.ne.s32.totalorder %s301, %s302
      %p314 = scmp.eq.s32.totalorder %s35, 1
      %p315 = por %p313, %p314
      %p317 = scmp.ne.s32.totalorder %s302, %s316
      %p318 = scmp.eq.s32.totalorder %s35, 0
      %p319 = por %p317, %p318
      %s321 = sadd.s32 %s320, 1
      %p324 = scmp.eq.s32.totalorder %s29, 1
      %p325 = scmp.ne.s32.totalorder %s320, %s322
      %p326 = scmp.eq.s32.totalorder %s29, 0
      %p327 = por %p325, %p326
      %p328 = scmp.ne.s32.totalorder %s320, %s322
      %p329 = scmp.eq.s32.totalorder %s34, 1
      %p330 = por %p328, %p329
      %p331 = scmp.ne.s32.totalorder %s322, %s323
      %p332 = scmp.eq.s32.totalorder %s34, 0
      %p333 = por %p331, %p332
      %p334 = scmp.ne.s32.totalorder %s322, %s323
      %p335 = scmp.eq.s32.totalorder %s35, 1
      %p336 = por %p334, %p335
      %p338 = scmp.ne.s32.totalorder %s323, %s337
      %p339 = scmp.eq.s32.totalorder %s35, 0
      %p340 = por %p338, %p339
      %s342 = sadd.s32 %s341, 1
      %p345 = scmp.eq.s32.totalorder %s29, 1
      %p346 = scmp.ne.s32.totalorder %s341, %s343
      %p347 = scmp.eq.s32.totalorder %s29, 0
      %p348 = por %p346, %p347
      %p349 = scmp.ne.s32.totalorder %s341, %s343
      %p350 = scmp.eq.s32.totalorder %s34, 1
      %p351 = por %p349, %p350
      %p352 = scmp.ne.s32.totalorder %s343, %s344
      %p353 = scmp.eq.s32.totalorder %s34, 0
      %p354 = por %p352, %p353
      %p355 = scmp.ne.s32.totalorder %s343, %s344
      %p356 = scmp.eq.s32.totalorder %s35, 1
      %p357 = por %p355, %p356
      %p359 = scmp.ne.s32.totalorder %s344, %s358
      %p360 = scmp.eq.s32.totalorder %s35, 0
      %p361 = por %p359, %p360
      %s363 = sadd.s32 %s362, 1
      %p366 = scmp.eq.s32.totalorder %s29, 1
      %p367 = scmp.ne.s32.totalorder %s362, %s364
      %p368 = scmp.eq.s32.totalorder %s29, 0
      %p369 = por %p367, %p368
      %p370 = scmp.ne.s32.totalorder %s362, %s364
      %p371 = scmp.eq.s32.totalorder %s34, 1
      %p372 = por %p370, %p371
      %p373 = scmp.ne.s32.totalorder %s364, %s365
      %p374 = scmp.eq.s32.totalorder %s34, 0
      %p375 = por %p373, %p374
      %p376 = scmp.ne.s32.totalorder %s364, %s365
      %p377 = scmp.eq.s32.totalorder %s35, 1
      %p378 = por %p376, %p377
      %p380 = scmp.ne.s32.totalorder %s365, %s379
      %p381 = scmp.eq.s32.totalorder %s35, 0
      %p382 = por %p380, %p381
      %s384 = sadd.s32 %s383, 1
      %p387 = scmp.eq.s32.totalorder %s29, 1
      %p388 = scmp.ne.s32.totalorder %s383, %s385
      %p389 = scmp.eq.s32.totalorder %s29, 0
      %p390 = por %p388, %p389
      %p391 = scmp.ne.s32.totalorder %s383, %s385
      %p392 = scmp.eq.s32.totalorder %s34, 1
      %p393 = por %p391, %p392
      %p394 = scmp.ne.s32.totalorder %s385, %s386
      %p395 = scmp.eq.s32.totalorder %s34, 0
      %p396 = por %p394, %p395
      %p397 = scmp.ne.s32.totalorder %s385, %s386
      %p398 = scmp.eq.s32.totalorder %s35, 1
      %p399 = por %p397, %p398
      %p401 = scmp.ne.s32.totalorder %s386, %s400
      %p402 = scmp.eq.s32.totalorder %s35, 0
      %p403 = por %p401, %p402
      %s405 = sadd.s32 %s404, 1
      %p408 = scmp.eq.s32.totalorder %s29, 1
      %p409 = scmp.ne.s32.totalorder %s404, %s406
      %p410 = scmp.eq.s32.totalorder %s29, 0
      %p411 = por %p409, %p410
      %p412 = scmp.ne.s32.totalorder %s404, %s406
      %p413 = scmp.eq.s32.totalorder %s34, 1
      %p414 = por %p412, %p413
      %p415 = scmp.ne.s32.totalorder %s406, %s407
      %p416 = scmp.eq.s32.totalorder %s34, 0
      %p417 = por %p415, %p416
      %p418 = scmp.ne.s32.totalorder %s406, %s407
      %p419 = scmp.eq.s32.totalorder %s35, 1
      %p420 = por %p418, %p419
      %p422 = scmp.ne.s32.totalorder %s407, %s421
      %p423 = scmp.eq.s32.totalorder %s35, 0
      %p424 = por %p422, %p423
      %s425 = ssub.s32 %s29, %s36
      %p426 = scmp.eq.s32.totalorder %s425, 0
      %s428 = sadd.s32 %s427, 1
      %s429 = scalar_select %p426, %s427, %s428
      %p432 = pneg %p426
      %p433 = scmp.eq.s32.totalorder %s29, 1
      %p434 = por %p432, %p433
      %p435 = scmp.ne.s32.totalorder %s427, %s430
      %p436 = scmp.eq.s32.totalorder %s29, 0
      %p437 = por %p435, %p436
      %p438 = scmp.ne.s32.totalorder %s427, %s430
      %p439 = scmp.eq.s32.totalorder %s34, 1
      %p440 = por %p438, %p439
      %p441 = scmp.ne.s32.totalorder %s430, %s431
      %p442 = scmp.eq.s32.totalorder %s34, 0
      %p443 = por %p441, %p442
      %p444 = scmp.ne.s32.totalorder %s430, %s431
      %p445 = scmp.eq.s32.totalorder %s35, 1
      %p446 = por %p444, %p445
      %p448 = scmp.ne.s32.totalorder %s431, %s447
      %p449 = scmp.eq.s32.totalorder %s35, 0
      %p450 = por %p448, %p449
      %p451 = scmp.le.s32.totalorder 1, %s29
      %p452 = scmp.lt.s32.totalorder %s29, 3
      %p453 = pnand %p451, %p452
      %p454 = pneg %p453
      // Predicated region
      $region9: #{bert_server_forward.1} parent=5 // pred_check
        _
      $region10: #{bert_server_forward.1} parent=5 // pred_check_branch
        %456 = sbr.rel (%p453) target = $region12
      $region11: #{bert_server_forward.1} parent=5 // pred_region
        %s457 = ssub.s32 %s29, 1
        // Predicated region
        $region13: #{bert_server_forward.1} parent=11 // pred_check
          %p458 = pneg %p102
        $region14: #{bert_server_forward.1} parent=11 // pred_check_branch
          %460 = sbr.rel (%p458) target = $region16
        $region15: #{bert_server_forward.1} parent=11 // pred_region
          %s462 = ssub.s32 6144, 6144
          %463 = vsyncadd [#allocation3], %s462
          %s464 = sshll.u32 [#allocation2], 4
          %s465 = int_to_ptr.vmem [resolvable:$true] %s464
          %470 = dma.hbm_to_vmem [thread:$0]  %s2, 6144, %s465, [#allocation3], 192, 192, 12
        $region16: #{bert_server_forward.1} parent=11 // pred_fallthru
          _
        // Predicated region
        $region17: #{bert_server_forward.1} parent=11 // pred_check
          %p471 = pneg %p123
        $region18: #{bert_server_forward.1} parent=11 // pred_check_branch
          %473 = sbr.rel (%p471) target = $region20
        $region19: #{bert_server_forward.1} parent=11 // pred_region
          %s475 = ssub.s32 96, 96
          %476 = vsyncadd [#allocation5], %s475
          %s477 = sshll.u32 [#allocation4], 4
          %s478 = int_to_ptr.vmem [resolvable:$true] %s477
          %483 = dma.hbm_to_vmem [thread:$0]  %s3, 96, %s478, [#allocation5], 48, 48, 3
        $region20: #{bert_server_forward.1} parent=11 // pred_fallthru
          _
        // Predicated region
        $region21: #{bert_server_forward.1} parent=11 // pred_check
          %p484 = pneg %p144
        $region22: #{bert_server_forward.1} parent=11 // pred_check_branch
          %486 = sbr.rel (%p484) target = $region24
        $region23: #{bert_server_forward.1} parent=11 // pred_region
          %s488 = ssub.s32 2048, 2048
          %489 = vsyncadd [#allocation5], %s488
          %s490 = sshll.u32 [#allocation6], 4
          %s491 = int_to_ptr.vmem [resolvable:$true] %s490
          %496 = dma.hbm_to_vmem [thread:$0]  %s4, 2048, %s491, [#allocation5], 64, 64, 4
        $region24: #{bert_server_forward.1} parent=11 // pred_fallthru
          _
        // Predicated region
        $region25: #{bert_server_forward.1} parent=11 // pred_check
          %p497 = pneg %p165
        $region26: #{bert_server_forward.1} parent=11 // pred_check_branch
          %499 = sbr.rel (%p497) target = $region28
        $region27: #{bert_server_forward.1} parent=11 // pred_region
          _
        $region28: #{bert_server_forward.1} parent=11 // pred_fallthru
          _
        // Predicated region
        $region29: #{bert_server_forward.1} parent=11 // pred_check
          %p500 = pneg %p186
        $region30: #{bert_server_forward.1} parent=11 // pred_check_branch
          %502 = sbr.rel (%p500) target = $region32
        $region31: #{bert_server_forward.1} parent=11 // pred_region
          _
        $region32: #{bert_server_forward.1} parent=11 // pred_fallthru
          _
        // Predicated region
        $region33: #{bert_server_forward.1} parent=11 // pred_check
          %p503 = pneg %p207
        $region34: #{bert_server_forward.1} parent=11 // pred_check_branch
          %505 = sbr.rel (%p503) target = $region36
        $region35: #{bert_server_forward.1} parent=11 // pred_region
          _
        $region36: #{bert_server_forward.1} parent=11 // pred_fallthru
          _
        // Predicated region
        $region37: #{bert_server_forward.1} parent=11 // pred_check
          %p506 = pneg %p228
        $region38: #{bert_server_forward.1} parent=11 // pred_check_branch
          %508 = sbr.rel (%p506) target = $region40
        $region39: #{bert_server_forward.1} parent=11 // pred_region
          %s510 = ssub.s32 8192, 8192
          %511 = vsyncadd [#allocation8], %s510
          %s512 = sshll.u32 [#allocation7], 4
          %s513 = int_to_ptr.vmem [resolvable:$true] %s512
          %518 = dma.hbm_to_vmem [thread:$0]  %s8, 8192, %s513, [#allocation8], 256, 256, 16
        $region40: #{bert_server_forward.1} parent=11 // pred_fallthru
          _
        // Predicated region
        $region41: #{bert_server_forward.1} parent=11 // pred_check
          %p519 = pneg %p249
        $region42: #{bert_server_forward.1} parent=11 // pred_check_branch
          %521 = sbr.rel (%p519) target = $region44
        $region43: #{bert_server_forward.1} parent=11 // pred_region
          _
        $region44: #{bert_server_forward.1} parent=11 // pred_fallthru
          _
        // Predicated region
        $region45: #{bert_server_forward.1} parent=11 // pred_check
          %p522 = pneg %p270
        $region46: #{bert_server_forward.1} parent=11 // pred_check_branch
          %524 = sbr.rel (%p522) target = $region48
        $region47: #{bert_server_forward.1} parent=11 // pred_region
          %s526 = ssub.s32 8192, 8192
          %527 = vsyncadd [#allocation8], %s526
          %s528 = sshll.u32 [#allocation9], 4
          %s529 = int_to_ptr.vmem [resolvable:$true] %s528
          %534 = dma.hbm_to_vmem [thread:$0]  %s10, 8192, %s529, [#allocation8], 64, 64, 4
        $region48: #{bert_server_forward.1} parent=11 // pred_fallthru
          _
        // Predicated region
        $region49: #{bert_server_forward.1} parent=11 // pred_check
          %p535 = pneg %p291
        $region50: #{bert_server_forward.1} parent=11 // pred_check_branch
          %537 = sbr.rel (%p535) target = $region52
        $region51: #{bert_server_forward.1} parent=11 // pred_region
          %s539 = ssub.s32 32, 32
          %540 = vsyncadd [#allocation11], %s539
          %s541 = sshll.u32 [#allocation10], 4
          %s542 = int_to_ptr.vmem [resolvable:$true] %s541
          %547 = dma.hbm_to_vmem [thread:$0]  %s11, 32, %s542, [#allocation11], 16, 16, 1
        $region52: #{bert_server_forward.1} parent=11 // pred_fallthru
          _
        // Predicated region
        $region53: #{bert_server_forward.1} parent=11 // pred_check
          %p548 = pneg %p312
        $region54: #{bert_server_forward.1} parent=11 // pred_check_branch
          %550 = sbr.rel (%p548) target = $region56
        $region55: #{bert_server_forward.1} parent=11 // pred_region
          %s552 = ssub.s32 32, 32
          %553 = vsyncadd [#allocation11], %s552
          %s554 = sshll.u32 [#allocation12], 4
          %s555 = int_to_ptr.vmem [resolvable:$true] %s554
          %560 = dma.hbm_to_vmem [thread:$0]  %s12, 32, %s555, [#allocation11], 16, 16, 1
        $region56: #{bert_server_forward.1} parent=11 // pred_fallthru
          _
        // Predicated region
        $region57: #{bert_server_forward.1} parent=11 // pred_check
          %p561 = pneg %p333
        $region58: #{bert_server_forward.1} parent=11 // pred_check_branch
          %563 = sbr.rel (%p561) target = $region60
        $region59: #{bert_server_forward.1} parent=11 // pred_region
          _
        $region60: #{bert_server_forward.1} parent=11 // pred_fallthru
          _
        // Predicated region
        $region61: #{bert_server_forward.1} parent=11 // pred_check
          %p564 = pneg %p354
        $region62: #{bert_server_forward.1} parent=11 // pred_check_branch
          %566 = sbr.rel (%p564) target = $region64
        $region63: #{bert_server_forward.1} parent=11 // pred_region
          _
        $region64: #{bert_server_forward.1} parent=11 // pred_fallthru
          _
        // Predicated region
        $region65: #{bert_server_forward.1} parent=11 // pred_check
          %p567 = pneg %p375
        $region66: #{bert_server_forward.1} parent=11 // pred_check_branch
          %569 = sbr.rel (%p567) target = $region68
        $region67: #{bert_server_forward.1} parent=11 // pred_region
          %s571 = ssub.s32 16, 16
          %572 = vsyncadd [#allocation14], %s571
          %s574 = sshll.u32 [#allocation13], 4
          %s575 = int_to_ptr.vmem [resolvable:$true] %s574
          %577 = dma.hbm_to_vmem [thread:$0]  %s15, 16, %s575, [#allocation14]
        $region68: #{bert_server_forward.1} parent=11 // pred_fallthru
          _
        // Predicated region
        $region69: #{bert_server_forward.1} parent=11 // pred_check
          %p578 = pneg %p396
        $region70: #{bert_server_forward.1} parent=11 // pred_check_branch
          %580 = sbr.rel (%p578) target = $region72
        $region71: #{bert_server_forward.1} parent=11 // pred_region
          %s582 = ssub.s32 1024, 1024
          %583 = vsyncadd [#allocation14], %s582
          %s584 = sshll.u32 [#allocation15], 4
          %s585 = int_to_ptr.vmem [resolvable:$true] %s584
          %590 = dma.hbm_to_vmem [thread:$0]  %s16, 1024, %s585, [#allocation14], 64, 64, 4
        $region72: #{bert_server_forward.1} parent=11 // pred_fallthru
          _
        // Predicated region
        $region73: #{bert_server_forward.1} parent=11 // pred_check
          %p591 = pneg %p417
        $region74: #{bert_server_forward.1} parent=11 // pred_check_branch
          %593 = sbr.rel (%p591) target = $region76
        $region75: #{bert_server_forward.1} parent=11 // pred_region
          _
        $region76: #{bert_server_forward.1} parent=11 // pred_fallthru
          _
      $region12: #{bert_server_forward.1} parent=5 // pred_fallthru
        _
      %p594 = scmp.lt.s32.totalorder %s29, 2
      // Predicated region
      $region77: #{bert_server_forward.1} parent=5 // pred_check
        %p595 = pneg %p594
      $region78: #{bert_server_forward.1} parent=5 // pred_check_branch
        %597 = sbr.rel (%p595) target = $region80
      $region79: #{bert_server_forward.1} parent=5 // pred_region
        // Predicated region
        $region81: #{bert_server_forward.1} parent=79 // pred_check
          %p598 = pneg %p49
        $region82: #{bert_server_forward.1} parent=79 // pred_check_branch
          %600 = sbr.rel (%p598) target = $region84
        $region83: #{bert_server_forward.1} parent=79 // pred_region
          %p601 = scmp.lt.s32.totalorder %s29, 1
          %s602 = scalar_select %p601, %s29, 1
          %s603 = smul.addr %s602, 8
          %s604 = scalar_lea.vmem %s0, %s603
        $region84: #{bert_server_forward.1} parent=79 // pred_fallthru
          _
        // Predicated region
        $region85: #{bert_server_forward.1} parent=79 // pred_check
          %p605 = pneg %p75
        $region86: #{bert_server_forward.1} parent=79 // pred_check_branch
          %607 = sbr.rel (%p605) target = $region88
        $region87: #{bert_server_forward.1} parent=79 // pred_region
          %p608 = scmp.lt.s32.totalorder %s29, 1
          %s609 = scalar_select %p608, %s29, 1
          %s610 = smul.addr %s609, 4
          %s611 = smul.addr %s610, 8
          %s612 = scalar_lea.vmem %s1, %s611
        $region88: #{bert_server_forward.1} parent=79 // pred_fallthru
          _
      $region80: #{bert_server_forward.1} parent=5 // pred_fallthru
        _
      %p613 = scmp.le.s32.totalorder 1, %s29
      %p614 = scmp.lt.s32.totalorder %s29, 3
      %p615 = pnand %p613, %p614
      %p616 = pneg %p615
      // Predicated region
      $region89: #{bert_server_forward.1} parent=5 // pred_check
        _
      $region90: #{bert_server_forward.1} parent=5 // pred_check_branch
        %618 = sbr.rel (%p615) target = $region92
      $region91: #{bert_server_forward.1} parent=5 // pred_region
        %s619 = ssub.s32 %s29, 1
        // Predicated region
        $region93: #{bert_server_forward.1} parent=91 // pred_check
          %p620 = pneg %p102
        $region94: #{bert_server_forward.1} parent=91 // pred_check_branch
          %622 = sbr.rel (%p620) target = $region96
        $region95: #{bert_server_forward.1} parent=91 // pred_region
          %623 = dma.done [#allocation3], 6144
        $region96: #{bert_server_forward.1} parent=91 // pred_fallthru
          _
        // Predicated region
        $region97: #{bert_server_forward.1} parent=91 // pred_check
          %p624 = pneg %p123
        $region98: #{bert_server_forward.1} parent=91 // pred_check_branch
          %626 = sbr.rel (%p624) target = $region100
        $region99: #{bert_server_forward.1} parent=91 // pred_region
          %627 = dma.done [#allocation5], 96
        $region100: #{bert_server_forward.1} parent=91 // pred_fallthru
          _
        // Predicated region
        $region101: #{bert_server_forward.1} parent=91 // pred_check
          %p628 = pneg %p144
        $region102: #{bert_server_forward.1} parent=91 // pred_check_branch
          %630 = sbr.rel (%p628) target = $region104
        $region103: #{bert_server_forward.1} parent=91 // pred_region
          %631 = dma.done [#allocation5], 2048
        $region104: #{bert_server_forward.1} parent=91 // pred_fallthru
          _
        // Predicated region
        $region105: #{bert_server_forward.1} parent=91 // pred_check
          %p632 = pneg %p228
        $region106: #{bert_server_forward.1} parent=91 // pred_check_branch
          %634 = sbr.rel (%p632) target = $region108
        $region107: #{bert_server_forward.1} parent=91 // pred_region
          %635 = dma.done [#allocation8], 8192
        $region108: #{bert_server_forward.1} parent=91 // pred_fallthru
          _
        // Predicated region
        $region109: #{bert_server_forward.1} parent=91 // pred_check
          %p636 = pneg %p270
        $region110: #{bert_server_forward.1} parent=91 // pred_check_branch
          %638 = sbr.rel (%p636) target = $region112
        $region111: #{bert_server_forward.1} parent=91 // pred_region
          %639 = dma.done [#allocation8], 8192
        $region112: #{bert_server_forward.1} parent=91 // pred_fallthru
          _
        // Predicated region
        $region113: #{bert_server_forward.1} parent=91 // pred_check
          %p640 = pneg %p291
        $region114: #{bert_server_forward.1} parent=91 // pred_check_branch
          %642 = sbr.rel (%p640) target = $region116
        $region115: #{bert_server_forward.1} parent=91 // pred_region
          %643 = dma.done [#allocation11], 32
        $region116: #{bert_server_forward.1} parent=91 // pred_fallthru
          _
        // Predicated region
        $region117: #{bert_server_forward.1} parent=91 // pred_check
          %p644 = pneg %p312
        $region118: #{bert_server_forward.1} parent=91 // pred_check_branch
          %646 = sbr.rel (%p644) target = $region120
        $region119: #{bert_server_forward.1} parent=91 // pred_region
          %647 = dma.done [#allocation11], 32
        $region120: #{bert_server_forward.1} parent=91 // pred_fallthru
          _
        // Predicated region
        $region121: #{bert_server_forward.1} parent=91 // pred_check
          %p648 = pneg %p375
        $region122: #{bert_server_forward.1} parent=91 // pred_check_branch
          %650 = sbr.rel (%p648) target = $region124
        $region123: #{bert_server_forward.1} parent=91 // pred_region
          %651 = dma.done [#allocation14], 16
        $region124: #{bert_server_forward.1} parent=91 // pred_fallthru
          _
        // Predicated region
        $region125: #{bert_server_forward.1} parent=91 // pred_check
          %p652 = pneg %p396
        $region126: #{bert_server_forward.1} parent=91 // pred_check_branch
          %654 = sbr.rel (%p652) target = $region128
        $region127: #{bert_server_forward.1} parent=91 // pred_region
          %655 = dma.done [#allocation14], 1024
        $region128: #{bert_server_forward.1} parent=91 // pred_fallthru
          _
        %p656 = scmp.lt.s32.totalorder %s34, 1
        %s657 = scalar_select %p656, %s34, 1
        %s658 = smul.addr %s657, 8
        %s659 = scalar_lea.vmem %s0, %s658
        %p660 = pneg %p55
        %p661 = pneg %p52
        %p662 = scmp.lt.s32.totalorder %s34, 1
        %s663 = scalar_select %p662, %s34, 1
        %s664 = smul.addr %s663, 4
        %s665 = smul.addr %s664, 8
        %s666 = scalar_lea.vmem %s1, %s665
        %p667 = pneg %p81
        %p668 = pneg %p78
        %p669 = pneg %p102
        %p670 = pneg %p99
        %p671 = pneg %p123
        %p672 = pneg %p120
        %p673 = pneg %p144
        %p674 = pneg %p141
        %p675 = pneg %p165
        %p676 = pneg %p162
        %p677 = pneg %p186
        %p678 = pneg %p183
        %p679 = pneg %p207
        %p680 = pneg %p204
        %p681 = pneg %p228
        %p682 = pneg %p225
        %p683 = pneg %p249
        %p684 = pneg %p246
        %p685 = pneg %p270
        %p686 = pneg %p267
        %p687 = pneg %p291
        %p688 = pneg %p288
        %p689 = pneg %p312
        %p690 = pneg %p309
        %p691 = pneg %p333
        %p692 = pneg %p330
        %p693 = pneg %p354
        %p694 = pneg %p351
        %p695 = pneg %p375
        %p696 = pneg %p372
        %p697 = pneg %p396
        %p698 = pneg %p393
        %p699 = pneg %p417
        %p700 = pneg %p414
        %p701 = pneg %p443
        %p702 = pneg %p440
        %p703 = scmp.lt.s32.totalorder %s34, 1
        %s704 = scalar_select %p703, %s34, 1
        %s705 = scalar_lea.vmem %s18, %s704
        %p706 = scmp.lt.s32.totalorder %s34, 1
        %s707 = scalar_select %p706, %s34, 1
        %s708 = smul.addr %s707, 8
        %s709 = scalar_lea.vmem %s0, %s708
        %p710 = scmp.lt.s32.totalorder %s34, 1
        %s711 = scalar_select %p710, %s34, 1
        %s712 = smul.addr %s711, 4
        %s713 = smul.addr %s712, 8
        %s714 = scalar_lea.vmem %s1, %s713
        %p715 = scmp.lt.s32.totalorder %s34, 1
        %s716 = scalar_select %p715, %s34, 1
        %s717 = scalar_lea.vmem %s18, %s716
        %v719 = vld [vmem:[%s709] sm:$0xff]
        %v720 = vld [vmem:[%s714] sm:$0xff]
        %v721 = vld [vmem:[%s714 + $0x8] sm:$0xff]
        %v722 = vld [vmem:[%s714 + $0x10] sm:$0xff]
        %v723 = vld [vmem:[%s714 + $0x18] sm:$0xff]
        %v724 = vpack.c.bf16 %v719, %v719
        %v725 = vld [vmem:[#allocation2] sm:$0xff]
        %v726 = vld [vmem:[#allocation2 + $0x8] sm:$0xf]
        %v727 = vld [vmem:[#allocation2 + $0xc] sm:$0xff]
        %v728 = vld [vmem:[#allocation2 + $0x14] sm:$0xf]
        %v729 = vld [vmem:[#allocation2 + $0x18] sm:$0xff]
        %v730 = vld [vmem:[#allocation2 + $0x20] sm:$0xf]
        %v731 = vld [vmem:[#allocation2 + $0x24] sm:$0xff]
        %v732 = vld [vmem:[#allocation2 + $0x2c] sm:$0xf]
        %v733 = vld [vmem:[#allocation2 + $0x30] sm:$0xff]
        %v734 = vld [vmem:[#allocation2 + $0x38] sm:$0xf]
        %v735 = vld [vmem:[#allocation2 + $0x3c] sm:$0xff]
        %v736 = vld [vmem:[#allocation2 + $0x44] sm:$0xf]
        %v737 = vld [vmem:[#allocation2 + $0x48] sm:$0xff]
        %v738 = vld [vmem:[#allocation2 + $0x50] sm:$0xf]
        %v739 = vld [vmem:[#allocation2 + $0x54] sm:$0xff]
        %v740 = vld [vmem:[#allocation2 + $0x5c] sm:$0xf]
        %v741 = vld [vmem:[#allocation2 + $0x60] sm:$0xff]
        %v742 = vld [vmem:[#allocation2 + $0x68] sm:$0xf]
        %v743 = vld [vmem:[#allocation2 + $0x6c] sm:$0xff]
        %v744 = vld [vmem:[#allocation2 + $0x74] sm:$0xf]
        %v745 = vld [vmem:[#allocation2 + $0x78] sm:$0xff]
        %v746 = vld [vmem:[#allocation2 + $0x80] sm:$0xf]
        %v747 = vld [vmem:[#allocation2 + $0x84] sm:$0xff]
        %v748 = vld [vmem:[#allocation2 + $0x8c] sm:$0xf]
        %v749 = vld [vmem:[#allocation2 + $0x90] sm:$0xff]
        %v750 = vld [vmem:[#allocation2 + $0x98] sm:$0xf]
        %v751 = vld [vmem:[#allocation2 + $0x9c] sm:$0xff]
        %v752 = vld [vmem:[#allocation2 + $0xa4] sm:$0xf]
        %v753 = vld [vmem:[#allocation2 + $0xa8] sm:$0xff]
        %v754 = vld [vmem:[#allocation2 + $0xb0] sm:$0xf]
        %v755 = vld [vmem:[#allocation2 + $0xb4] sm:$0xff]
        %v756 = vld [vmem:[#allocation2 + $0xbc] sm:$0xf]
        %v757 = vld [vmem:[#allocation4] sm:$0x7]
        %v759 = vlaneseq
        %v760 = vshrl.u32 %v759, 7
        %v761 = vsub.s32 0, %v760
        %v762 = vrot.slane %v757, %v761
        %v763 = vlaneseq
        %v764 = vshrl.u32 %v763, 7
        %v765 = vsub.s32 1, %v764
        %v766 = vrot.slane %v757, %v765
        %v767 = vlaneseq
        %v768 = vshrl.u32 %v767, 7
        %v769 = vsub.s32 2, %v768
        %v770 = vrot.slane %v757, %v769
        %v806 = vunpack.c.l.b16 %v725
        %v807 = vunpack.c.h.b16 %v725
        %v808 = vunpack.c.l.b16 %v726
        %v809 = vunpack.c.l.b16 %v727
        %v810 = vunpack.c.h.b16 %v727
        %v811 = vunpack.c.l.b16 %v728
        %v812 = vunpack.c.l.b16 %v729
        %v813 = vunpack.c.h.b16 %v729
        %v814 = vunpack.c.l.b16 %v730
        %v815 = vunpack.c.l.b16 %v731
        %v816 = vunpack.c.h.b16 %v731
        %v817 = vunpack.c.l.b16 %v732
        %v818 = vunpack.c.l.b16 %v733
        %v819 = vunpack.c.h.b16 %v733
        %v820 = vunpack.c.l.b16 %v734
        %v821 = vunpack.c.l.b16 %v735
        %v822 = vunpack.c.h.b16 %v735
        %v823 = vunpack.c.l.b16 %v736
        %v824 = vunpack.c.l.b16 %v737
        %v825 = vunpack.c.h.b16 %v737
        %v826 = vunpack.c.l.b16 %v738
        %v827 = vunpack.c.l.b16 %v739
        %v828 = vunpack.c.h.b16 %v739
        %v829 = vunpack.c.l.b16 %v740
        %v830 = vunpack.c.l.b16 %v741
        %v831 = vunpack.c.h.b16 %v741
        %v832 = vunpack.c.l.b16 %v742
        %v833 = vunpack.c.l.b16 %v743
        %v834 = vunpack.c.h.b16 %v743
        %v835 = vunpack.c.l.b16 %v744
        %v836 = vunpack.c.l.b16 %v745
        %v837 = vunpack.c.h.b16 %v745
        %v838 = vunpack.c.l.b16 %v746
        %v839 = vunpack.c.l.b16 %v747
        %v840 = vunpack.c.h.b16 %v747
        %v841 = vunpack.c.l.b16 %v748
        %v842 = vunpack.c.l.b16 %v749
        %v843 = vunpack.c.h.b16 %v749
        %v844 = vunpack.c.l.b16 %v750
        %v845 = vunpack.c.l.b16 %v751
        %v846 = vunpack.c.h.b16 %v751
        %v847 = vunpack.c.l.b16 %v752
        %v848 = vunpack.c.l.b16 %v753
        %v849 = vunpack.c.h.b16 %v753
        %v850 = vunpack.c.l.b16 %v754
        %v851 = vunpack.c.l.b16 %v755
        %v852 = vunpack.c.h.b16 %v755
        %v853 = vunpack.c.l.b16 %v756
        %v854 = vpack.c.b16 %v809, %v806
        %v855 = vpack.c.b16 %v810, %v807
        %v856 = vpack.c.b16 %v811, %v808
        %v857 = vpack.c.b16 %v815, %v812
        %v858 = vpack.c.b16 %v816, %v813
        %v859 = vpack.c.b16 %v817, %v814
        %v860 = vpack.c.b16 %v821, %v818
        %v861 = vpack.c.b16 %v822, %v819
        %v862 = vpack.c.b16 %v823, %v820
        %v863 = vpack.c.b16 %v827, %v824
        %v864 = vpack.c.b16 %v828, %v825
        %v865 = vpack.c.b16 %v829, %v826
        %v866 = vpack.c.b16 %v833, %v830
        %v867 = vpack.c.b16 %v834, %v831
        %v868 = vpack.c.b16 %v835, %v832
        %v869 = vpack.c.b16 %v839, %v836
        %v870 = vpack.c.b16 %v840, %v837
        %v871 = vpack.c.b16 %v841, %v838
        %v872 = vpack.c.b16 %v845, %v842
        %v873 = vpack.c.b16 %v846, %v843
        %v874 = vpack.c.b16 %v847, %v844
        %v875 = vpack.c.b16 %v851, %v848
        %v876 = vpack.c.b16 %v852, %v849
        %v877 = vpack.c.b16 %v853, %v850
        %902 = vmatprep.subr.bf16.mxu0 %v855
        %903 = vmatpush1.bf16.msra.mxu0 %v854
        %904 = vmatprep.subr.bf16.mxu0 %v858
        %905 = vmatpush1.bf16.msra.mxu0 %v857
        %906 = vmatprep.subr.bf16.mxu0 %v861
        %907 = vmatpush1.bf16.msra.mxu0 %v860
        %908 = vmatprep.subr.bf16.mxu0 %v864
        %909 = vmatpush1.bf16.msra.mxu0 %v863
        %910 = vmatprep.subr.bf16.mxu0 %v867
        %911 = vmatpush1.bf16.msra.mxu0 %v866
        %912 = vmatprep.subr.bf16.mxu0 %v870
        %913 = vmatpush1.bf16.msra.mxu0 %v869
        %914 = vmatprep.subr.bf16.mxu0 %v873
        %915 = vmatpush1.bf16.msra.mxu0 %v872
        %916 = vmatprep.subr.bf16.mxu0 %v876
        %917 = vmatpush1.bf16.msra.mxu0 %v875
        %918 = vmatprep.subr.bf16.mxu0 0
        %919 = vmatpush1.bf16.msra.mxu0 0
        %920 = vmatprep.subr.bf16.mxu0 0
        %921 = vmatpush1.bf16.msra.mxu0 0
        %922 = vmatprep.subr.bf16.mxu0 0
        %923 = vmatpush1.bf16.msra.mxu0 0
        %924 = vmatprep.subr.bf16.mxu0 0
        %925 = vmatpush1.bf16.msra.mxu0 0
        %926 = vmatprep.subr.bf16.mxu0 0
        %927 = vmatpush1.bf16.msra.mxu0 0
        %928 = vmatprep.subr.bf16.mxu0 0
        %929 = vmatpush1.bf16.msra.mxu0 0
        %930 = vmatprep.subr.bf16.mxu0 0
        %931 = vmatpush1.bf16.msra.mxu0 0
        %932 = vmatprep.subr.bf16.mxu0 0
        %933 = vmatpush1.bf16.msra.mxu0 0
        %934 = vmatprep.mubr.bf16.mxu0 0
        %935 = vmatmul.mubr.bf16.gmra.mrb[0].mxu0 %v724
        %v936 = vpop.f32.mrb[0].mxu0
        %v937 = vadd.f32 %v762, %v936
        %v938 = vpop.f32.mrb[0].mxu0
        %v939 = vadd.f32 %v766, %v938
        %v940 = vpop.f32.mrb[0].mxu0
        %v941 = vpop.f32.mrb[0].mxu0
        %942 = vdwg.mxu0
        %943 = vmatprep.subr.bf16.mxu0 0
        %944 = vmatpush1.bf16.msra.mxu0 %v856
        %945 = vmatprep.subr.bf16.mxu0 0
        %946 = vmatpush1.bf16.msra.mxu0 %v859
        %947 = vmatprep.subr.bf16.mxu0 0
        %948 = vmatpush1.bf16.msra.mxu0 %v862
        %949 = vmatprep.subr.bf16.mxu0 0
        %950 = vmatpush1.bf16.msra.mxu0 %v865
        %951 = vmatprep.subr.bf16.mxu0 0
        %952 = vmatpush1.bf16.msra.mxu0 %v868
        %953 = vmatprep.subr.bf16.mxu0 0
        %954 = vmatpush1.bf16.msra.mxu0 %v871
        %955 = vmatprep.subr.bf16.mxu0 0
        %956 = vmatpush1.bf16.msra.mxu0 %v874
        %957 = vmatprep.subr.bf16.mxu0 0
        %958 = vmatpush1.bf16.msra.mxu0 %v877
        %959 = vmatprep.subr.bf16.mxu0 0
        %960 = vmatpush1.bf16.msra.mxu0 0
        %961 = vmatprep.subr.bf16.mxu0 0
        %962 = vmatpush1.bf16.msra.mxu0 0
        %963 = vmatprep.subr.bf16.mxu0 0
        %964 = vmatpush1.bf16.msra.mxu0 0
        %965 = vmatprep.subr.bf16.mxu0 0
        %966 = vmatpush1.bf16.msra.mxu0 0
        %967 = vmatprep.subr.bf16.mxu0 0
        %968 = vmatpush1.bf16.msra.mxu0 0
        %969 = vmatprep.subr.bf16.mxu0 0
        %970 = vmatpush1.bf16.msra.mxu0 0
        %971 = vmatprep.subr.bf16.mxu0 0
        %972 = vmatpush1.bf16.msra.mxu0 0
        %973 = vmatprep.subr.bf16.mxu0 0
        %974 = vmatpush1.bf16.msra.mxu0 0
        %975 = vmatprep.mubr.bf16.mxu0 0
        %976 = vmatmul.mubr.bf16.gmra.mrb[0].mxu0 %v724
        %v977 = vpop.f32.mrb[0].mxu0
        %v978 = vadd.f32 %v770, %v977
        %v979 = vpop.f32.mrb[0].mxu0
        %v980 = vpop.f32.mrb[0].mxu0
        %v981 = vpop.f32.mrb[0].mxu0
        %982 = vdwg.mxu0
        %984 = vrot.lane.b32.xlu0 %v937, 96
        %v985 = vpop.permute.xlu0 %984
        %986 = vrot.lane.b32.xlu0 %v937, 64
        %v987 = vpop.permute.xlu0 %986
        %988 = vrot.lane.b32.xlu0 %v937, 32
        %v989 = vpop.permute.xlu0 %988
        %991 = vrot.lane.b32.xlu0 %v939, 96
        %v992 = vpop.permute.xlu0 %991
        %993 = vrot.lane.b32.xlu0 %v939, 64
        %v994 = vpop.permute.xlu0 %993
        %995 = vrot.lane.b32.xlu0 %v939, 32
        %v996 = vpop.permute.xlu0 %995
        %998 = vrot.lane.b32.xlu0 %v978, 96
        %v999 = vpop.permute.xlu0 %998
        %1001 = vrot.lane.b32.xlu0 %v978, 64
        %v1002 = vpop.permute.xlu0 %1001
        %1004 = vrot.lane.b32.xlu0 %v978, 32
        %v1005 = vpop.permute.xlu0 %1004
        %vm1007 = vcmask 261120
        %v1008 = vsel %vm1007, %v937, 0
        %v1010 = vsel %vm1007, %v939, 0
        %1012 = vmatprep.subr.mxu0 0.0
        %1013 = vmatpush1.xpose.msra.mxu0 %v1010
        %1014 = vmatprep.subr.mxu0 0.0
        %1015 = vmatpush1.xpose.msra.mxu0 0.0
        %1016 = vmatprep.subr.mxu0 0.0
        %1017 = vmatpush1.xpose.msra.mxu0 0.0
        %1018 = vmatprep.subr.mxu0 0.0
        %1019 = vmatpush1.xpose.msra.mxu0 0.0
        %1020 = vmatprep.subr.mxu0 0.0
        %1021 = vmatpush1.xpose.msra.mxu0 0.0
        %1022 = vmatprep.subr.mxu0 0.0
        %1023 = vmatpush1.xpose.msra.mxu0 0.0
        %1024 = vmatprep.subr.mxu0 0.0
        %1025 = vmatpush1.xpose.msra.mxu0 0.0
        %1026 = vmatprep.subr.mxu0 0.0
        %1027 = vmatpush1.xpose.msra.mxu0 0.0
        %1028 = vmatprep.subr.mxu0 0.0
        %1029 = vmatpush1.xpose.msra.mxu0 0.0
        %1030 = vmatprep.subr.mxu0 0.0
        %1031 = vmatpush1.xpose.msra.mxu0 0.0
        %1032 = vmatprep.subr.mxu0 0.0
        %1033 = vmatpush1.xpose.msra.mxu0 0.0
        %1034 = vmatprep.subr.mxu0 0.0
        %1035 = vmatpush1.xpose.msra.mxu0 0.0
        %1036 = vmatprep.subr.mxu0 0.0
        %1037 = vmatpush1.xpose.msra.mxu0 0.0
        %1038 = vmatprep.subr.mxu0 0.0
        %1039 = vmatpush1.xpose.msra.mxu0 0.0
        %1040 = vmatprep.subr.mxu0 0.0
        %1041 = vmatpush1.xpose.msra.mxu0 0.0
        %1042 = vmatprep.subr.mxu0 0.0
        %1043 = vmatpush1.xpose.msra.mxu0 0.0
        %1044 = vmatprep.subr.mxu0 0.0
        %1045 = vmatpush1.xpose.msra.mxu0 0.0
        %1046 = vmatprep.subr.mxu0 0.0
        %1047 = vmatpush1.xpose.msra.mxu0 0.0
        %1048 = vmatprep.subr.mxu0 0.0
        %1049 = vmatpush1.xpose.msra.mxu0 0.0
        %1050 = vmatprep.subr.mxu0 0.0
        %1051 = vmatpush1.xpose.msra.mxu0 0.0
        %1052 = vmatprep.subr.mxu0 0.0
        %1053 = vmatpush1.xpose.msra.mxu0 0.0
        %1054 = vmatprep.subr.mxu0 0.0
        %1055 = vmatpush1.xpose.msra.mxu0 0.0
        %1056 = vmatprep.subr.mxu0 0.0
        %1057 = vmatpush1.xpose.msra.mxu0 0.0
        %1058 = vmatprep.subr.mxu0 0.0
        %1059 = vmatpush1.xpose.msra.mxu0 0.0
        %1060 = vmatprep.subr.mxu0 0.0
        %1061 = vmatpush1.xpose.msra.mxu0 0.0
        %1062 = vmatprep.subr.mxu0 0.0
        %1063 = vmatpush1.xpose.msra.mxu0 0.0
        %1064 = vmatprep.subr.mxu0 0.0
        %1065 = vmatpush1.xpose.msra.mxu0 0.0
        %1066 = vmatprep.subr.mxu0 0.0
        %1067 = vmatpush1.xpose.msra.mxu0 0.0
        %1068 = vmatprep.subr.mxu0 0.0
        %1069 = vmatpush1.xpose.msra.mxu0 0.0
        %1070 = vmatprep.subr.mxu0 0.0
        %1071 = vmatpush1.xpose.msra.mxu0 0.0
        %1072 = vmatprep.subr.mxu0 0.0
        %1073 = vmatpush1.xpose.msra.mxu0 0.0
        %1074 = vmatprep.subr.mxu0 0.0
        %1075 = vmatpush1.xpose.msra.mxu0 0.0
        %1076 = vmatprep.mubr.f32.mxu0 0.0
        %1077 = vmatmul.mubr.f32.gmra.mrb[0].mxu0 %v1008
        %v1078 = vpop.f32.mrb[0].mxu0
        %v1079 = vadd.f32 %v720, %v1078
        %v1080 = vpop.f32.mrb[0].mxu0
        %1081 = vdwg.mxu0
        %v1082 = vsel %vm1007, %v985, 0
        %v1084 = vsel %vm1007, %v992, 0
        %1086 = vmatprep.subr.mxu0 0.0
        %1087 = vmatpush1.xpose.msra.mxu0 %v1084
        %1088 = vmatprep.subr.mxu0 0.0
        %1089 = vmatpush1.xpose.msra.mxu0 0.0
        %1090 = vmatprep.subr.mxu0 0.0
        %1091 = vmatpush1.xpose.msra.mxu0 0.0
        %1092 = vmatprep.subr.mxu0 0.0
        %1093 = vmatpush1.xpose.msra.mxu0 0.0
        %1094 = vmatprep.subr.mxu0 0.0
        %1095 = vmatpush1.xpose.msra.mxu0 0.0
        %1096 = vmatprep.subr.mxu0 0.0
        %1097 = vmatpush1.xpose.msra.mxu0 0.0
        %1098 = vmatprep.subr.mxu0 0.0
        %1099 = vmatpush1.xpose.msra.mxu0 0.0
        %1100 = vmatprep.subr.mxu0 0.0
        %1101 = vmatpush1.xpose.msra.mxu0 0.0
        %1102 = vmatprep.subr.mxu0 0.0
        %1103 = vmatpush1.xpose.msra.mxu0 0.0
        %1104 = vmatprep.subr.mxu0 0.0
        %1105 = vmatpush1.xpose.msra.mxu0 0.0
        %1106 = vmatprep.subr.mxu0 0.0
        %1107 = vmatpush1.xpose.msra.mxu0 0.0
        %1108 = vmatprep.subr.mxu0 0.0
        %1109 = vmatpush1.xpose.msra.mxu0 0.0
        %1110 = vmatprep.subr.mxu0 0.0
        %1111 = vmatpush1.xpose.msra.mxu0 0.0
        %1112 = vmatprep.subr.mxu0 0.0
        %1113 = vmatpush1.xpose.msra.mxu0 0.0
        %1114 = vmatprep.subr.mxu0 0.0
        %1115 = vmatpush1.xpose.msra.mxu0 0.0
        %1116 = vmatprep.subr.mxu0 0.0
        %1117 = vmatpush1.xpose.msra.mxu0 0.0
        %1118 = vmatprep.subr.mxu0 0.0
        %1119 = vmatpush1.xpose.msra.mxu0 0.0
        %1120 = vmatprep.subr.mxu0 0.0
        %1121 = vmatpush1.xpose.msra.mxu0 0.0
        %1122 = vmatprep.subr.mxu0 0.0
        %1123 = vmatpush1.xpose.msra.mxu0 0.0
        %1124 = vmatprep.subr.mxu0 0.0
        %1125 = vmatpush1.xpose.msra.mxu0 0.0
        %1126 = vmatprep.subr.mxu0 0.0
        %1127 = vmatpush1.xpose.msra.mxu0 0.0
        %1128 = vmatprep.subr.mxu0 0.0
        %1129 = vmatpush1.xpose.msra.mxu0 0.0
        %1130 = vmatprep.subr.mxu0 0.0
        %1131 = vmatpush1.xpose.msra.mxu0 0.0
        %1132 = vmatprep.subr.mxu0 0.0
        %1133 = vmatpush1.xpose.msra.mxu0 0.0
        %1134 = vmatprep.subr.mxu0 0.0
        %1135 = vmatpush1.xpose.msra.mxu0 0.0
        %1136 = vmatprep.subr.mxu0 0.0
        %1137 = vmatpush1.xpose.msra.mxu0 0.0
        %1138 = vmatprep.subr.mxu0 0.0
        %1139 = vmatpush1.xpose.msra.mxu0 0.0
        %1140 = vmatprep.subr.mxu0 0.0
        %1141 = vmatpush1.xpose.msra.mxu0 0.0
        %1142 = vmatprep.subr.mxu0 0.0
        %1143 = vmatpush1.xpose.msra.mxu0 0.0
        %1144 = vmatprep.subr.mxu0 0.0
        %1145 = vmatpush1.xpose.msra.mxu0 0.0
        %1146 = vmatprep.subr.mxu0 0.0
        %1147 = vmatpush1.xpose.msra.mxu0 0.0
        %1148 = vmatprep.subr.mxu0 0.0
        %1149 = vmatpush1.xpose.msra.mxu0 0.0
        %1150 = vmatprep.mubr.f32.mxu0 0.0
        %1151 = vmatmul.mubr.f32.gmra.mrb[0].mxu0 %v1082
        %v1152 = vpop.f32.mrb[0].mxu0
        %v1153 = vadd.f32 %v721, %v1152
        %v1154 = vpop.f32.mrb[0].mxu0
        %1155 = vdwg.mxu0
        %v1156 = vsel %vm1007, %v987, 0
        %v1158 = vsel %vm1007, %v994, 0
        %1160 = vmatprep.subr.mxu0 0.0
        %1161 = vmatpush1.xpose.msra.mxu0 %v1158
        %1162 = vmatprep.subr.mxu0 0.0
        %1163 = vmatpush1.xpose.msra.mxu0 0.0
        %1164 = vmatprep.subr.mxu0 0.0
        %1165 = vmatpush1.xpose.msra.mxu0 0.0
        %1166 = vmatprep.subr.mxu0 0.0
        %1167 = vmatpush1.xpose.msra.mxu0 0.0
        %1168 = vmatprep.subr.mxu0 0.0
        %1169 = vmatpush1.xpose.msra.mxu0 0.0
        %1170 = vmatprep.subr.mxu0 0.0
        %1171 = vmatpush1.xpose.msra.mxu0 0.0
        %1172 = vmatprep.subr.mxu0 0.0
        %1173 = vmatpush1.xpose.msra.mxu0 0.0
        %1174 = vmatprep.subr.mxu0 0.0
        %1175 = vmatpush1.xpose.msra.mxu0 0.0
        %1176 = vmatprep.subr.mxu0 0.0
        %1177 = vmatpush1.xpose.msra.mxu0 0.0
        %1178 = vmatprep.subr.mxu0 0.0
        %1179 = vmatpush1.xpose.msra.mxu0 0.0
        %1180 = vmatprep.subr.mxu0 0.0
        %1181 = vmatpush1.xpose.msra.mxu0 0.0
        %1182 = vmatprep.subr.mxu0 0.0
        %1183 = vmatpush1.xpose.msra.mxu0 0.0
        %1184 = vmatprep.subr.mxu0 0.0
        %1185 = vmatpush1.xpose.msra.mxu0 0.0
        %1186 = vmatprep.subr.mxu0 0.0
        %1187 = vmatpush1.xpose.msra.mxu0 0.0
        %1188 = vmatprep.subr.mxu0 0.0
        %1189 = vmatpush1.xpose.msra.mxu0 0.0
        %1190 = vmatprep.subr.mxu0 0.0
        %1191 = vmatpush1.xpose.msra.mxu0 0.0
        %1192 = vmatprep.subr.mxu0 0.0
        %1193 = vmatpush1.xpose.msra.mxu0 0.0
        %1194 = vmatprep.subr.mxu0 0.0
        %1195 = vmatpush1.xpose.msra.mxu0 0.0
        %1196 = vmatprep.subr.mxu0 0.0
        %1197 = vmatpush1.xpose.msra.mxu0 0.0
        %1198 = vmatprep.subr.mxu0 0.0
        %1199 = vmatpush1.xpose.msra.mxu0 0.0
        %1200 = vmatprep.subr.mxu0 0.0
        %1201 = vmatpush1.xpose.msra.mxu0 0.0
        %1202 = vmatprep.subr.mxu0 0.0
        %1203 = vmatpush1.xpose.msra.mxu0 0.0
        %1204 = vmatprep.subr.mxu0 0.0
        %1205 = vmatpush1.xpose.msra.mxu0 0.0
        %1206 = vmatprep.subr.mxu0 0.0
        %1207 = vmatpush1.xpose.msra.mxu0 0.0
        %1208 = vmatprep.subr.mxu0 0.0
        %1209 = vmatpush1.xpose.msra.mxu0 0.0
        %1210 = vmatprep.subr.mxu0 0.0
        %1211 = vmatpush1.xpose.msra.mxu0 0.0
        %1212 = vmatprep.subr.mxu0 0.0
        %1213 = vmatpush1.xpose.msra.mxu0 0.0
        %1214 = vmatprep.subr.mxu0 0.0
        %1215 = vmatpush1.xpose.msra.mxu0 0.0
        %1216 = vmatprep.subr.mxu0 0.0
        %1217 = vmatpush1.xpose.msra.mxu0 0.0
        %1218 = vmatprep.subr.mxu0 0.0
        %1219 = vmatpush1.xpose.msra.mxu0 0.0
        %1220 = vmatprep.subr.mxu0 0.0
        %1221 = vmatpush1.xpose.msra.mxu0 0.0
        %1222 = vmatprep.subr.mxu0 0.0
        %1223 = vmatpush1.xpose.msra.mxu0 0.0
        %1224 = vmatprep.mubr.f32.mxu0 0.0
        %1225 = vmatmul.mubr.f32.gmra.mrb[0].mxu0 %v1156
        %v1226 = vpop.f32.mrb[0].mxu0
        %v1227 = vadd.f32 %v722, %v1226
        %v1228 = vpop.f32.mrb[0].mxu0
        %1229 = vdwg.mxu0
        %v1230 = vsel %vm1007, %v989, 0
        %v1232 = vsel %vm1007, %v996, 0
        %1234 = vmatprep.subr.mxu0 0.0
        %1235 = vmatpush1.xpose.msra.mxu0 %v1232
        %1236 = vmatprep.subr.mxu0 0.0
        %1237 = vmatpush1.xpose.msra.mxu0 0.0
        %1238 = vmatprep.subr.mxu0 0.0
        %1239 = vmatpush1.xpose.msra.mxu0 0.0
        %1240 = vmatprep.subr.mxu0 0.0
        %1241 = vmatpush1.xpose.msra.mxu0 0.0
        %1242 = vmatprep.subr.mxu0 0.0
        %1243 = vmatpush1.xpose.msra.mxu0 0.0
        %1244 = vmatprep.subr.mxu0 0.0
        %1245 = vmatpush1.xpose.msra.mxu0 0.0
        %1246 = vmatprep.subr.mxu0 0.0
        %1247 = vmatpush1.xpose.msra.mxu0 0.0
        %1248 = vmatprep.subr.mxu0 0.0
        %1249 = vmatpush1.xpose.msra.mxu0 0.0
        %1250 = vmatprep.subr.mxu0 0.0
        %1251 = vmatpush1.xpose.msra.mxu0 0.0
        %1252 = vmatprep.subr.mxu0 0.0
        %1253 = vmatpush1.xpose.msra.mxu0 0.0
        %1254 = vmatprep.subr.mxu0 0.0
        %1255 = vmatpush1.xpose.msra.mxu0 0.0
        %1256 = vmatprep.subr.mxu0 0.0
        %1257 = vmatpush1.xpose.msra.mxu0 0.0
        %1258 = vmatprep.subr.mxu0 0.0
        %1259 = vmatpush1.xpose.msra.mxu0 0.0
        %1260 = vmatprep.subr.mxu0 0.0
        %1261 = vmatpush1.xpose.msra.mxu0 0.0
        %1262 = vmatprep.subr.mxu0 0.0
        %1263 = vmatpush1.xpose.msra.mxu0 0.0
        %1264 = vmatprep.subr.mxu0 0.0
        %1265 = vmatpush1.xpose.msra.mxu0 0.0
        %1266 = vmatprep.subr.mxu0 0.0
        %1267 = vmatpush1.xpose.msra.mxu0 0.0
        %1268 = vmatprep.subr.mxu0 0.0
        %1269 = vmatpush1.xpose.msra.mxu0 0.0
        %1270 = vmatprep.subr.mxu0 0.0
        %1271 = vmatpush1.xpose.msra.mxu0 0.0
        %1272 = vmatprep.subr.mxu0 0.0
        %1273 = vmatpush1.xpose.msra.mxu0 0.0
        %1274 = vmatprep.subr.mxu0 0.0
        %1275 = vmatpush1.xpose.msra.mxu0 0.0
        %1276 = vmatprep.subr.mxu0 0.0
        %1277 = vmatpush1.xpose.msra.mxu0 0.0
        %1278 = vmatprep.subr.mxu0 0.0
        %1279 = vmatpush1.xpose.msra.mxu0 0.0
        %1280 = vmatprep.subr.mxu0 0.0
        %1281 = vmatpush1.xpose.msra.mxu0 0.0
        %1282 = vmatprep.subr.mxu0 0.0
        %1283 = vmatpush1.xpose.msra.mxu0 0.0
        %1284 = vmatprep.subr.mxu0 0.0
        %1285 = vmatpush1.xpose.msra.mxu0 0.0
        %1286 = vmatprep.subr.mxu0 0.0
        %1287 = vmatpush1.xpose.msra.mxu0 0.0
        %1288 = vmatprep.subr.mxu0 0.0
        %1289 = vmatpush1.xpose.msra.mxu0 0.0
        %1290 = vmatprep.subr.mxu0 0.0
        %1291 = vmatpush1.xpose.msra.mxu0 0.0
        %1292 = vmatprep.subr.mxu0 0.0
        %1293 = vmatpush1.xpose.msra.mxu0 0.0
        %1294 = vmatprep.subr.mxu0 0.0
        %1295 = vmatpush1.xpose.msra.mxu0 0.0
        %1296 = vmatprep.subr.mxu0 0.0
        %1297 = vmatpush1.xpose.msra.mxu0 0.0
        %1298 = vmatprep.mubr.f32.mxu0 0.0
        %1299 = vmatmul.mubr.f32.gmra.mrb[0].mxu0 %v1230
        %v1300 = vpop.f32.mrb[0].mxu0
        %v1301 = vadd.f32 %v723, %v1300
        %v1302 = vpop.f32.mrb[0].mxu0
        %1303 = vdwg.mxu0
        %vm1304 = vcmask 64512
        %v1305 = vsel %vm1304, %v1079, -inf
        %1306 = vmax.xlane.f32.xlu0 %v1305
        %v1307 = vpop.xlane.xlu0 %1306
        %v1308 = vsel %vm1304, %v1153, -inf
        %1309 = vmax.xlane.f32.xlu0 %v1308
        %v1310 = vpop.xlane.xlu0 %1309
        %v1311 = vsel %vm1304, %v1227, -inf
        %1312 = vmax.xlane.f32.xlu0 %v1311
        %v1313 = vpop.xlane.xlu0 %1312
        %v1314 = vsel %vm1304, %v1301, -inf
        %1315 = vmax.xlane.f32.xlu0 %v1314
        %v1316 = vpop.xlane.xlu0 %1315
        %v1317 = vsub.f32 %v1079, %v1307
        %v1318 = vsub.f32 %v1153, %v1310
        %v1319 = vsub.f32 %v1227, %v1313
        %v1320 = vsub.f32 %v1301, %v1316
        %v1321 = vmul.f32 %v1317, 1.442695
        %v1322 = vpow.pop %v1321
        %v1323 = vmul.f32 %v1318, 1.442695
        %v1324 = vpow.pop %v1323
        %v1325 = vmul.f32 %v1319, 1.442695
        %v1326 = vpow.pop %v1325
        %v1327 = vmul.f32 %v1320, 1.442695
        %v1328 = vpow.pop %v1327
        %v1329 = vsel %vm1304, %v1322, 0.0
        %1330 = vadd.xlane.f32.xlu0 %v1329
        %v1331 = vpop.xlane.xlu0 %1330
        %v1332 = vsel %vm1304, %v1324, 0.0
        %1333 = vadd.xlane.f32.xlu0 %v1332
        %v1334 = vpop.xlane.xlu0 %1333
        %v1335 = vsel %vm1304, %v1326, 0.0
        %1336 = vadd.xlane.f32.xlu0 %v1335
        %v1337 = vpop.xlane.xlu0 %1336
        %v1338 = vsel %vm1304, %v1328, 0.0
        %1339 = vadd.xlane.f32.xlu0 %v1338
        %v1340 = vpop.xlane.xlu0 %1339
        %v1341 = vrcp.pop %v1331
        %v1342 = vrcp.pop %v1334
        %v1343 = vrcp.pop %v1337
        %v1344 = vrcp.pop %v1340
        %v1345 = vmul.f32 %v1322, %v1341
        %v1346 = vmul.f32 %v1324, %v1342
        %v1347 = vmul.f32 %v1326, %v1343
        %v1348 = vmul.f32 %v1328, %v1344
        %v1350 = vsel %vm1304, %v1345, 0
        %1352 = vmatprep.subr.mxu0 0.0
        %1353 = vmatpush1.msra.mxu0 %v978
        %1354 = vmatprep.subr.mxu0 0.0
        %1355 = vmatpush1.msra.mxu0 0.0
        %1356 = vmatprep.subr.mxu0 0.0
        %1357 = vmatpush1.msra.mxu0 0.0
        %1358 = vmatprep.subr.mxu0 0.0
        %1359 = vmatpush1.msra.mxu0 0.0
        %1360 = vmatprep.subr.mxu0 0.0
        %1361 = vmatpush1.msra.mxu0 0.0
        %1362 = vmatprep.subr.mxu0 0.0
        %1363 = vmatpush1.msra.mxu0 0.0
        %1364 = vmatprep.subr.mxu0 0.0
        %1365 = vmatpush1.msra.mxu0 0.0
        %1366 = vmatprep.subr.mxu0 0.0
        %1367 = vmatpush1.msra.mxu0 0.0
        %1368 = vmatprep.subr.mxu0 0.0
        %1369 = vmatpush1.msra.mxu0 0.0
        %1370 = vmatprep.subr.mxu0 0.0
        %1371 = vmatpush1.msra.mxu0 0.0
        %1372 = vmatprep.subr.mxu0 0.0
        %1373 = vmatpush1.msra.mxu0 0.0
        %1374 = vmatprep.subr.mxu0 0.0
        %1375 = vmatpush1.msra.mxu0 0.0
        %1376 = vmatprep.subr.mxu0 0.0
        %1377 = vmatpush1.msra.mxu0 0.0
        %1378 = vmatprep.subr.mxu0 0.0
        %1379 = vmatpush1.msra.mxu0 0.0
        %1380 = vmatprep.subr.mxu0 0.0
        %1381 = vmatpush1.msra.mxu0 0.0
        %1382 = vmatprep.subr.mxu0 0.0
        %1383 = vmatpush1.msra.mxu0 0.0
        %1384 = vmatprep.subr.mxu0 0.0
        %1385 = vmatpush1.msra.mxu0 0.0
        %1386 = vmatprep.subr.mxu0 0.0
        %1387 = vmatpush1.msra.mxu0 0.0
        %1388 = vmatprep.subr.mxu0 0.0
        %1389 = vmatpush1.msra.mxu0 0.0
        %1390 = vmatprep.subr.mxu0 0.0
        %1391 = vmatpush1.msra.mxu0 0.0
        %1392 = vmatprep.subr.mxu0 0.0
        %1393 = vmatpush1.msra.mxu0 0.0
        %1394 = vmatprep.subr.mxu0 0.0
        %1395 = vmatpush1.msra.mxu0 0.0
        %1396 = vmatprep.subr.mxu0 0.0
        %1397 = vmatpush1.msra.mxu0 0.0
        %1398 = vmatprep.subr.mxu0 0.0
        %1399 = vmatpush1.msra.mxu0 0.0
        %1400 = vmatprep.subr.mxu0 0.0
        %1401 = vmatpush1.msra.mxu0 0.0
        %1402 = vmatprep.subr.mxu0 0.0
        %1403 = vmatpush1.msra.mxu0 0.0
        %1404 = vmatprep.subr.mxu0 0.0
        %1405 = vmatpush1.msra.mxu0 0.0
        %1406 = vmatprep.subr.mxu0 0.0
        %1407 = vmatpush1.msra.mxu0 0.0
        %1408 = vmatprep.subr.mxu0 0.0
        %1409 = vmatpush1.msra.mxu0 0.0
        %1410 = vmatprep.subr.mxu0 0.0
        %1411 = vmatpush1.msra.mxu0 0.0
        %1412 = vmatprep.subr.mxu0 0.0
        %1413 = vmatpush1.msra.mxu0 0.0
        %1414 = vmatprep.subr.mxu0 0.0
        %1415 = vmatpush1.msra.mxu0 0.0
        %1416 = vmatprep.mubr.f32.mxu0 0.0
        %1417 = vmatmul.mubr.f32.gmra.mrb[0].mxu0 %v1350
        %v1418 = vpop.f32.mrb[0].mxu0
        %v1419 = vadd.f32 0.0, %v1418
        %v1420 = vpop.f32.mrb[0].mxu0
        %1421 = vdwg.mxu0
        %v1423 = vsel %vm1304, %v1346, 0
        %1425 = vmatprep.subr.mxu0 0.0
        %1426 = vmatpush1.msra.mxu0 %v999
        %1427 = vmatprep.subr.mxu0 0.0
        %1428 = vmatpush1.msra.mxu0 0.0
        %1429 = vmatprep.subr.mxu0 0.0
        %1430 = vmatpush1.msra.mxu0 0.0
        %1431 = vmatprep.subr.mxu0 0.0
        %1432 = vmatpush1.msra.mxu0 0.0
        %1433 = vmatprep.subr.mxu0 0.0
        %1434 = vmatpush1.msra.mxu0 0.0
        %1435 = vmatprep.subr.mxu0 0.0
        %1436 = vmatpush1.msra.mxu0 0.0
        %1437 = vmatprep.subr.mxu0 0.0
        %1438 = vmatpush1.msra.mxu0 0.0
        %1439 = vmatprep.subr.mxu0 0.0
        %1440 = vmatpush1.msra.mxu0 0.0
        %1441 = vmatprep.subr.mxu0 0.0
        %1442 = vmatpush1.msra.mxu0 0.0
        %1443 = vmatprep.subr.mxu0 0.0
        %1444 = vmatpush1.msra.mxu0 0.0
        %1445 = vmatprep.subr.mxu0 0.0
        %1446 = vmatpush1.msra.mxu0 0.0
        %1447 = vmatprep.subr.mxu0 0.0
        %1448 = vmatpush1.msra.mxu0 0.0
        %1449 = vmatprep.subr.mxu0 0.0
        %1450 = vmatpush1.msra.mxu0 0.0
        %1451 = vmatprep.subr.mxu0 0.0
        %1452 = vmatpush1.msra.mxu0 0.0
        %1453 = vmatprep.subr.mxu0 0.0
        %1454 = vmatpush1.msra.mxu0 0.0
        %1455 = vmatprep.subr.mxu0 0.0
        %1456 = vmatpush1.msra.mxu0 0.0
        %1457 = vmatprep.subr.mxu0 0.0
        %1458 = vmatpush1.msra.mxu0 0.0
        %1459 = vmatprep.subr.mxu0 0.0
        %1460 = vmatpush1.msra.mxu0 0.0
        %1461 = vmatprep.subr.mxu0 0.0
        %1462 = vmatpush1.msra.mxu0 0.0
        %1463 = vmatprep.subr.mxu0 0.0
        %1464 = vmatpush1.msra.mxu0 0.0
        %1465 = vmatprep.subr.mxu0 0.0
        %1466 = vmatpush1.msra.mxu0 0.0
        %1467 = vmatprep.subr.mxu0 0.0
        %1468 = vmatpush1.msra.mxu0 0.0
        %1469 = vmatprep.subr.mxu0 0.0
        %1470 = vmatpush1.msra.mxu0 0.0
        %1471 = vmatprep.subr.mxu0 0.0
        %1472 = vmatpush1.msra.mxu0 0.0
        %1473 = vmatprep.subr.mxu0 0.0
        %1474 = vmatpush1.msra.mxu0 0.0
        %1475 = vmatprep.subr.mxu0 0.0
        %1476 = vmatpush1.msra.mxu0 0.0
        %1477 = vmatprep.subr.mxu0 0.0
        %1478 = vmatpush1.msra.mxu0 0.0
        %1479 = vmatprep.subr.mxu0 0.0
        %1480 = vmatpush1.msra.mxu0 0.0
        %1481 = vmatprep.subr.mxu0 0.0
        %1482 = vmatpush1.msra.mxu0 0.0
        %1483 = vmatprep.subr.mxu0 0.0
        %1484 = vmatpush1.msra.mxu0 0.0
        %1485 = vmatprep.subr.mxu0 0.0
        %1486 = vmatpush1.msra.mxu0 0.0
        %1487 = vmatprep.subr.mxu0 0.0
        %1488 = vmatpush1.msra.mxu0 0.0
        %1489 = vmatprep.mubr.f32.mxu0 0.0
        %1490 = vmatmul.mubr.f32.gmra.mrb[0].mxu0 %v1423
        %v1491 = vpop.f32.mrb[0].mxu0
        %v1492 = vadd.f32 0.0, %v1491
        %v1493 = vpop.f32.mrb[0].mxu0
        %1494 = vdwg.mxu0
        %v1496 = vsel %vm1304, %v1347, 0
        %1498 = vmatprep.subr.mxu0 0.0
        %1499 = vmatpush1.msra.mxu0 %v1002
        %1500 = vmatprep.subr.mxu0 0.0
        %1501 = vmatpush1.msra.mxu0 0.0
        %1502 = vmatprep.subr.mxu0 0.0
        %1503 = vmatpush1.msra.mxu0 0.0
        %1504 = vmatprep.subr.mxu0 0.0
        %1505 = vmatpush1.msra.mxu0 0.0
        %1506 = vmatprep.subr.mxu0 0.0
        %1507 = vmatpush1.msra.mxu0 0.0
        %1508 = vmatprep.subr.mxu0 0.0
        %1509 = vmatpush1.msra.mxu0 0.0
        %1510 = vmatprep.subr.mxu0 0.0
        %1511 = vmatpush1.msra.mxu0 0.0
        %1512 = vmatprep.subr.mxu0 0.0
        %1513 = vmatpush1.msra.mxu0 0.0
        %1514 = vmatprep.subr.mxu0 0.0
        %1515 = vmatpush1.msra.mxu0 0.0
        %1516 = vmatprep.subr.mxu0 0.0
        %1517 = vmatpush1.msra.mxu0 0.0
        %1518 = vmatprep.subr.mxu0 0.0
        %1519 = vmatpush1.msra.mxu0 0.0
        %1520 = vmatprep.subr.mxu0 0.0
        %1521 = vmatpush1.msra.mxu0 0.0
        %1522 = vmatprep.subr.mxu0 0.0
        %1523 = vmatpush1.msra.mxu0 0.0
        %1524 = vmatprep.subr.mxu0 0.0
        %1525 = vmatpush1.msra.mxu0 0.0
        %1526 = vmatprep.subr.mxu0 0.0
        %1527 = vmatpush1.msra.mxu0 0.0
        %1528 = vmatprep.subr.mxu0 0.0
        %1529 = vmatpush1.msra.mxu0 0.0
        %1530 = vmatprep.subr.mxu0 0.0
        %1531 = vmatpush1.msra.mxu0 0.0
        %1532 = vmatprep.subr.mxu0 0.0
        %1533 = vmatpush1.msra.mxu0 0.0
        %1534 = vmatprep.subr.mxu0 0.0
        %1535 = vmatpush1.msra.mxu0 0.0
        %1536 = vmatprep.subr.mxu0 0.0
        %1537 = vmatpush1.msra.mxu0 0.0
        %1538 = vmatprep.subr.mxu0 0.0
        %1539 = vmatpush1.msra.mxu0 0.0
        %1540 = vmatprep.subr.mxu0 0.0
        %1541 = vmatpush1.msra.mxu0 0.0
        %1542 = vmatprep.subr.mxu0 0.0
        %1543 = vmatpush1.msra.mxu0 0.0
        %1544 = vmatprep.subr.mxu0 0.0
        %1545 = vmatpush1.msra.mxu0 0.0
        %1546 = vmatprep.subr.mxu0 0.0
        %1547 = vmatpush1.msra.mxu0 0.0
        %1548 = vmatprep.subr.mxu0 0.0
        %1549 = vmatpush1.msra.mxu0 0.0
        %1550 = vmatprep.subr.mxu0 0.0
        %1551 = vmatpush1.msra.mxu0 0.0
        %1552 = vmatprep.subr.mxu0 0.0
        %1553 = vmatpush1.msra.mxu0 0.0
        %1554 = vmatprep.subr.mxu0 0.0
        %1555 = vmatpush1.msra.mxu0 0.0
        %1556 = vmatprep.subr.mxu0 0.0
        %1557 = vmatpush1.msra.mxu0 0.0
        %1558 = vmatprep.subr.mxu0 0.0
        %1559 = vmatpush1.msra.mxu0 0.0
        %1560 = vmatprep.subr.mxu0 0.0
        %1561 = vmatpush1.msra.mxu0 0.0
        %1562 = vmatprep.mubr.f32.mxu0 0.0
        %1563 = vmatmul.mubr.f32.gmra.mrb[0].mxu0 %v1496
        %v1564 = vpop.f32.mrb[0].mxu0
        %v1565 = vadd.f32 0.0, %v1564
        %v1566 = vpop.f32.mrb[0].mxu0
        %1567 = vdwg.mxu0
        %v1569 = vsel %vm1304, %v1348, 0
        %1571 = vmatprep.subr.mxu0 0.0
        %1572 = vmatpush1.msra.mxu0 %v1005
        %1573 = vmatprep.subr.mxu0 0.0
        %1574 = vmatpush1.msra.mxu0 0.0
        %1575 = vmatprep.subr.mxu0 0.0
        %1576 = vmatpush1.msra.mxu0 0.0
        %1577 = vmatprep.subr.mxu0 0.0
        %1578 = vmatpush1.msra.mxu0 0.0
        %1579 = vmatprep.subr.mxu0 0.0
        %1580 = vmatpush1.msra.mxu0 0.0
        %1581 = vmatprep.subr.mxu0 0.0
        %1582 = vmatpush1.msra.mxu0 0.0
        %1583 = vmatprep.subr.mxu0 0.0
        %1584 = vmatpush1.msra.mxu0 0.0
        %1585 = vmatprep.subr.mxu0 0.0
        %1586 = vmatpush1.msra.mxu0 0.0
        %1587 = vmatprep.subr.mxu0 0.0
        %1588 = vmatpush1.msra.mxu0 0.0
        %1589 = vmatprep.subr.mxu0 0.0
        %1590 = vmatpush1.msra.mxu0 0.0
        %1591 = vmatprep.subr.mxu0 0.0
        %1592 = vmatpush1.msra.mxu0 0.0
        %1593 = vmatprep.subr.mxu0 0.0
        %1594 = vmatpush1.msra.mxu0 0.0
        %1595 = vmatprep.subr.mxu0 0.0
        %1596 = vmatpush1.msra.mxu0 0.0
        %1597 = vmatprep.subr.mxu0 0.0
        %1598 = vmatpush1.msra.mxu0 0.0
        %1599 = vmatprep.subr.mxu0 0.0
        %1600 = vmatpush1.msra.mxu0 0.0
        %1601 = vmatprep.subr.mxu0 0.0
        %1602 = vmatpush1.msra.mxu0 0.0
        %1603 = vmatprep.subr.mxu0 0.0
        %1604 = vmatpush1.msra.mxu0 0.0
        %1605 = vmatprep.subr.mxu0 0.0
        %1606 = vmatpush1.msra.mxu0 0.0
        %1607 = vmatprep.subr.mxu0 0.0
        %1608 = vmatpush1.msra.mxu0 0.0
        %1609 = vmatprep.subr.mxu0 0.0
        %1610 = vmatpush1.msra.mxu0 0.0
        %1611 = vmatprep.subr.mxu0 0.0
        %1612 = vmatpush1.msra.mxu0 0.0
        %1613 = vmatprep.subr.mxu0 0.0
        %1614 = vmatpush1.msra.mxu0 0.0
        %1615 = vmatprep.subr.mxu0 0.0
        %1616 = vmatpush1.msra.mxu0 0.0
        %1617 = vmatprep.subr.mxu0 0.0
        %1618 = vmatpush1.msra.mxu0 0.0
        %1619 = vmatprep.subr.mxu0 0.0
        %1620 = vmatpush1.msra.mxu0 0.0
        %1621 = vmatprep.subr.mxu0 0.0
        %1622 = vmatpush1.msra.mxu0 0.0
        %1623 = vmatprep.subr.mxu0 0.0
        %1624 = vmatpush1.msra.mxu0 0.0
        %1625 = vmatprep.subr.mxu0 0.0
        %1626 = vmatpush1.msra.mxu0 0.0
        %1627 = vmatprep.subr.mxu0 0.0
        %1628 = vmatpush1.msra.mxu0 0.0
        %1629 = vmatprep.subr.mxu0 0.0
        %1630 = vmatpush1.msra.mxu0 0.0
        %1631 = vmatprep.subr.mxu0 0.0
        %1632 = vmatpush1.msra.mxu0 0.0
        %1633 = vmatprep.subr.mxu0 0.0
        %1634 = vmatpush1.msra.mxu0 0.0
        %1635 = vmatprep.mubr.f32.mxu0 0.0
        %1636 = vmatmul.mubr.f32.gmra.mrb[0].mxu0 %v1569
        %v1637 = vpop.f32.mrb[0].mxu0
        %v1638 = vadd.f32 0.0, %v1637
        %v1639 = vpop.f32.mrb[0].mxu0
        %1640 = vdwg.mxu0
        %1642 = vrot.lane.b32.xlu0 %v1492, 32
        %v1643 = vpop.permute.xlu0 %1642
        %1646 = vrot.lane.b32.xlu0 %v1565, 64
        %v1647 = vpop.permute.xlu0 %1646
        %1650 = vrot.lane.b32.xlu0 %v1638, 96
        %v1651 = vpop.permute.xlu0 %1650
        %v1653 = vsel %vm1007, %v1419, %v1643
        %vm1654 = vcmask 523264
        %v1655 = vsel %vm1654, %v1653, %v1647
        %vm1656 = vcmask 785408
        %v1657 = vsel %vm1656, %v1655, %v1651
        %v1658 = vpack.c.bf16 %v1657, %v1657
        %v1659 = vld [vmem:[#allocation6] sm:$0xf]
        %v1660 = vld [vmem:[#allocation6 + $0x4] sm:$0xf]
        %v1661 = vld [vmem:[#allocation6 + $0x8] sm:$0xf]
        %v1662 = vld [vmem:[#allocation6 + $0xc] sm:$0xf]
        %v1663 = vld [vmem:[#allocation6 + $0x10] sm:$0xf]
        %v1664 = vld [vmem:[#allocation6 + $0x14] sm:$0xf]
        %v1665 = vld [vmem:[#allocation6 + $0x18] sm:$0xf]
        %v1666 = vld [vmem:[#allocation6 + $0x1c] sm:$0xf]
        %v1667 = vld [vmem:[#allocation6 + $0x20] sm:$0xf]
        %v1668 = vld [vmem:[#allocation6 + $0x24] sm:$0xf]
        %v1669 = vld [vmem:[#allocation6 + $0x28] sm:$0xf]
        %v1670 = vld [vmem:[#allocation6 + $0x2c] sm:$0xf]
        %v1671 = vld [vmem:[#allocation6 + $0x30] sm:$0xf]
        %v1672 = vld [vmem:[#allocation6 + $0x34] sm:$0xf]
        %v1673 = vld [vmem:[#allocation6 + $0x38] sm:$0xf]
        %v1674 = vld [vmem:[#allocation6 + $0x3c] sm:$0xf]
        %v1675 = vld [vmem:[%s5] sm:$0x1]
        %v1677 = vlaneseq
        %v1678 = vshrl.u32 %v1677, 7
        %v1679 = vsub.s32 0, %v1678
        %v1680 = vrot.slane %v1675, %v1679
        %v1698 = vunpack.c.l.b16 %v1659
        %v1699 = vunpack.c.l.b16 %v1660
        %v1700 = vunpack.c.l.b16 %v1661
        %v1701 = vunpack.c.l.b16 %v1662
        %v1702 = vunpack.c.l.b16 %v1663
        %v1703 = vunpack.c.l.b16 %v1664
        %v1704 = vunpack.c.l.b16 %v1665
        %v1705 = vunpack.c.l.b16 %v1666
        %v1706 = vunpack.c.l.b16 %v1667
        %v1707 = vunpack.c.l.b16 %v1668
        %v1708 = vunpack.c.l.b16 %v1669
        %v1709 = vunpack.c.l.b16 %v1670
        %v1710 = vunpack.c.l.b16 %v1671
        %v1711 = vunpack.c.l.b16 %v1672
        %v1712 = vunpack.c.l.b16 %v1673
        %v1713 = vunpack.c.l.b16 %v1674
        %v1714 = vpack.c.b16 %v1699, %v1698
        %v1715 = vpack.c.b16 %v1701, %v1700
        %v1716 = vpack.c.b16 %v1703, %v1702
        %v1717 = vpack.c.b16 %v1705, %v1704
        %v1718 = vpack.c.b16 %v1707, %v1706
        %v1719 = vpack.c.b16 %v1709, %v1708
        %v1720 = vpack.c.b16 %v1711, %v1710
        %v1721 = vpack.c.b16 %v1713, %v1712
        %1730 = vmatprep.subr.bf16.mxu0 0
        %1731 = vmatpush1.bf16.msra.mxu0 %v1714
        %1732 = vmatprep.subr.bf16.mxu0 0
        %1733 = vmatpush1.bf16.msra.mxu0 %v1715
        %1734 = vmatprep.subr.bf16.mxu0 0
        %1735 = vmatpush1.bf16.msra.mxu0 %v1716
        %1736 = vmatprep.subr.bf16.mxu0 0
        %1737 = vmatpush1.bf16.msra.mxu0 %v1717
        %1738 = vmatprep.subr.bf16.mxu0 0
        %1739 = vmatpush1.bf16.msra.mxu0 %v1718
        %1740 = vmatprep.subr.bf16.mxu0 0
        %1741 = vmatpush1.bf16.msra.mxu0 %v1719
        %1742 = vmatprep.subr.bf16.mxu0 0
        %1743 = vmatpush1.bf16.msra.mxu0 %v1720
        %1744 = vmatprep.subr.bf16.mxu0 0
        %1745 = vmatpush1.bf16.msra.mxu0 %v1721
        %1746 = vmatprep.subr.bf16.mxu0 0
        %1747 = vmatpush1.bf16.msra.mxu0 0
        %1748 = vmatprep.subr.bf16.mxu0 0
        %1749 = vmatpush1.bf16.msra.mxu0 0
        %1750 = vmatprep.subr.bf16.mxu0 0
        %1751 = vmatpush1.bf16.msra.mxu0 0
        %1752 = vmatprep.subr.bf16.mxu0 0
        %1753 = vmatpush1.bf16.msra.mxu0 0
        %1754 = vmatprep.subr.bf16.mxu0 0
        %1755 = vmatpush1.bf16.msra.mxu0 0
        %1756 = vmatprep.subr.bf16.mxu0 0
        %1757 = vmatpush1.bf16.msra.mxu0 0
        %1758 = vmatprep.subr.bf16.mxu0 0
        %1759 = vmatpush1.bf16.msra.mxu0 0
        %1760 = vmatprep.subr.bf16.mxu0 0
        %1761 = vmatpush1.bf16.msra.mxu0 0
        %1762 = vmatprep.mubr.bf16.mxu0 0
        %1763 = vmatmul.mubr.bf16.gmra.mrb[0].mxu0 %v1658
        %v1764 = vpop.f32.mrb[0].mxu0
        %v1765 = vadd.f32 %v1680, %v1764
        %v1766 = vpop.f32.mrb[0].mxu0
        %v1767 = vpop.f32.mrb[0].mxu0
        %v1768 = vpop.f32.mrb[0].mxu0
        %1769 = vdwg.mxu0
        %v1770 = vadd.f32 %v1765, %v719
        %v1771 = vld [vmem:[%s6] sm:$0x1]
        %v1772 = vld [vmem:[%s7] sm:$0x1]
        %1773 = vadd.xlane.f32.xlu0 %v1770
        %v1774 = vpop.xlane.xlu0 %1773
        %v1775 = vrcp.pop 128.0
        %v1776 = vmul.f32 %v1774, %v1775
        %v1777 = vsub.f32 %v1770, %v1776
        %v1778 = vmul.f32 %v1777, %v1777
        %1779 = vadd.xlane.f32.xlu0 %v1778
        %v1780 = vpop.xlane.xlu0 %1779
        %v1781 = vmul.f32 %v1780, %v1775
        %v1782 = vadd.f32 %v1781, 1e-12
        %v1783 = vrsqrt.pop %v1782
        %v1784 = vmul.f32 %v1777, %v1783
        %v1786 = vlaneseq
        %v1787 = vshrl.u32 %v1786, 7
        %v1788 = vsub.s32 0, %v1787
        %v1789 = vrot.slane %v1771, %v1788
        %v1791 = vmul.f32 %v1784, %v1789
        %v1793 = vlaneseq
        %v1794 = vshrl.u32 %v1793, 7
        %v1795 = vsub.s32 0, %v1794
        %v1796 = vrot.slane %v1772, %v1795
        %v1798 = vadd.f32 %v1791, %v1796
        %v1799 = vpack.c.bf16 %v1798, %v1798
        %v1800 = vld [vmem:[#allocation7] sm:$0xff]
        %v1801 = vld [vmem:[#allocation7 + $0x8] sm:$0xff]
        %v1802 = vld [vmem:[#allocation7 + $0x10] sm:$0xff]
        %v1803 = vld [vmem:[#allocation7 + $0x18] sm:$0xff]
        %v1804 = vld [vmem:[#allocation7 + $0x20] sm:$0xff]
        %v1805 = vld [vmem:[#allocation7 + $0x28] sm:$0xff]
        %v1806 = vld [vmem:[#allocation7 + $0x30] sm:$0xff]
        %v1807 = vld [vmem:[#allocation7 + $0x38] sm:$0xff]
        %v1808 = vld [vmem:[#allocation7 + $0x40] sm:$0xff]
        %v1809 = vld [vmem:[#allocation7 + $0x48] sm:$0xff]
        %v1810 = vld [vmem:[#allocation7 + $0x50] sm:$0xff]
        %v1811 = vld [vmem:[#allocation7 + $0x58] sm:$0xff]
        %v1812 = vld [vmem:[#allocation7 + $0x60] sm:$0xff]
        %v1813 = vld [vmem:[#allocation7 + $0x68] sm:$0xff]
        %v1814 = vld [vmem:[#allocation7 + $0x70] sm:$0xff]
        %v1815 = vld [vmem:[#allocation7 + $0x78] sm:$0xff]
        %v1816 = vld [vmem:[#allocation7 + $0x80] sm:$0xff]
        %v1817 = vld [vmem:[#allocation7 + $0x88] sm:$0xff]
        %v1818 = vld [vmem:[#allocation7 + $0x90] sm:$0xff]
        %v1819 = vld [vmem:[#allocation7 + $0x98] sm:$0xff]
        %v1820 = vld [vmem:[#allocation7 + $0xa0] sm:$0xff]
        %v1821 = vld [vmem:[#allocation7 + $0xa8] sm:$0xff]
        %v1822 = vld [vmem:[#allocation7 + $0xb0] sm:$0xff]
        %v1823 = vld [vmem:[#allocation7 + $0xb8] sm:$0xff]
        %v1824 = vld [vmem:[#allocation7 + $0xc0] sm:$0xff]
        %v1825 = vld [vmem:[#allocation7 + $0xc8] sm:$0xff]
        %v1826 = vld [vmem:[#allocation7 + $0xd0] sm:$0xff]
        %v1827 = vld [vmem:[#allocation7 + $0xd8] sm:$0xff]
        %v1828 = vld [vmem:[#allocation7 + $0xe0] sm:$0xff]
        %v1829 = vld [vmem:[#allocation7 + $0xe8] sm:$0xff]
        %v1830 = vld [vmem:[#allocation7 + $0xf0] sm:$0xff]
        %v1831 = vld [vmem:[#allocation7 + $0xf8] sm:$0xff]
        %v1832 = vld [vmem:[%s9] sm:$0xf]
        %v1834 = vlaneseq
        %v1835 = vshrl.u32 %v1834, 7
        %v1836 = vsub.s32 0, %v1835
        %v1837 = vrot.slane %v1832, %v1836
        %v1838 = vlaneseq
        %v1839 = vshrl.u32 %v1838, 7
        %v1840 = vsub.s32 1, %v1839
        %v1841 = vrot.slane %v1832, %v1840
        %v1842 = vlaneseq
        %v1843 = vshrl.u32 %v1842, 7
        %v1844 = vsub.s32 2, %v1843
        %v1845 = vrot.slane %v1832, %v1844
        %v1846 = vlaneseq
        %v1847 = vshrl.u32 %v1846, 7
        %v1848 = vsub.s32 3, %v1847
        %v1849 = vrot.slane %v1832, %v1848
        %v1886 = vunpack.c.l.b16 %v1800
        %v1887 = vunpack.c.h.b16 %v1800
        %v1888 = vunpack.c.l.b16 %v1801
        %v1889 = vunpack.c.h.b16 %v1801
        %v1890 = vunpack.c.l.b16 %v1802
        %v1891 = vunpack.c.h.b16 %v1802
        %v1892 = vunpack.c.l.b16 %v1803
        %v1893 = vunpack.c.h.b16 %v1803
        %v1894 = vunpack.c.l.b16 %v1804
        %v1895 = vunpack.c.h.b16 %v1804
        %v1896 = vunpack.c.l.b16 %v1805
        %v1897 = vunpack.c.h.b16 %v1805
        %v1898 = vunpack.c.l.b16 %v1806
        %v1899 = vunpack.c.h.b16 %v1806
        %v1900 = vunpack.c.l.b16 %v1807
        %v1901 = vunpack.c.h.b16 %v1807
        %v1902 = vunpack.c.l.b16 %v1808
        %v1903 = vunpack.c.h.b16 %v1808
        %v1904 = vunpack.c.l.b16 %v1809
        %v1905 = vunpack.c.h.b16 %v1809
        %v1906 = vunpack.c.l.b16 %v1810
        %v1907 = vunpack.c.h.b16 %v1810
        %v1908 = vunpack.c.l.b16 %v1811
        %v1909 = vunpack.c.h.b16 %v1811
        %v1910 = vunpack.c.l.b16 %v1812
        %v1911 = vunpack.c.h.b16 %v1812
        %v1912 = vunpack.c.l.b16 %v1813
        %v1913 = vunpack.c.h.b16 %v1813
        %v1914 = vunpack.c.l.b16 %v1814
        %v1915 = vunpack.c.h.b16 %v1814
        %v1916 = vunpack.c.l.b16 %v1815
        %v1917 = vunpack.c.h.b16 %v1815
        %v1918 = vunpack.c.l.b16 %v1816
        %v1919 = vunpack.c.h.b16 %v1816
        %v1920 = vunpack.c.l.b16 %v1817
        %v1921 = vunpack.c.h.b16 %v1817
        %v1922 = vunpack.c.l.b16 %v1818
        %v1923 = vunpack.c.h.b16 %v1818
        %v1924 = vunpack.c.l.b16 %v1819
        %v1925 = vunpack.c.h.b16 %v1819
        %v1926 = vunpack.c.l.b16 %v1820
        %v1927 = vunpack.c.h.b16 %v1820
        %v1928 = vunpack.c.l.b16 %v1821
        %v1929 = vunpack.c.h.b16 %v1821
        %v1930 = vunpack.c.l.b16 %v1822
        %v1931 = vunpack.c.h.b16 %v1822
        %v1932 = vunpack.c.l.b16 %v1823
        %v1933 = vunpack.c.h.b16 %v1823
        %v1934 = vunpack.c.l.b16 %v1824
        %v1935 = vunpack.c.h.b16 %v1824
        %v1936 = vunpack.c.l.b16 %v1825
        %v1937 = vunpack.c.h.b16 %v1825
        %v1938 = vunpack.c.l.b16 %v1826
        %v1939 = vunpack.c.h.b16 %v1826
        %v1940 = vunpack.c.l.b16 %v1827
        %v1941 = vunpack.c.h.b16 %v1827
        %v1942 = vunpack.c.l.b16 %v1828
        %v1943 = vunpack.c.h.b16 %v1828
        %v1944 = vunpack.c.l.b16 %v1829
        %v1945 = vunpack.c.h.b16 %v1829
        %v1946 = vunpack.c.l.b16 %v1830
        %v1947 = vunpack.c.h.b16 %v1830
        %v1948 = vunpack.c.l.b16 %v1831
        %v1949 = vunpack.c.h.b16 %v1831
        %v1950 = vpack.c.b16 %v1890, %v1886
        %v1951 = vpack.c.b16 %v1891, %v1887
        %v1952 = vpack.c.b16 %v1892, %v1888
        %v1953 = vpack.c.b16 %v1893, %v1889
        %v1954 = vpack.c.b16 %v1898, %v1894
        %v1955 = vpack.c.b16 %v1899, %v1895
        %v1956 = vpack.c.b16 %v1900, %v1896
        %v1957 = vpack.c.b16 %v1901, %v1897
        %v1958 = vpack.c.b16 %v1906, %v1902
        %v1959 = vpack.c.b16 %v1907, %v1903
        %v1960 = vpack.c.b16 %v1908, %v1904
        %v1961 = vpack.c.b16 %v1909, %v1905
        %v1962 = vpack.c.b16 %v1914, %v1910
        %v1963 = vpack.c.b16 %v1915, %v1911
        %v1964 = vpack.c.b16 %v1916, %v1912
        %v1965 = vpack.c.b16 %v1917, %v1913
        %v1966 = vpack.c.b16 %v1922, %v1918
        %v1967 = vpack.c.b16 %v1923, %v1919
        %v1968 = vpack.c.b16 %v1924, %v1920
        %v1969 = vpack.c.b16 %v1925, %v1921
        %v1970 = vpack.c.b16 %v1930, %v1926
        %v1971 = vpack.c.b16 %v1931, %v1927
        %v1972 = vpack.c.b16 %v1932, %v1928
        %v1973 = vpack.c.b16 %v1933, %v1929
        %v1974 = vpack.c.b16 %v1938, %v1934
        %v1975 = vpack.c.b16 %v1939, %v1935
        %v1976 = vpack.c.b16 %v1940, %v1936
        %v1977 = vpack.c.b16 %v1941, %v1937
        %v1978 = vpack.c.b16 %v1946, %v1942
        %v1979 = vpack.c.b16 %v1947, %v1943
        %v1980 = vpack.c.b16 %v1948, %v1944
        %v1981 = vpack.c.b16 %v1949, %v1945
        %2014 = vmatprep.subr.bf16.mxu0 %v1951
        %2015 = vmatpush1.bf16.msra.mxu0 %v1950
        %2016 = vmatprep.subr.bf16.mxu0 %v1955
        %2017 = vmatpush1.bf16.msra.mxu0 %v1954
        %2018 = vmatprep.subr.bf16.mxu0 %v1959
        %2019 = vmatpush1.bf16.msra.mxu0 %v1958
        %2020 = vmatprep.subr.bf16.mxu0 %v1963
        %2021 = vmatpush1.bf16.msra.mxu0 %v1962
        %2022 = vmatprep.subr.bf16.mxu0 %v1967
        %2023 = vmatpush1.bf16.msra.mxu0 %v1966
        %2024 = vmatprep.subr.bf16.mxu0 %v1971
        %2025 = vmatpush1.bf16.msra.mxu0 %v1970
        %2026 = vmatprep.subr.bf16.mxu0 %v1975
        %2027 = vmatpush1.bf16.msra.mxu0 %v1974
        %2028 = vmatprep.subr.bf16.mxu0 %v1979
        %2029 = vmatpush1.bf16.msra.mxu0 %v1978
        %2030 = vmatprep.subr.bf16.mxu0 0
        %2031 = vmatpush1.bf16.msra.mxu0 0
        %2032 = vmatprep.subr.bf16.mxu0 0
        %2033 = vmatpush1.bf16.msra.mxu0 0
        %2034 = vmatprep.subr.bf16.mxu0 0
        %2035 = vmatpush1.bf16.msra.mxu0 0
        %2036 = vmatprep.subr.bf16.mxu0 0
        %2037 = vmatpush1.bf16.msra.mxu0 0
        %2038 = vmatprep.subr.bf16.mxu0 0
        %2039 = vmatpush1.bf16.msra.mxu0 0
        %2040 = vmatprep.subr.bf16.mxu0 0
        %2041 = vmatpush1.bf16.msra.mxu0 0
        %2042 = vmatprep.subr.bf16.mxu0 0
        %2043 = vmatpush1.bf16.msra.mxu0 0
        %2044 = vmatprep.subr.bf16.mxu0 0
        %2045 = vmatpush1.bf16.msra.mxu0 0
        %2046 = vmatprep.mubr.bf16.mxu0 0
        %2047 = vmatmul.mubr.bf16.gmra.mrb[0].mxu0 %v1799
        %v2048 = vpop.f32.mrb[0].mxu0
        %v2049 = vadd.f32 %v1837, %v2048
        %v2050 = vpop.f32.mrb[0].mxu0
        %v2051 = vadd.f32 %v1841, %v2050
        %v2052 = vpop.f32.mrb[0].mxu0
        %v2053 = vpop.f32.mrb[0].mxu0
        %2054 = vdwg.mxu0
        %2055 = vmatprep.subr.bf16.mxu0 %v1953
        %2056 = vmatpush1.bf16.msra.mxu0 %v1952
        %2057 = vmatprep.subr.bf16.mxu0 %v1957
        %2058 = vmatpush1.bf16.msra.mxu0 %v1956
        %2059 = vmatprep.subr.bf16.mxu0 %v1961
        %2060 = vmatpush1.bf16.msra.mxu0 %v1960
        %2061 = vmatprep.subr.bf16.mxu0 %v1965
        %2062 = vmatpush1.bf16.msra.mxu0 %v1964
        %2063 = vmatprep.subr.bf16.mxu0 %v1969
        %2064 = vmatpush1.bf16.msra.mxu0 %v1968
        %2065 = vmatprep.subr.bf16.mxu0 %v1973
        %2066 = vmatpush1.bf16.msra.mxu0 %v1972
        %2067 = vmatprep.subr.bf16.mxu0 %v1977
        %2068 = vmatpush1.bf16.msra.mxu0 %v1976
        %2069 = vmatprep.subr.bf16.mxu0 %v1981
        %2070 = vmatpush1.bf16.msra.mxu0 %v1980
        %2071 = vmatprep.subr.bf16.mxu0 0
        %2072 = vmatpush1.bf16.msra.mxu0 0
        %2073 = vmatprep.subr.bf16.mxu0 0
        %2074 = vmatpush1.bf16.msra.mxu0 0
        %2075 = vmatprep.subr.bf16.mxu0 0
        %2076 = vmatpush1.bf16.msra.mxu0 0
        %2077 = vmatprep.subr.bf16.mxu0 0
        %2078 = vmatpush1.bf16.msra.mxu0 0
        %2079 = vmatprep.subr.bf16.mxu0 0
        %2080 = vmatpush1.bf16.msra.mxu0 0
        %2081 = vmatprep.subr.bf16.mxu0 0
        %2082 = vmatpush1.bf16.msra.mxu0 0
        %2083 = vmatprep.subr.bf16.mxu0 0
        %2084 = vmatpush1.bf16.msra.mxu0 0
        %2085 = vmatprep.subr.bf16.mxu0 0
        %2086 = vmatpush1.bf16.msra.mxu0 0
        %2087 = vmatprep.mubr.bf16.mxu0 0
        %2088 = vmatmul.mubr.bf16.gmra.mrb[0].mxu0 %v1799
        %v2089 = vpop.f32.mrb[0].mxu0
        %v2090 = vadd.f32 %v1845, %v2089
        %v2091 = vpop.f32.mrb[0].mxu0
        %v2092 = vadd.f32 %v1849, %v2091
        %v2093 = vpop.f32.mrb[0].mxu0
        %v2094 = vpop.f32.mrb[0].mxu0
        %2095 = vdwg.mxu0
        %v2096 = vmul.f32 %v2049, 0.5
        %v2097 = vmul.f32 %v2051, 0.5
        %v2098 = vmul.f32 %v2090, 0.5
        %v2099 = vmul.f32 %v2092, 0.5
        %v2100 = vmul.f32 %v2049, %v2049
        %v2101 = vmul.f32 %v2051, %v2051
        %v2102 = vmul.f32 %v2090, %v2090
        %v2103 = vmul.f32 %v2092, %v2092
        %v2104 = vmul.f32 %v2100, %v2049
        %v2105 = vmul.f32 %v2101, %v2051
        %v2106 = vmul.f32 %v2102, %v2090
        %v2107 = vmul.f32 %v2103, %v2092
        %v2108 = vmul.f32 %v2104, 0.044715
        %v2109 = vmul.f32 %v2105, 0.044715
        %v2110 = vmul.f32 %v2106, 0.044715
        %v2111 = vmul.f32 %v2107, 0.044715
        %v2112 = vadd.f32 %v2049, %v2108
        %v2113 = vadd.f32 %v2051, %v2109
        %v2114 = vadd.f32 %v2090, %v2110
        %v2115 = vadd.f32 %v2092, %v2111
        %v2116 = vmul.f32 %v2112, 0.7978846
        %v2117 = vmul.f32 %v2113, 0.7978846
        %v2118 = vmul.f32 %v2114, 0.7978846
        %v2119 = vmul.f32 %v2115, 0.7978846
        %v2120 = vtanh.pop %v2116
        %v2121 = vtanh.pop %v2117
        %v2122 = vtanh.pop %v2118
        %v2123 = vtanh.pop %v2119
        %v2124 = vadd.f32 %v2120, 1.0
        %v2125 = vadd.f32 %v2121, 1.0
        %v2126 = vadd.f32 %v2122, 1.0
        %v2127 = vadd.f32 %v2123, 1.0
        %v2128 = vmul.f32 %v2096, %v2124
        %v2129 = vmul.f32 %v2097, %v2125
        %v2130 = vmul.f32 %v2098, %v2126
        %v2131 = vmul.f32 %v2099, %v2127
        %v2132 = vpack.c.bf16 %v2128, %v2128
        %v2133 = vpack.c.bf16 %v2129, %v2129
        %v2134 = vpack.c.bf16 %v2130, %v2130
        %v2135 = vpack.c.bf16 %v2131, %v2131
        %v2136 = vld [vmem:[#allocation9] sm:$0xf]
        %v2137 = vld [vmem:[#allocation9 + $0x4] sm:$0xf]
        %v2138 = vld [vmem:[#allocation9 + $0x8] sm:$0xf]
        %v2139 = vld [vmem:[#allocation9 + $0xc] sm:$0xf]
        %v2140 = vld [vmem:[#allocation9 + $0x10] sm:$0xf]
        %v2141 = vld [vmem:[#allocation9 + $0x14] sm:$0xf]
        %v2142 = vld [vmem:[#allocation9 + $0x18] sm:$0xf]
        %v2143 = vld [vmem:[#allocation9 + $0x1c] sm:$0xf]
        %v2144 = vld [vmem:[#allocation9 + $0x20] sm:$0xf]
        %v2145 = vld [vmem:[#allocation9 + $0x24] sm:$0xf]
        %v2146 = vld [vmem:[#allocation9 + $0x28] sm:$0xf]
        %v2147 = vld [vmem:[#allocation9 + $0x2c] sm:$0xf]
        %v2148 = vld [vmem:[#allocation9 + $0x30] sm:$0xf]
        %v2149 = vld [vmem:[#allocation9 + $0x34] sm:$0xf]
        %v2150 = vld [vmem:[#allocation9 + $0x38] sm:$0xf]
        %v2151 = vld [vmem:[#allocation9 + $0x3c] sm:$0xf]
        %v2152 = vld [vmem:[#allocation9 + $0x40] sm:$0xf]
        %v2153 = vld [vmem:[#allocation9 + $0x44] sm:$0xf]
        %v2154 = vld [vmem:[#allocation9 + $0x48] sm:$0xf]
        %v2155 = vld [vmem:[#allocation9 + $0x4c] sm:$0xf]
        %v2156 = vld [vmem:[#allocation9 + $0x50] sm:$0xf]
        %v2157 = vld [vmem:[#allocation9 + $0x54] sm:$0xf]
        %v2158 = vld [vmem:[#allocation9 + $0x58] sm:$0xf]
        %v2159 = vld [vmem:[#allocation9 + $0x5c] sm:$0xf]
        %v2160 = vld [vmem:[#allocation9 + $0x60] sm:$0xf]
        %v2161 = vld [vmem:[#allocation9 + $0x64] sm:$0xf]
        %v2162 = vld [vmem:[#allocation9 + $0x68] sm:$0xf]
        %v2163 = vld [vmem:[#allocation9 + $0x6c] sm:$0xf]
        %v2164 = vld [vmem:[#allocation9 + $0x70] sm:$0xf]
        %v2165 = vld [vmem:[#allocation9 + $0x74] sm:$0xf]
        %v2166 = vld [vmem:[#allocation9 + $0x78] sm:$0xf]
        %v2167 = vld [vmem:[#allocation9 + $0x7c] sm:$0xf]
        %v2168 = vld [vmem:[#allocation9 + $0x80] sm:$0xf]
        %v2169 = vld [vmem:[#allocation9 + $0x84] sm:$0xf]
        %v2170 = vld [vmem:[#allocation9 + $0x88] sm:$0xf]
        %v2171 = vld [vmem:[#allocation9 + $0x8c] sm:$0xf]
        %v2172 = vld [vmem:[#allocation9 + $0x90] sm:$0xf]
        %v2173 = vld [vmem:[#allocation9 + $0x94] sm:$0xf]
        %v2174 = vld [vmem:[#allocation9 + $0x98] sm:$0xf]
        %v2175 = vld [vmem:[#allocation9 + $0x9c] sm:$0xf]
        %v2176 = vld [vmem:[#allocation9 + $0xa0] sm:$0xf]
        %v2177 = vld [vmem:[#allocation9 + $0xa4] sm:$0xf]
        %v2178 = vld [vmem:[#allocation9 + $0xa8] sm:$0xf]
        %v2179 = vld [vmem:[#allocation9 + $0xac] sm:$0xf]
        %v2180 = vld [vmem:[#allocation9 + $0xb0] sm:$0xf]
        %v2181 = vld [vmem:[#allocation9 + $0xb4] sm:$0xf]
        %v2182 = vld [vmem:[#allocation9 + $0xb8] sm:$0xf]
        %v2183 = vld [vmem:[#allocation9 + $0xbc] sm:$0xf]
        %v2184 = vld [vmem:[#allocation9 + $0xc0] sm:$0xf]
        %v2185 = vld [vmem:[#allocation9 + $0xc4] sm:$0xf]
        %v2186 = vld [vmem:[#allocation9 + $0xc8] sm:$0xf]
        %v2187 = vld [vmem:[#allocation9 + $0xcc] sm:$0xf]
        %v2188 = vld [vmem:[#allocation9 + $0xd0] sm:$0xf]
        %v2189 = vld [vmem:[#allocation9 + $0xd4] sm:$0xf]
        %v2190 = vld [vmem:[#allocation9 + $0xd8] sm:$0xf]
        %v2191 = vld [vmem:[#allocation9 + $0xdc] sm:$0xf]
        %v2192 = vld [vmem:[#allocation9 + $0xe0] sm:$0xf]
        %v2193 = vld [vmem:[#allocation9 + $0xe4] sm:$0xf]
        %v2194 = vld [vmem:[#allocation9 + $0xe8] sm:$0xf]
        %v2195 = vld [vmem:[#allocation9 + $0xec] sm:$0xf]
        %v2196 = vld [vmem:[#allocation9 + $0xf0] sm:$0xf]
        %v2197 = vld [vmem:[#allocation9 + $0xf4] sm:$0xf]
        %v2198 = vld [vmem:[#allocation9 + $0xf8] sm:$0xf]
        %v2199 = vld [vmem:[#allocation9 + $0xfc] sm:$0xf]
        %v2200 = vld [vmem:[#allocation10] sm:$0x1]
        %v2202 = vlaneseq
        %v2203 = vshrl.u32 %v2202, 7
        %v2204 = vsub.s32 0, %v2203
        %v2205 = vrot.slane %v2200, %v2204
        %v2271 = vunpack.c.l.b16 %v2136
        %v2272 = vunpack.c.l.b16 %v2137
        %v2273 = vunpack.c.l.b16 %v2138
        %v2274 = vunpack.c.l.b16 %v2139
        %v2275 = vunpack.c.l.b16 %v2140
        %v2276 = vunpack.c.l.b16 %v2141
        %v2277 = vunpack.c.l.b16 %v2142
        %v2278 = vunpack.c.l.b16 %v2143
        %v2279 = vunpack.c.l.b16 %v2144
        %v2280 = vunpack.c.l.b16 %v2145
        %v2281 = vunpack.c.l.b16 %v2146
        %v2282 = vunpack.c.l.b16 %v2147
        %v2283 = vunpack.c.l.b16 %v2148
        %v2284 = vunpack.c.l.b16 %v2149
        %v2285 = vunpack.c.l.b16 %v2150
        %v2286 = vunpack.c.l.b16 %v2151
        %v2287 = vunpack.c.l.b16 %v2152
        %v2288 = vunpack.c.l.b16 %v2153
        %v2289 = vunpack.c.l.b16 %v2154
        %v2290 = vunpack.c.l.b16 %v2155
        %v2291 = vunpack.c.l.b16 %v2156
        %v2292 = vunpack.c.l.b16 %v2157
        %v2293 = vunpack.c.l.b16 %v2158
        %v2294 = vunpack.c.l.b16 %v2159
        %v2295 = vunpack.c.l.b16 %v2160
        %v2296 = vunpack.c.l.b16 %v2161
        %v2297 = vunpack.c.l.b16 %v2162
        %v2298 = vunpack.c.l.b16 %v2163
        %v2299 = vunpack.c.l.b16 %v2164
        %v2300 = vunpack.c.l.b16 %v2165
        %v2301 = vunpack.c.l.b16 %v2166
        %v2302 = vunpack.c.l.b16 %v2167
        %v2303 = vunpack.c.l.b16 %v2168
        %v2304 = vunpack.c.l.b16 %v2169
        %v2305 = vunpack.c.l.b16 %v2170
        %v2306 = vunpack.c.l.b16 %v2171
        %v2307 = vunpack.c.l.b16 %v2172
        %v2308 = vunpack.c.l.b16 %v2173
        %v2309 = vunpack.c.l.b16 %v2174
        %v2310 = vunpack.c.l.b16 %v2175
        %v2311 = vunpack.c.l.b16 %v2176
        %v2312 = vunpack.c.l.b16 %v2177
        %v2313 = vunpack.c.l.b16 %v2178
        %v2314 = vunpack.c.l.b16 %v2179
        %v2315 = vunpack.c.l.b16 %v2180
        %v2316 = vunpack.c.l.b16 %v2181
        %v2317 = vunpack.c.l.b16 %v2182
        %v2318 = vunpack.c.l.b16 %v2183
        %v2319 = vunpack.c.l.b16 %v2184
        %v2320 = vunpack.c.l.b16 %v2185
        %v2321 = vunpack.c.l.b16 %v2186
        %v2322 = vunpack.c.l.b16 %v2187
        %v2323 = vunpack.c.l.b16 %v2188
        %v2324 = vunpack.c.l.b16 %v2189
        %v2325 = vunpack.c.l.b16 %v2190
        %v2326 = vunpack.c.l.b16 %v2191
        %v2327 = vunpack.c.l.b16 %v2192
        %v2328 = vunpack.c.l.b16 %v2193
        %v2329 = vunpack.c.l.b16 %v2194
        %v2330 = vunpack.c.l.b16 %v2195
        %v2331 = vunpack.c.l.b16 %v2196
        %v2332 = vunpack.c.l.b16 %v2197
        %v2333 = vunpack.c.l.b16 %v2198
        %v2334 = vunpack.c.l.b16 %v2199
        %v2335 = vpack.c.b16 %v2272, %v2271
        %v2336 = vpack.c.b16 %v2274, %v2273
        %v2337 = vpack.c.b16 %v2276, %v2275
        %v2338 = vpack.c.b16 %v2278, %v2277
        %v2339 = vpack.c.b16 %v2280, %v2279
        %v2340 = vpack.c.b16 %v2282, %v2281
        %v2341 = vpack.c.b16 %v2284, %v2283
        %v2342 = vpack.c.b16 %v2286, %v2285
        %v2343 = vpack.c.b16 %v2288, %v2287
        %v2344 = vpack.c.b16 %v2290, %v2289
        %v2345 = vpack.c.b16 %v2292, %v2291
        %v2346 = vpack.c.b16 %v2294, %v2293
        %v2347 = vpack.c.b16 %v2296, %v2295
        %v2348 = vpack.c.b16 %v2298, %v2297
        %v2349 = vpack.c.b16 %v2300, %v2299
        %v2350 = vpack.c.b16 %v2302, %v2301
        %v2351 = vpack.c.b16 %v2304, %v2303
        %v2352 = vpack.c.b16 %v2306, %v2305
        %v2353 = vpack.c.b16 %v2308, %v2307
        %v2354 = vpack.c.b16 %v2310, %v2309
        %v2355 = vpack.c.b16 %v2312, %v2311
        %v2356 = vpack.c.b16 %v2314, %v2313
        %v2357 = vpack.c.b16 %v2316, %v2315
        %v2358 = vpack.c.b16 %v2318, %v2317
        %v2359 = vpack.c.b16 %v2320, %v2319
        %v2360 = vpack.c.b16 %v2322, %v2321
        %v2361 = vpack.c.b16 %v2324, %v2323
        %v2362 = vpack.c.b16 %v2326, %v2325
        %v2363 = vpack.c.b16 %v2328, %v2327
        %v2364 = vpack.c.b16 %v2330, %v2329
        %v2365 = vpack.c.b16 %v2332, %v2331
        %v2366 = vpack.c.b16 %v2334, %v2333
        %2399 = vmatprep.subr.bf16.mxu0 0
        %2400 = vmatpush1.bf16.msra.mxu0 %v2335
        %2401 = vmatprep.subr.bf16.mxu0 0
        %2402 = vmatpush1.bf16.msra.mxu0 %v2336
        %2403 = vmatprep.subr.bf16.mxu0 0
        %2404 = vmatpush1.bf16.msra.mxu0 %v2337
        %2405 = vmatprep.subr.bf16.mxu0 0
        %2406 = vmatpush1.bf16.msra.mxu0 %v2338
        %2407 = vmatprep.subr.bf16.mxu0 0
        %2408 = vmatpush1.bf16.msra.mxu0 %v2339
        %2409 = vmatprep.subr.bf16.mxu0 0
        %2410 = vmatpush1.bf16.msra.mxu0 %v2340
        %2411 = vmatprep.subr.bf16.mxu0 0
        %2412 = vmatpush1.bf16.msra.mxu0 %v2341
        %2413 = vmatprep.subr.bf16.mxu0 0
        %2414 = vmatpush1.bf16.msra.mxu0 %v2342
        %2415 = vmatprep.subr.bf16.mxu0 0
        %2416 = vmatpush1.bf16.msra.mxu0 %v2343
        %2417 = vmatprep.subr.bf16.mxu0 0
        %2418 = vmatpush1.bf16.msra.mxu0 %v2344
        %2419 = vmatprep.subr.bf16.mxu0 0
        %2420 = vmatpush1.bf16.msra.mxu0 %v2345
        %2421 = vmatprep.subr.bf16.mxu0 0
        %2422 = vmatpush1.bf16.msra.mxu0 %v2346
        %2423 = vmatprep.subr.bf16.mxu0 0
        %2424 = vmatpush1.bf16.msra.mxu0 %v2347
        %2425 = vmatprep.subr.bf16.mxu0 0
        %2426 = vmatpush1.bf16.msra.mxu0 %v2348
        %2427 = vmatprep.subr.bf16.mxu0 0
        %2428 = vmatpush1.bf16.msra.mxu0 %v2349
        %2429 = vmatprep.subr.bf16.mxu0 0
        %2430 = vmatpush1.bf16.msra.mxu0 %v2350
        %2431 = vmatprep.mubr.bf16.mxu0 %v2133
        %2432 = vmatmul.mubr.bf16.gmra.mrb[0].mxu0 %v2132
        %v2433 = vpop.f32.mrb[0].mxu0
        %v2434 = vadd.f32 %v2205, %v2433
        %v2435 = vpop.f32.mrb[0].mxu0
        %v2436 = vpop.f32.mrb[0].mxu0
        %v2437 = vpop.f32.mrb[0].mxu0
        %2438 = vdwg.mxu0
        %2439 = vmatprep.subr.bf16.mxu0 0
        %2440 = vmatpush1.bf16.msra.mxu0 %v2351
        %2441 = vmatprep.subr.bf16.mxu0 0
        %2442 = vmatpush1.bf16.msra.mxu0 %v2352
        %2443 = vmatprep.subr.bf16.mxu0 0
        %2444 = vmatpush1.bf16.msra.mxu0 %v2353
        %2445 = vmatprep.subr.bf16.mxu0 0
        %2446 = vmatpush1.bf16.msra.mxu0 %v2354
        %2447 = vmatprep.subr.bf16.mxu0 0
        %2448 = vmatpush1.bf16.msra.mxu0 %v2355
        %2449 = vmatprep.subr.bf16.mxu0 0
        %2450 = vmatpush1.bf16.msra.mxu0 %v2356
        %2451 = vmatprep.subr.bf16.mxu0 0
        %2452 = vmatpush1.bf16.msra.mxu0 %v2357
        %2453 = vmatprep.subr.bf16.mxu0 0
        %2454 = vmatpush1.bf16.msra.mxu0 %v2358
        %2455 = vmatprep.subr.bf16.mxu0 0
        %2456 = vmatpush1.bf16.msra.mxu0 %v2359
        %2457 = vmatprep.subr.bf16.mxu0 0
        %2458 = vmatpush1.bf16.msra.mxu0 %v2360
        %2459 = vmatprep.subr.bf16.mxu0 0
        %2460 = vmatpush1.bf16.msra.mxu0 %v2361
        %2461 = vmatprep.subr.bf16.mxu0 0
        %2462 = vmatpush1.bf16.msra.mxu0 %v2362
        %2463 = vmatprep.subr.bf16.mxu0 0
        %2464 = vmatpush1.bf16.msra.mxu0 %v2363
        %2465 = vmatprep.subr.bf16.mxu0 0
        %2466 = vmatpush1.bf16.msra.mxu0 %v2364
        %2467 = vmatprep.subr.bf16.mxu0 0
        %2468 = vmatpush1.bf16.msra.mxu0 %v2365
        %2469 = vmatprep.subr.bf16.mxu0 0
        %2470 = vmatpush1.bf16.msra.mxu0 %v2366
        %2471 = vmatprep.mubr.bf16.mxu0 %v2135
        %2472 = vmatmul.mubr.bf16.gmra.mrb[0].mxu0 %v2134
        %v2473 = vpop.f32.mrb[0].mxu0
        %v2474 = vadd.f32 %v2434, %v2473
        %v2475 = vpop.f32.mrb[0].mxu0
        %v2476 = vpop.f32.mrb[0].mxu0
        %v2477 = vpop.f32.mrb[0].mxu0
        %2478 = vdwg.mxu0
        %v2479 = vadd.f32 %v2474, %v1798
        %v2480 = vld [vmem:[#allocation12] sm:$0x1]
        %v2481 = vld [vmem:[%s13] sm:$0x1]
        %2482 = vadd.xlane.f32.xlu0 %v2479
        %v2483 = vpop.xlane.xlu0 %2482
        %v2484 = vmul.f32 %v2483, %v1775
        %v2485 = vsub.f32 %v2479, %v2484
        %v2486 = vmul.f32 %v2485, %v2485
        %2487 = vadd.xlane.f32.xlu0 %v2486
        %v2488 = vpop.xlane.xlu0 %2487
        %v2489 = vmul.f32 %v2488, %v1775
        %v2490 = vadd.f32 %v2489, 1e-12
        %v2491 = vrsqrt.pop %v2490
        %v2492 = vmul.f32 %v2485, %v2491
        %v2494 = vlaneseq
        %v2495 = vshrl.u32 %v2494, 7
        %v2496 = vsub.s32 0, %v2495
        %v2497 = vrot.slane %v2480, %v2496
        %v2499 = vmul.f32 %v2492, %v2497
        %v2501 = vlaneseq
        %v2502 = vshrl.u32 %v2501, 7
        %v2503 = vsub.s32 0, %v2502
        %v2504 = vrot.slane %v2481, %v2503
        %v2506 = vadd.f32 %v2499, %v2504
        %v2507 = vpack.c.bf16 %v2506, %v2506
        %s2508 = scalar_lea.vmem [#allocation2], 192
        %v2509 = vld [vmem:[%s2508] sm:$0xff]
        %v2510 = vld [vmem:[%s2508 + $0x8] sm:$0xf]
        %v2511 = vld [vmem:[%s2508 + $0xc] sm:$0xff]
        %v2512 = vld [vmem:[%s2508 + $0x14] sm:$0xf]
        %v2513 = vld [vmem:[%s2508 + $0x18] sm:$0xff]
        %v2514 = vld [vmem:[%s2508 + $0x20] sm:$0xf]
        %v2515 = vld [vmem:[%s2508 + $0x24] sm:$0xff]
        %v2516 = vld [vmem:[%s2508 + $0x2c] sm:$0xf]
        %v2517 = vld [vmem:[%s2508 + $0x30] sm:$0xff]
        %v2518 = vld [vmem:[%s2508 + $0x38] sm:$0xf]
        %v2519 = vld [vmem:[%s2508 + $0x3c] sm:$0xff]
        %v2520 = vld [vmem:[%s2508 + $0x44] sm:$0xf]
        %v2521 = vld [vmem:[%s2508 + $0x48] sm:$0xff]
        %v2522 = vld [vmem:[%s2508 + $0x50] sm:$0xf]
        %v2523 = vld [vmem:[%s2508 + $0x54] sm:$0xff]
        %v2524 = vld [vmem:[%s2508 + $0x5c] sm:$0xf]
        %v2525 = vld [vmem:[%s2508 + $0x60] sm:$0xff]
        %v2526 = vld [vmem:[%s2508 + $0x68] sm:$0xf]
        %v2527 = vld [vmem:[%s2508 + $0x6c] sm:$0xff]
        %v2528 = vld [vmem:[%s2508 + $0x74] sm:$0xf]
        %v2529 = vld [vmem:[%s2508 + $0x78] sm:$0xff]
        %v2530 = vld [vmem:[%s2508 + $0x80] sm:$0xf]
        %v2531 = vld [vmem:[%s2508 + $0x84] sm:$0xff]
        %v2532 = vld [vmem:[%s2508 + $0x8c] sm:$0xf]
        %v2533 = vld [vmem:[%s2508 + $0x90] sm:$0xff]
        %v2534 = vld [vmem:[%s2508 + $0x98] sm:$0xf]
        %v2535 = vld [vmem:[%s2508 + $0x9c] sm:$0xff]
        %v2536 = vld [vmem:[%s2508 + $0xa4] sm:$0xf]
        %v2537 = vld [vmem:[%s2508 + $0xa8] sm:$0xff]
        %v2538 = vld [vmem:[%s2508 + $0xb0] sm:$0xf]
        %v2539 = vld [vmem:[%s2508 + $0xb4] sm:$0xff]
        %v2540 = vld [vmem:[%s2508 + $0xbc] sm:$0xf]
        %s2541 = scalar_lea.vmem [#allocation4], 3
        %v2542 = vld [vmem:[%s2541] sm:$0x7]
        %v2544 = vlaneseq
        %v2545 = vshrl.u32 %v2544, 7
        %v2546 = vsub.s32 0, %v2545
        %v2547 = vrot.slane %v2542, %v2546
        %v2548 = vlaneseq
        %v2549 = vshrl.u32 %v2548, 7
        %v2550 = vsub.s32 1, %v2549
        %v2551 = vrot.slane %v2542, %v2550
        %v2552 = vlaneseq
        %v2553 = vshrl.u32 %v2552, 7
        %v2554 = vsub.s32 2, %v2553
        %v2555 = vrot.slane %v2542, %v2554
        %v2591 = vunpack.c.l.b16 %v2509
        %v2592 = vunpack.c.h.b16 %v2509
        %v2593 = vunpack.c.l.b16 %v2510
        %v2594 = vunpack.c.l.b16 %v2511
        %v2595 = vunpack.c.h.b16 %v2511
        %v2596 = vunpack.c.l.b16 %v2512
        %v2597 = vunpack.c.l.b16 %v2513
        %v2598 = vunpack.c.h.b16 %v2513
        %v2599 = vunpack.c.l.b16 %v2514
        %v2600 = vunpack.c.l.b16 %v2515
        %v2601 = vunpack.c.h.b16 %v2515
        %v2602 = vunpack.c.l.b16 %v2516
        %v2603 = vunpack.c.l.b16 %v2517
        %v2604 = vunpack.c.h.b16 %v2517
        %v2605 = vunpack.c.l.b16 %v2518
        %v2606 = vunpack.c.l.b16 %v2519
        %v2607 = vunpack.c.h.b16 %v2519
        %v2608 = vunpack.c.l.b16 %v2520
        %v2609 = vunpack.c.l.b16 %v2521
        %v2610 = vunpack.c.h.b16 %v2521
        %v2611 = vunpack.c.l.b16 %v2522
        %v2612 = vunpack.c.l.b16 %v2523
        %v2613 = vunpack.c.h.b16 %v2523
        %v2614 = vunpack.c.l.b16 %v2524
        %v2615 = vunpack.c.l.b16 %v2525
        %v2616 = vunpack.c.h.b16 %v2525
        %v2617 = vunpack.c.l.b16 %v2526
        %v2618 = vunpack.c.l.b16 %v2527
        %v2619 = vunpack.c.h.b16 %v2527
        %v2620 = vunpack.c.l.b16 %v2528
        %v2621 = vunpack.c.l.b16 %v2529
        %v2622 = vunpack.c.h.b16 %v2529
        %v2623 = vunpack.c.l.b16 %v2530
        %v2624 = vunpack.c.l.b16 %v2531
        %v2625 = vunpack.c.h.b16 %v2531
        %v2626 = vunpack.c.l.b16 %v2532
        %v2627 = vunpack.c.l.b16 %v2533
        %v2628 = vunpack.c.h.b16 %v2533
        %v2629 = vunpack.c.l.b16 %v2534
        %v2630 = vunpack.c.l.b16 %v2535
        %v2631 = vunpack.c.h.b16 %v2535
        %v2632 = vunpack.c.l.b16 %v2536
        %v2633 = vunpack.c.l.b16 %v2537
        %v2634 = vunpack.c.h.b16 %v2537
        %v2635 = vunpack.c.l.b16 %v2538
        %v2636 = vunpack.c.l.b16 %v2539
        %v2637 = vunpack.c.h.b16 %v2539
        %v2638 = vunpack.c.l.b16 %v2540
        %v2639 = vpack.c.b16 %v2594, %v2591
        %v2640 = vpack.c.b16 %v2595, %v2592
        %v2641 = vpack.c.b16 %v2596, %v2593
        %v2642 = vpack.c.b16 %v2600, %v2597
        %v2643 = vpack.c.b16 %v2601, %v2598
        %v2644 = vpack.c.b16 %v2602, %v2599
        %v2645 = vpack.c.b16 %v2606, %v2603
        %v2646 = vpack.c.b16 %v2607, %v2604
        %v2647 = vpack.c.b16 %v2608, %v2605
        %v2648 = vpack.c.b16 %v2612, %v2609
        %v2649 = vpack.c.b16 %v2613, %v2610
        %v2650 = vpack.c.b16 %v2614, %v2611
        %v2651 = vpack.c.b16 %v2618, %v2615
        %v2652 = vpack.c.b16 %v2619, %v2616
        %v2653 = vpack.c.b16 %v2620, %v2617
        %v2654 = vpack.c.b16 %v2624, %v2621
        %v2655 = vpack.c.b16 %v2625, %v2622
        %v2656 = vpack.c.b16 %v2626, %v2623
        %v2657 = vpack.c.b16 %v2630, %v2627
        %v2658 = vpack.c.b16 %v2631, %v2628
        %v2659 = vpack.c.b16 %v2632, %v2629
        %v2660 = vpack.c.b16 %v2636, %v2633
        %v2661 = vpack.c.b16 %v2637, %v2634
        %v2662 = vpack.c.b16 %v2638, %v2635
        %2687 = vmatprep.subr.bf16.mxu0 %v2640
        %2688 = vmatpush1.bf16.msra.mxu0 %v2639
        %2689 = vmatprep.subr.bf16.mxu0 %v2643
        %2690 = vmatpush1.bf16.msra.mxu0 %v2642
        %2691 = vmatprep.subr.bf16.mxu0 %v2646
        %2692 = vmatpush1.bf16.msra.mxu0 %v2645
        %2693 = vmatprep.subr.bf16.mxu0 %v2649
        %2694 = vmatpush1.bf16.msra.mxu0 %v2648
        %2695 = vmatprep.subr.bf16.mxu0 %v2652
        %2696 = vmatpush1.bf16.msra.mxu0 %v2651
        %2697 = vmatprep.subr.bf16.mxu0 %v2655
        %2698 = vmatpush1.bf16.msra.mxu0 %v2654
        %2699 = vmatprep.subr.bf16.mxu0 %v2658
        %2700 = vmatpush1.bf16.msra.mxu0 %v2657
        %2701 = vmatprep.subr.bf16.mxu0 %v2661
        %2702 = vmatpush1.bf16.msra.mxu0 %v2660
        %2703 = vmatprep.subr.bf16.mxu0 0
        %2704 = vmatpush1.bf16.msra.mxu0 0
        %2705 = vmatprep.subr.bf16.mxu0 0
        %2706 = vmatpush1.bf16.msra.mxu0 0
        %2707 = vmatprep.subr.bf16.mxu0 0
        %2708 = vmatpush1.bf16.msra.mxu0 0
        %2709 = vmatprep.subr.bf16.mxu0 0
        %2710 = vmatpush1.bf16.msra.mxu0 0
        %2711 = vmatprep.subr.bf16.mxu0 0
        %2712 = vmatpush1.bf16.msra.mxu0 0
        %2713 = vmatprep.subr.bf16.mxu0 0
        %2714 = vmatpush1.bf16.msra.mxu0 0
        %2715 = vmatprep.subr.bf16.mxu0 0
        %2716 = vmatpush1.bf16.msra.mxu0 0
        %2717 = vmatprep.subr.bf16.mxu0 0
        %2718 = vmatpush1.bf16.msra.mxu0 0
        %2719 = vmatprep.mubr.bf16.mxu0 0
        %2720 = vmatmul.mubr.bf16.gmra.mrb[0].mxu0 %v2507
        %v2721 = vpop.f32.mrb[0].mxu0
        %v2722 = vadd.f32 %v2547, %v2721
        %v2723 = vpop.f32.mrb[0].mxu0
        %v2724 = vadd.f32 %v2551, %v2723
        %v2725 = vpop.f32.mrb[0].mxu0
        %v2726 = vpop.f32.mrb[0].mxu0
        %2727 = vdwg.mxu0
        %2728 = vmatprep.subr.bf16.mxu0 0
        %2729 = vmatpush1.bf16.msra.mxu0 %v2641
        %2730 = vmatprep.subr.bf16.mxu0 0
        %2731 = vmatpush1.bf16.msra.mxu0 %v2644
        %2732 = vmatprep.subr.bf16.mxu0 0
        %2733 = vmatpush1.bf16.msra.mxu0 %v2647
        %2734 = vmatprep.subr.bf16.mxu0 0
        %2735 = vmatpush1.bf16.msra.mxu0 %v2650
        %2736 = vmatprep.subr.bf16.mxu0 0
        %2737 = vmatpush1.bf16.msra.mxu0 %v2653
        %2738 = vmatprep.subr.bf16.mxu0 0
        %2739 = vmatpush1.bf16.msra.mxu0 %v2656
        %2740 = vmatprep.subr.bf16.mxu0 0
        %2741 = vmatpush1.bf16.msra.mxu0 %v2659
        %2742 = vmatprep.subr.bf16.mxu0 0
        %2743 = vmatpush1.bf16.msra.mxu0 %v2662
        %2744 = vmatprep.subr.bf16.mxu0 0
        %2745 = vmatpush1.bf16.msra.mxu0 0
        %2746 = vmatprep.subr.bf16.mxu0 0
        %2747 = vmatpush1.bf16.msra.mxu0 0
        %2748 = vmatprep.subr.bf16.mxu0 0
        %2749 = vmatpush1.bf16.msra.mxu0 0
        %2750 = vmatprep.subr.bf16.mxu0 0
        %2751 = vmatpush1.bf16.msra.mxu0 0
        %2752 = vmatprep.subr.bf16.mxu0 0
        %2753 = vmatpush1.bf16.msra.mxu0 0
        %2754 = vmatprep.subr.bf16.mxu0 0
        %2755 = vmatpush1.bf16.msra.mxu0 0
        %2756 = vmatprep.subr.bf16.mxu0 0
        %2757 = vmatpush1.bf16.msra.mxu0 0
        %2758 = vmatprep.subr.bf16.mxu0 0
        %2759 = vmatpush1.bf16.msra.mxu0 0
        %2760 = vmatprep.mubr.bf16.mxu0 0
        %2761 = vmatmul.mubr.bf16.gmra.mrb[0].mxu0 %v2507
        %v2762 = vpop.f32.mrb[0].mxu0
        %v2763 = vadd.f32 %v2555, %v2762
        %v2764 = vpop.f32.mrb[0].mxu0
        %v2765 = vpop.f32.mrb[0].mxu0
        %v2766 = vpop.f32.mrb[0].mxu0
        %2767 = vdwg.mxu0
        %2769 = vrot.lane.b32.xlu0 %v2722, 96
        %v2770 = vpop.permute.xlu0 %2769
        %2771 = vrot.lane.b32.xlu0 %v2722, 64
        %v2772 = vpop.permute.xlu0 %2771
        %2773 = vrot.lane.b32.xlu0 %v2722, 32
        %v2774 = vpop.permute.xlu0 %2773
        %2776 = vrot.lane.b32.xlu0 %v2724, 96
        %v2777 = vpop.permute.xlu0 %2776
        %2778 = vrot.lane.b32.xlu0 %v2724, 64
        %v2779 = vpop.permute.xlu0 %2778
        %2780 = vrot.lane.b32.xlu0 %v2724, 32
        %v2781 = vpop.permute.xlu0 %2780
        %2783 = vrot.lane.b32.xlu0 %v2763, 96
        %v2784 = vpop.permute.xlu0 %2783
        %2786 = vrot.lane.b32.xlu0 %v2763, 64
        %v2787 = vpop.permute.xlu0 %2786
        %2789 = vrot.lane.b32.xlu0 %v2763, 32
        %v2790 = vpop.permute.xlu0 %2789
        %v2792 = vsel %vm1007, %v2722, 0
        %v2794 = vsel %vm1007, %v2724, 0
        %2796 = vmatprep.subr.mxu0 0.0
        %2797 = vmatpush1.xpose.msra.mxu0 %v2794
        %2798 = vmatprep.subr.mxu0 0.0
        %2799 = vmatpush1.xpose.msra.mxu0 0.0
        %2800 = vmatprep.subr.mxu0 0.0
        %2801 = vmatpush1.xpose.msra.mxu0 0.0
        %2802 = vmatprep.subr.mxu0 0.0
        %2803 = vmatpush1.xpose.msra.mxu0 0.0
        %2804 = vmatprep.subr.mxu0 0.0
        %2805 = vmatpush1.xpose.msra.mxu0 0.0
        %2806 = vmatprep.subr.mxu0 0.0
        %2807 = vmatpush1.xpose.msra.mxu0 0.0
        %2808 = vmatprep.subr.mxu0 0.0
        %2809 = vmatpush1.xpose.msra.mxu0 0.0
        %2810 = vmatprep.subr.mxu0 0.0
        %2811 = vmatpush1.xpose.msra.mxu0 0.0
        %2812 = vmatprep.subr.mxu0 0.0
        %2813 = vmatpush1.xpose.msra.mxu0 0.0
        %2814 = vmatprep.subr.mxu0 0.0
        %2815 = vmatpush1.xpose.msra.mxu0 0.0
        %2816 = vmatprep.subr.mxu0 0.0
        %2817 = vmatpush1.xpose.msra.mxu0 0.0
        %2818 = vmatprep.subr.mxu0 0.0
        %2819 = vmatpush1.xpose.msra.mxu0 0.0
        %2820 = vmatprep.subr.mxu0 0.0
        %2821 = vmatpush1.xpose.msra.mxu0 0.0
        %2822 = vmatprep.subr.mxu0 0.0
        %2823 = vmatpush1.xpose.msra.mxu0 0.0
        %2824 = vmatprep.subr.mxu0 0.0
        %2825 = vmatpush1.xpose.msra.mxu0 0.0
        %2826 = vmatprep.subr.mxu0 0.0
        %2827 = vmatpush1.xpose.msra.mxu0 0.0
        %2828 = vmatprep.subr.mxu0 0.0
        %2829 = vmatpush1.xpose.msra.mxu0 0.0
        %2830 = vmatprep.subr.mxu0 0.0
        %2831 = vmatpush1.xpose.msra.mxu0 0.0
        %2832 = vmatprep.subr.mxu0 0.0
        %2833 = vmatpush1.xpose.msra.mxu0 0.0
        %2834 = vmatprep.subr.mxu0 0.0
        %2835 = vmatpush1.xpose.msra.mxu0 0.0
        %2836 = vmatprep.subr.mxu0 0.0
        %2837 = vmatpush1.xpose.msra.mxu0 0.0
        %2838 = vmatprep.subr.mxu0 0.0
        %2839 = vmatpush1.xpose.msra.mxu0 0.0
        %2840 = vmatprep.subr.mxu0 0.0
        %2841 = vmatpush1.xpose.msra.mxu0 0.0
        %2842 = vmatprep.subr.mxu0 0.0
        %2843 = vmatpush1.xpose.msra.mxu0 0.0
        %2844 = vmatprep.subr.mxu0 0.0
        %2845 = vmatpush1.xpose.msra.mxu0 0.0
        %2846 = vmatprep.subr.mxu0 0.0
        %2847 = vmatpush1.xpose.msra.mxu0 0.0
        %2848 = vmatprep.subr.mxu0 0.0
        %2849 = vmatpush1.xpose.msra.mxu0 0.0
        %2850 = vmatprep.subr.mxu0 0.0
        %2851 = vmatpush1.xpose.msra.mxu0 0.0
        %2852 = vmatprep.subr.mxu0 0.0
        %2853 = vmatpush1.xpose.msra.mxu0 0.0
        %2854 = vmatprep.subr.mxu0 0.0
        %2855 = vmatpush1.xpose.msra.mxu0 0.0
        %2856 = vmatprep.subr.mxu0 0.0
        %2857 = vmatpush1.xpose.msra.mxu0 0.0
        %2858 = vmatprep.subr.mxu0 0.0
        %2859 = vmatpush1.xpose.msra.mxu0 0.0
        %2860 = vmatprep.mubr.f32.mxu0 0.0
        %2861 = vmatmul.mubr.f32.gmra.mrb[0].mxu0 %v2792
        %v2862 = vpop.f32.mrb[0].mxu0
        %v2863 = vadd.f32 %v720, %v2862
        %v2864 = vpop.f32.mrb[0].mxu0
        %2865 = vdwg.mxu0
        %v2866 = vsel %vm1007, %v2770, 0
        %v2868 = vsel %vm1007, %v2777, 0
        %2870 = vmatprep.subr.mxu0 0.0
        %2871 = vmatpush1.xpose.msra.mxu0 %v2868
        %2872 = vmatprep.subr.mxu0 0.0
        %2873 = vmatpush1.xpose.msra.mxu0 0.0
        %2874 = vmatprep.subr.mxu0 0.0
        %2875 = vmatpush1.xpose.msra.mxu0 0.0
        %2876 = vmatprep.subr.mxu0 0.0
        %2877 = vmatpush1.xpose.msra.mxu0 0.0
        %2878 = vmatprep.subr.mxu0 0.0
        %2879 = vmatpush1.xpose.msra.mxu0 0.0
        %2880 = vmatprep.subr.mxu0 0.0
        %2881 = vmatpush1.xpose.msra.mxu0 0.0
        %2882 = vmatprep.subr.mxu0 0.0
        %2883 = vmatpush1.xpose.msra.mxu0 0.0
        %2884 = vmatprep.subr.mxu0 0.0
        %2885 = vmatpush1.xpose.msra.mxu0 0.0
        %2886 = vmatprep.subr.mxu0 0.0
        %2887 = vmatpush1.xpose.msra.mxu0 0.0
        %2888 = vmatprep.subr.mxu0 0.0
        %2889 = vmatpush1.xpose.msra.mxu0 0.0
        %2890 = vmatprep.subr.mxu0 0.0
        %2891 = vmatpush1.xpose.msra.mxu0 0.0
        %2892 = vmatprep.subr.mxu0 0.0
        %2893 = vmatpush1.xpose.msra.mxu0 0.0
        %2894 = vmatprep.subr.mxu0 0.0
        %2895 = vmatpush1.xpose.msra.mxu0 0.0
        %2896 = vmatprep.subr.mxu0 0.0
        %2897 = vmatpush1.xpose.msra.mxu0 0.0
        %2898 = vmatprep.subr.mxu0 0.0
        %2899 = vmatpush1.xpose.msra.mxu0 0.0
        %2900 = vmatprep.subr.mxu0 0.0
        %2901 = vmatpush1.xpose.msra.mxu0 0.0
        %2902 = vmatprep.subr.mxu0 0.0
        %2903 = vmatpush1.xpose.msra.mxu0 0.0
        %2904 = vmatprep.subr.mxu0 0.0
        %2905 = vmatpush1.xpose.msra.mxu0 0.0
        %2906 = vmatprep.subr.mxu0 0.0
        %2907 = vmatpush1.xpose.msra.mxu0 0.0
        %2908 = vmatprep.subr.mxu0 0.0
        %2909 = vmatpush1.xpose.msra.mxu0 0.0
        %2910 = vmatprep.subr.mxu0 0.0
        %2911 = vmatpush1.xpose.msra.mxu0 0.0
        %2912 = vmatprep.subr.mxu0 0.0
        %2913 = vmatpush1.xpose.msra.mxu0 0.0
        %2914 = vmatprep.subr.mxu0 0.0
        %2915 = vmatpush1.xpose.msra.mxu0 0.0
        %2916 = vmatprep.subr.mxu0 0.0
        %2917 = vmatpush1.xpose.msra.mxu0 0.0
        %2918 = vmatprep.subr.mxu0 0.0
        %2919 = vmatpush1.xpose.msra.mxu0 0.0
        %2920 = vmatprep.subr.mxu0 0.0
        %2921 = vmatpush1.xpose.msra.mxu0 0.0
        %2922 = vmatprep.subr.mxu0 0.0
        %2923 = vmatpush1.xpose.msra.mxu0 0.0
        %2924 = vmatprep.subr.mxu0 0.0
        %2925 = vmatpush1.xpose.msra.mxu0 0.0
        %2926 = vmatprep.subr.mxu0 0.0
        %2927 = vmatpush1.xpose.msra.mxu0 0.0
        %2928 = vmatprep.subr.mxu0 0.0
        %2929 = vmatpush1.xpose.msra.mxu0 0.0
        %2930 = vmatprep.subr.mxu0 0.0
        %2931 = vmatpush1.xpose.msra.mxu0 0.0
        %2932 = vmatprep.subr.mxu0 0.0
        %2933 = vmatpush1.xpose.msra.mxu0 0.0
        %2934 = vmatprep.mubr.f32.mxu0 0.0
        %2935 = vmatmul.mubr.f32.gmra.mrb[0].mxu0 %v2866
        %v2936 = vpop.f32.mrb[0].mxu0
        %v2937 = vadd.f32 %v721, %v2936
        %v2938 = vpop.f32.mrb[0].mxu0
        %2939 = vdwg.mxu0
        %v2940 = vsel %vm1007, %v2772, 0
        %v2942 = vsel %vm1007, %v2779, 0
        %2944 = vmatprep.subr.mxu0 0.0
        %2945 = vmatpush1.xpose.msra.mxu0 %v2942
        %2946 = vmatprep.subr.mxu0 0.0
        %2947 = vmatpush1.xpose.msra.mxu0 0.0
        %2948 = vmatprep.subr.mxu0 0.0
        %2949 = vmatpush1.xpose.msra.mxu0 0.0
        %2950 = vmatprep.subr.mxu0 0.0
        %2951 = vmatpush1.xpose.msra.mxu0 0.0
        %2952 = vmatprep.subr.mxu0 0.0
        %2953 = vmatpush1.xpose.msra.mxu0 0.0
        %2954 = vmatprep.subr.mxu0 0.0
        %2955 = vmatpush1.xpose.msra.mxu0 0.0
        %2956 = vmatprep.subr.mxu0 0.0
        %2957 = vmatpush1.xpose.msra.mxu0 0.0
        %2958 = vmatprep.subr.mxu0 0.0
        %2959 = vmatpush1.xpose.msra.mxu0 0.0
        %2960 = vmatprep.subr.mxu0 0.0
        %2961 = vmatpush1.xpose.msra.mxu0 0.0
        %2962 = vmatprep.subr.mxu0 0.0
        %2963 = vmatpush1.xpose.msra.mxu0 0.0
        %2964 = vmatprep.subr.mxu0 0.0
        %2965 = vmatpush1.xpose.msra.mxu0 0.0
        %2966 = vmatprep.subr.mxu0 0.0
        %2967 = vmatpush1.xpose.msra.mxu0 0.0
        %2968 = vmatprep.subr.mxu0 0.0
        %2969 = vmatpush1.xpose.msra.mxu0 0.0
        %2970 = vmatprep.subr.mxu0 0.0
        %2971 = vmatpush1.xpose.msra.mxu0 0.0
        %2972 = vmatprep.subr.mxu0 0.0
        %2973 = vmatpush1.xpose.msra.mxu0 0.0
        %2974 = vmatprep.subr.mxu0 0.0
        %2975 = vmatpush1.xpose.msra.mxu0 0.0
        %2976 = vmatprep.subr.mxu0 0.0
        %2977 = vmatpush1.xpose.msra.mxu0 0.0
        %2978 = vmatprep.subr.mxu0 0.0
        %2979 = vmatpush1.xpose.msra.mxu0 0.0
        %2980 = vmatprep.subr.mxu0 0.0
        %2981 = vmatpush1.xpose.msra.mxu0 0.0
        %2982 = vmatprep.subr.mxu0 0.0
        %2983 = vmatpush1.xpose.msra.mxu0 0.0
        %2984 = vmatprep.subr.mxu0 0.0
        %2985 = vmatpush1.xpose.msra.mxu0 0.0
        %2986 = vmatprep.subr.mxu0 0.0
        %2987 = vmatpush1.xpose.msra.mxu0 0.0
        %2988 = vmatprep.subr.mxu0 0.0
        %2989 = vmatpush1.xpose.msra.mxu0 0.0
        %2990 = vmatprep.subr.mxu0 0.0
        %2991 = vmatpush1.xpose.msra.mxu0 0.0
        %2992 = vmatprep.subr.mxu0 0.0
        %2993 = vmatpush1.xpose.msra.mxu0 0.0
        %2994 = vmatprep.subr.mxu0 0.0
        %2995 = vmatpush1.xpose.msra.mxu0 0.0
        %2996 = vmatprep.subr.mxu0 0.0
        %2997 = vmatpush1.xpose.msra.mxu0 0.0
        %2998 = vmatprep.subr.mxu0 0.0
        %2999 = vmatpush1.xpose.msra.mxu0 0.0
        %3000 = vmatprep.subr.mxu0 0.0
        %3001 = vmatpush1.xpose.msra.mxu0 0.0
        %3002 = vmatprep.subr.mxu0 0.0
        %3003 = vmatpush1.xpose.msra.mxu0 0.0
        %3004 = vmatprep.subr.mxu0 0.0
        %3005 = vmatpush1.xpose.msra.mxu0 0.0
        %3006 = vmatprep.subr.mxu0 0.0
        %3007 = vmatpush1.xpose.msra.mxu0 0.0
        %3008 = vmatprep.mubr.f32.mxu0 0.0
        %3009 = vmatmul.mubr.f32.gmra.mrb[0].mxu0 %v2940
        %v3010 = vpop.f32.mrb[0].mxu0
        %v3011 = vadd.f32 %v722, %v3010
        %v3012 = vpop.f32.mrb[0].mxu0
        %3013 = vdwg.mxu0
        %v3014 = vsel %vm1007, %v2774, 0
        %v3016 = vsel %vm1007, %v2781, 0
        %3018 = vmatprep.subr.mxu0 0.0
        %3019 = vmatpush1.xpose.msra.mxu0 %v3016
        %3020 = vmatprep.subr.mxu0 0.0
        %3021 = vmatpush1.xpose.msra.mxu0 0.0
        %3022 = vmatprep.subr.mxu0 0.0
        %3023 = vmatpush1.xpose.msra.mxu0 0.0
        %3024 = vmatprep.subr.mxu0 0.0
        %3025 = vmatpush1.xpose.msra.mxu0 0.0
        %3026 = vmatprep.subr.mxu0 0.0
        %3027 = vmatpush1.xpose.msra.mxu0 0.0
        %3028 = vmatprep.subr.mxu0 0.0
        %3029 = vmatpush1.xpose.msra.mxu0 0.0
        %3030 = vmatprep.subr.mxu0 0.0
        %3031 = vmatpush1.xpose.msra.mxu0 0.0
        %3032 = vmatprep.subr.mxu0 0.0
        %3033 = vmatpush1.xpose.msra.mxu0 0.0
        %3034 = vmatprep.subr.mxu0 0.0
        %3035 = vmatpush1.xpose.msra.mxu0 0.0
        %3036 = vmatprep.subr.mxu0 0.0
        %3037 = vmatpush1.xpose.msra.mxu0 0.0
        %3038 = vmatprep.subr.mxu0 0.0
        %3039 = vmatpush1.xpose.msra.mxu0 0.0
        %3040 = vmatprep.subr.mxu0 0.0
        %3041 = vmatpush1.xpose.msra.mxu0 0.0
        %3042 = vmatprep.subr.mxu0 0.0
        %3043 = vmatpush1.xpose.msra.mxu0 0.0
        %3044 = vmatprep.subr.mxu0 0.0
        %3045 = vmatpush1.xpose.msra.mxu0 0.0
        %3046 = vmatprep.subr.mxu0 0.0
        %3047 = vmatpush1.xpose.msra.mxu0 0.0
        %3048 = vmatprep.subr.mxu0 0.0
        %3049 = vmatpush1.xpose.msra.mxu0 0.0
        %3050 = vmatprep.subr.mxu0 0.0
        %3051 = vmatpush1.xpose.msra.mxu0 0.0
        %3052 = vmatprep.subr.mxu0 0.0
        %3053 = vmatpush1.xpose.msra.mxu0 0.0
        %3054 = vmatprep.subr.mxu0 0.0
        %3055 = vmatpush1.xpose.msra.mxu0 0.0
        %3056 = vmatprep.subr.mxu0 0.0
        %3057 = vmatpush1.xpose.msra.mxu0 0.0
        %3058 = vmatprep.subr.mxu0 0.0
        %3059 = vmatpush1.xpose.msra.mxu0 0.0
        %3060 = vmatprep.subr.mxu0 0.0
        %3061 = vmatpush1.xpose.msra.mxu0 0.0
        %3062 = vmatprep.subr.mxu0 0.0
        %3063 = vmatpush1.xpose.msra.mxu0 0.0
        %3064 = vmatprep.subr.mxu0 0.0
        %3065 = vmatpush1.xpose.msra.mxu0 0.0
        %3066 = vmatprep.subr.mxu0 0.0
        %3067 = vmatpush1.xpose.msra.mxu0 0.0
        %3068 = vmatprep.subr.mxu0 0.0
        %3069 = vmatpush1.xpose.msra.mxu0 0.0
        %3070 = vmatprep.subr.mxu0 0.0
        %3071 = vmatpush1.xpose.msra.mxu0 0.0
        %3072 = vmatprep.subr.mxu0 0.0
        %3073 = vmatpush1.xpose.msra.mxu0 0.0
        %3074 = vmatprep.subr.mxu0 0.0
        %3075 = vmatpush1.xpose.msra.mxu0 0.0
        %3076 = vmatprep.subr.mxu0 0.0
        %3077 = vmatpush1.xpose.msra.mxu0 0.0
        %3078 = vmatprep.subr.mxu0 0.0
        %3079 = vmatpush1.xpose.msra.mxu0 0.0
        %3080 = vmatprep.subr.mxu0 0.0
        %3081 = vmatpush1.xpose.msra.mxu0 0.0
        %3082 = vmatprep.mubr.f32.mxu0 0.0
        %3083 = vmatmul.mubr.f32.gmra.mrb[0].mxu0 %v3014
        %v3084 = vpop.f32.mrb[0].mxu0
        %v3085 = vadd.f32 %v723, %v3084
        %v3086 = vpop.f32.mrb[0].mxu0
        %3087 = vdwg.mxu0
        %v3088 = vsel %vm1304, %v2863, -inf
        %3089 = vmax.xlane.f32.xlu0 %v3088
        %v3090 = vpop.xlane.xlu0 %3089
        %v3091 = vsel %vm1304, %v2937, -inf
        %3092 = vmax.xlane.f32.xlu0 %v3091
        %v3093 = vpop.xlane.xlu0 %3092
        %v3094 = vsel %vm1304, %v3011, -inf
        %3095 = vmax.xlane.f32.xlu0 %v3094
        %v3096 = vpop.xlane.xlu0 %3095
        %v3097 = vsel %vm1304, %v3085, -inf
        %3098 = vmax.xlane.f32.xlu0 %v3097
        %v3099 = vpop.xlane.xlu0 %3098
        %v3100 = vsub.f32 %v2863, %v3090
        %v3101 = vsub.f32 %v2937, %v3093
        %v3102 = vsub.f32 %v3011, %v3096
        %v3103 = vsub.f32 %v3085, %v3099
        %v3104 = vmul.f32 %v3100, 1.442695
        %v3105 = vpow.pop %v3104
        %v3106 = vmul.f32 %v3101, 1.442695
        %v3107 = vpow.pop %v3106
        %v3108 = vmul.f32 %v3102, 1.442695
        %v3109 = vpow.pop %v3108
        %v3110 = vmul.f32 %v3103, 1.442695
        %v3111 = vpow.pop %v3110
        %v3112 = vsel %vm1304, %v3105, 0.0
        %3113 = vadd.xlane.f32.xlu0 %v3112
        %v3114 = vpop.xlane.xlu0 %3113
        %v3115 = vsel %vm1304, %v3107, 0.0
        %3116 = vadd.xlane.f32.xlu0 %v3115
        %v3117 = vpop.xlane.xlu0 %3116
        %v3118 = vsel %vm1304, %v3109, 0.0
        %3119 = vadd.xlane.f32.xlu0 %v3118
        %v3120 = vpop.xlane.xlu0 %3119
        %v3121 = vsel %vm1304, %v3111, 0.0
        %3122 = vadd.xlane.f32.xlu0 %v3121
        %v3123 = vpop.xlane.xlu0 %3122
        %v3124 = vrcp.pop %v3114
        %v3125 = vrcp.pop %v3117
        %v3126 = vrcp.pop %v3120
        %v3127 = vrcp.pop %v3123
        %v3128 = vmul.f32 %v3105, %v3124
        %v3129 = vmul.f32 %v3107, %v3125
        %v3130 = vmul.f32 %v3109, %v3126
        %v3131 = vmul.f32 %v3111, %v3127
        %v3133 = vsel %vm1304, %v3128, 0
        %3135 = vmatprep.subr.mxu0 0.0
        %3136 = vmatpush1.msra.mxu0 %v2763
        %3137 = vmatprep.subr.mxu0 0.0
        %3138 = vmatpush1.msra.mxu0 0.0
        %3139 = vmatprep.subr.mxu0 0.0
        %3140 = vmatpush1.msra.mxu0 0.0
        %3141 = vmatprep.subr.mxu0 0.0
        %3142 = vmatpush1.msra.mxu0 0.0
        %3143 = vmatprep.subr.mxu0 0.0
        %3144 = vmatpush1.msra.mxu0 0.0
        %3145 = vmatprep.subr.mxu0 0.0
        %3146 = vmatpush1.msra.mxu0 0.0
        %3147 = vmatprep.subr.mxu0 0.0
        %3148 = vmatpush1.msra.mxu0 0.0
        %3149 = vmatprep.subr.mxu0 0.0
        %3150 = vmatpush1.msra.mxu0 0.0
        %3151 = vmatprep.subr.mxu0 0.0
        %3152 = vmatpush1.msra.mxu0 0.0
        %3153 = vmatprep.subr.mxu0 0.0
        %3154 = vmatpush1.msra.mxu0 0.0
        %3155 = vmatprep.subr.mxu0 0.0
        %3156 = vmatpush1.msra.mxu0 0.0
        %3157 = vmatprep.subr.mxu0 0.0
        %3158 = vmatpush1.msra.mxu0 0.0
        %3159 = vmatprep.subr.mxu0 0.0
        %3160 = vmatpush1.msra.mxu0 0.0
        %3161 = vmatprep.subr.mxu0 0.0
        %3162 = vmatpush1.msra.mxu0 0.0
        %3163 = vmatprep.subr.mxu0 0.0
        %3164 = vmatpush1.msra.mxu0 0.0
        %3165 = vmatprep.subr.mxu0 0.0
        %3166 = vmatpush1.msra.mxu0 0.0
        %3167 = vmatprep.subr.mxu0 0.0
        %3168 = vmatpush1.msra.mxu0 0.0
        %3169 = vmatprep.subr.mxu0 0.0
        %3170 = vmatpush1.msra.mxu0 0.0
        %3171 = vmatprep.subr.mxu0 0.0
        %3172 = vmatpush1.msra.mxu0 0.0
        %3173 = vmatprep.subr.mxu0 0.0
        %3174 = vmatpush1.msra.mxu0 0.0
        %3175 = vmatprep.subr.mxu0 0.0
        %3176 = vmatpush1.msra.mxu0 0.0
        %3177 = vmatprep.subr.mxu0 0.0
        %3178 = vmatpush1.msra.mxu0 0.0
        %3179 = vmatprep.subr.mxu0 0.0
        %3180 = vmatpush1.msra.mxu0 0.0
        %3181 = vmatprep.subr.mxu0 0.0
        %3182 = vmatpush1.msra.mxu0 0.0
        %3183 = vmatprep.subr.mxu0 0.0
        %3184 = vmatpush1.msra.mxu0 0.0
        %3185 = vmatprep.subr.mxu0 0.0
        %3186 = vmatpush1.msra.mxu0 0.0
        %3187 = vmatprep.subr.mxu0 0.0
        %3188 = vmatpush1.msra.mxu0 0.0
        %3189 = vmatprep.subr.mxu0 0.0
        %3190 = vmatpush1.msra.mxu0 0.0
        %3191 = vmatprep.subr.mxu0 0.0
        %3192 = vmatpush1.msra.mxu0 0.0
        %3193 = vmatprep.subr.mxu0 0.0
        %3194 = vmatpush1.msra.mxu0 0.0
        %3195 = vmatprep.subr.mxu0 0.0
        %3196 = vmatpush1.msra.mxu0 0.0
        %3197 = vmatprep.subr.mxu0 0.0
        %3198 = vmatpush1.msra.mxu0 0.0
        %3199 = vmatprep.mubr.f32.mxu0 0.0
        %3200 = vmatmul.mubr.f32.gmra.mrb[0].mxu0 %v3133
        %v3201 = vpop.f32.mrb[0].mxu0
        %v3202 = vadd.f32 0.0, %v3201
        %v3203 = vpop.f32.mrb[0].mxu0
        %3204 = vdwg.mxu0
        %v3206 = vsel %vm1304, %v3129, 0
        %3208 = vmatprep.subr.mxu0 0.0
        %3209 = vmatpush1.msra.mxu0 %v2784
        %3210 = vmatprep.subr.mxu0 0.0
        %3211 = vmatpush1.msra.mxu0 0.0
        %3212 = vmatprep.subr.mxu0 0.0
        %3213 = vmatpush1.msra.mxu0 0.0
        %3214 = vmatprep.subr.mxu0 0.0
        %3215 = vmatpush1.msra.mxu0 0.0
        %3216 = vmatprep.subr.mxu0 0.0
        %3217 = vmatpush1.msra.mxu0 0.0
        %3218 = vmatprep.subr.mxu0 0.0
        %3219 = vmatpush1.msra.mxu0 0.0
        %3220 = vmatprep.subr.mxu0 0.0
        %3221 = vmatpush1.msra.mxu0 0.0
        %3222 = vmatprep.subr.mxu0 0.0
        %3223 = vmatpush1.msra.mxu0 0.0
        %3224 = vmatprep.subr.mxu0 0.0
        %3225 = vmatpush1.msra.mxu0 0.0
        %3226 = vmatprep.subr.mxu0 0.0
        %3227 = vmatpush1.msra.mxu0 0.0
        %3228 = vmatprep.subr.mxu0 0.0
        %3229 = vmatpush1.msra.mxu0 0.0
        %3230 = vmatprep.subr.mxu0 0.0
        %3231 = vmatpush1.msra.mxu0 0.0
        %3232 = vmatprep.subr.mxu0 0.0
        %3233 = vmatpush1.msra.mxu0 0.0
        %3234 = vmatprep.subr.mxu0 0.0
        %3235 = vmatpush1.msra.mxu0 0.0
        %3236 = vmatprep.subr.mxu0 0.0
        %3237 = vmatpush1.msra.mxu0 0.0
        %3238 = vmatprep.subr.mxu0 0.0
        %3239 = vmatpush1.msra.mxu0 0.0
        %3240 = vmatprep.subr.mxu0 0.0
        %3241 = vmatpush1.msra.mxu0 0.0
        %3242 = vmatprep.subr.mxu0 0.0
        %3243 = vmatpush1.msra.mxu0 0.0
        %3244 = vmatprep.subr.mxu0 0.0
        %3245 = vmatpush1.msra.mxu0 0.0
        %3246 = vmatprep.subr.mxu0 0.0
        %3247 = vmatpush1.msra.mxu0 0.0
        %3248 = vmatprep.subr.mxu0 0.0
        %3249 = vmatpush1.msra.mxu0 0.0
        %3250 = vmatprep.subr.mxu0 0.0
        %3251 = vmatpush1.msra.mxu0 0.0
        %3252 = vmatprep.subr.mxu0 0.0
        %3253 = vmatpush1.msra.mxu0 0.0
        %3254 = vmatprep.subr.mxu0 0.0
        %3255 = vmatpush1.msra.mxu0 0.0
        %3256 = vmatprep.subr.mxu0 0.0
        %3257 = vmatpush1.msra.mxu0 0.0
        %3258 = vmatprep.subr.mxu0 0.0
        %3259 = vmatpush1.msra.mxu0 0.0
        %3260 = vmatprep.subr.mxu0 0.0
        %3261 = vmatpush1.msra.mxu0 0.0
        %3262 = vmatprep.subr.mxu0 0.0
        %3263 = vmatpush1.msra.mxu0 0.0
        %3264 = vmatprep.subr.mxu0 0.0
        %3265 = vmatpush1.msra.mxu0 0.0
        %3266 = vmatprep.subr.mxu0 0.0
        %3267 = vmatpush1.msra.mxu0 0.0
        %3268 = vmatprep.subr.mxu0 0.0
        %3269 = vmatpush1.msra.mxu0 0.0
        %3270 = vmatprep.subr.mxu0 0.0
        %3271 = vmatpush1.msra.mxu0 0.0
        %3272 = vmatprep.mubr.f32.mxu0 0.0
        %3273 = vmatmul.mubr.f32.gmra.mrb[0].mxu0 %v3206
        %v3274 = vpop.f32.mrb[0].mxu0
        %v3275 = vadd.f32 0.0, %v3274
        %v3276 = vpop.f32.mrb[0].mxu0
        %3277 = vdwg.mxu0
        %v3279 = vsel %vm1304, %v3130, 0
        %3281 = vmatprep.subr.mxu0 0.0
        %3282 = vmatpush1.msra.mxu0 %v2787
        %3283 = vmatprep.subr.mxu0 0.0
        %3284 = vmatpush1.msra.mxu0 0.0
        %3285 = vmatprep.subr.mxu0 0.0
        %3286 = vmatpush1.msra.mxu0 0.0
        %3287 = vmatprep.subr.mxu0 0.0
        %3288 = vmatpush1.msra.mxu0 0.0
        %3289 = vmatprep.subr.mxu0 0.0
        %3290 = vmatpush1.msra.mxu0 0.0
        %3291 = vmatprep.subr.mxu0 0.0
        %3292 = vmatpush1.msra.mxu0 0.0
        %3293 = vmatprep.subr.mxu0 0.0
        %3294 = vmatpush1.msra.mxu0 0.0
        %3295 = vmatprep.subr.mxu0 0.0
        %3296 = vmatpush1.msra.mxu0 0.0
        %3297 = vmatprep.subr.mxu0 0.0
        %3298 = vmatpush1.msra.mxu0 0.0
        %3299 = vmatprep.subr.mxu0 0.0
        %3300 = vmatpush1.msra.mxu0 0.0
        %3301 = vmatprep.subr.mxu0 0.0
        %3302 = vmatpush1.msra.mxu0 0.0
        %3303 = vmatprep.subr.mxu0 0.0
        %3304 = vmatpush1.msra.mxu0 0.0
        %3305 = vmatprep.subr.mxu0 0.0
        %3306 = vmatpush1.msra.mxu0 0.0
        %3307 = vmatprep.subr.mxu0 0.0
        %3308 = vmatpush1.msra.mxu0 0.0
        %3309 = vmatprep.subr.mxu0 0.0
        %3310 = vmatpush1.msra.mxu0 0.0
        %3311 = vmatprep.subr.mxu0 0.0
        %3312 = vmatpush1.msra.mxu0 0.0
        %3313 = vmatprep.subr.mxu0 0.0
        %3314 = vmatpush1.msra.mxu0 0.0
        %3315 = vmatprep.subr.mxu0 0.0
        %3316 = vmatpush1.msra.mxu0 0.0
        %3317 = vmatprep.subr.mxu0 0.0
        %3318 = vmatpush1.msra.mxu0 0.0
        %3319 = vmatprep.subr.mxu0 0.0
        %3320 = vmatpush1.msra.mxu0 0.0
        %3321 = vmatprep.subr.mxu0 0.0
        %3322 = vmatpush1.msra.mxu0 0.0
        %3323 = vmatprep.subr.mxu0 0.0
        %3324 = vmatpush1.msra.mxu0 0.0
        %3325 = vmatprep.subr.mxu0 0.0
        %3326 = vmatpush1.msra.mxu0 0.0
        %3327 = vmatprep.subr.mxu0 0.0
        %3328 = vmatpush1.msra.mxu0 0.0
        %3329 = vmatprep.subr.mxu0 0.0
        %3330 = vmatpush1.msra.mxu0 0.0
        %3331 = vmatprep.subr.mxu0 0.0
        %3332 = vmatpush1.msra.mxu0 0.0
        %3333 = vmatprep.subr.mxu0 0.0
        %3334 = vmatpush1.msra.mxu0 0.0
        %3335 = vmatprep.subr.mxu0 0.0
        %3336 = vmatpush1.msra.mxu0 0.0
        %3337 = vmatprep.subr.mxu0 0.0
        %3338 = vmatpush1.msra.mxu0 0.0
        %3339 = vmatprep.subr.mxu0 0.0
        %3340 = vmatpush1.msra.mxu0 0.0
        %3341 = vmatprep.subr.mxu0 0.0
        %3342 = vmatpush1.msra.mxu0 0.0
        %3343 = vmatprep.subr.mxu0 0.0
        %3344 = vmatpush1.msra.mxu0 0.0
        %3345 = vmatprep.mubr.f32.mxu0 0.0
        %3346 = vmatmul.mubr.f32.gmra.mrb[0].mxu0 %v3279
        %v3347 = vpop.f32.mrb[0].mxu0
        %v3348 = vadd.f32 0.0, %v3347
        %v3349 = vpop.f32.mrb[0].mxu0
        %3350 = vdwg.mxu0
        %v3352 = vsel %vm1304, %v3131, 0
        %3354 = vmatprep.subr.mxu0 0.0
        %3355 = vmatpush1.msra.mxu0 %v2790
        %3356 = vmatprep.subr.mxu0 0.0
        %3357 = vmatpush1.msra.mxu0 0.0
        %3358 = vmatprep.subr.mxu0 0.0
        %3359 = vmatpush1.msra.mxu0 0.0
        %3360 = vmatprep.subr.mxu0 0.0
        %3361 = vmatpush1.msra.mxu0 0.0
        %3362 = vmatprep.subr.mxu0 0.0
        %3363 = vmatpush1.msra.mxu0 0.0
        %3364 = vmatprep.subr.mxu0 0.0
        %3365 = vmatpush1.msra.mxu0 0.0
        %3366 = vmatprep.subr.mxu0 0.0
        %3367 = vmatpush1.msra.mxu0 0.0
        %3368 = vmatprep.subr.mxu0 0.0
        %3369 = vmatpush1.msra.mxu0 0.0
        %3370 = vmatprep.subr.mxu0 0.0
        %3371 = vmatpush1.msra.mxu0 0.0
        %3372 = vmatprep.subr.mxu0 0.0
        %3373 = vmatpush1.msra.mxu0 0.0
        %3374 = vmatprep.subr.mxu0 0.0
        %3375 = vmatpush1.msra.mxu0 0.0
        %3376 = vmatprep.subr.mxu0 0.0
        %3377 = vmatpush1.msra.mxu0 0.0
        %3378 = vmatprep.subr.mxu0 0.0
        %3379 = vmatpush1.msra.mxu0 0.0
        %3380 = vmatprep.subr.mxu0 0.0
        %3381 = vmatpush1.msra.mxu0 0.0
        %3382 = vmatprep.subr.mxu0 0.0
        %3383 = vmatpush1.msra.mxu0 0.0
        %3384 = vmatprep.subr.mxu0 0.0
        %3385 = vmatpush1.msra.mxu0 0.0
        %3386 = vmatprep.subr.mxu0 0.0
        %3387 = vmatpush1.msra.mxu0 0.0
        %3388 = vmatprep.subr.mxu0 0.0
        %3389 = vmatpush1.msra.mxu0 0.0
        %3390 = vmatprep.subr.mxu0 0.0
        %3391 = vmatpush1.msra.mxu0 0.0
        %3392 = vmatprep.subr.mxu0 0.0
        %3393 = vmatpush1.msra.mxu0 0.0
        %3394 = vmatprep.subr.mxu0 0.0
        %3395 = vmatpush1.msra.mxu0 0.0
        %3396 = vmatprep.subr.mxu0 0.0
        %3397 = vmatpush1.msra.mxu0 0.0
        %3398 = vmatprep.subr.mxu0 0.0
        %3399 = vmatpush1.msra.mxu0 0.0
        %3400 = vmatprep.subr.mxu0 0.0
        %3401 = vmatpush1.msra.mxu0 0.0
        %3402 = vmatprep.subr.mxu0 0.0
        %3403 = vmatpush1.msra.mxu0 0.0
        %3404 = vmatprep.subr.mxu0 0.0
        %3405 = vmatpush1.msra.mxu0 0.0
        %3406 = vmatprep.subr.mxu0 0.0
        %3407 = vmatpush1.msra.mxu0 0.0
        %3408 = vmatprep.subr.mxu0 0.0
        %3409 = vmatpush1.msra.mxu0 0.0
        %3410 = vmatprep.subr.mxu0 0.0
        %3411 = vmatpush1.msra.mxu0 0.0
        %3412 = vmatprep.subr.mxu0 0.0
        %3413 = vmatpush1.msra.mxu0 0.0
        %3414 = vmatprep.subr.mxu0 0.0
        %3415 = vmatpush1.msra.mxu0 0.0
        %3416 = vmatprep.subr.mxu0 0.0
        %3417 = vmatpush1.msra.mxu0 0.0
        %3418 = vmatprep.mubr.f32.mxu0 0.0
        %3419 = vmatmul.mubr.f32.gmra.mrb[0].mxu0 %v3352
        %v3420 = vpop.f32.mrb[0].mxu0
        %v3421 = vadd.f32 0.0, %v3420
        %v3422 = vpop.f32.mrb[0].mxu0
        %3423 = vdwg.mxu0
        %3425 = vrot.lane.b32.xlu0 %v3275, 32
        %v3426 = vpop.permute.xlu0 %3425
        %3429 = vrot.lane.b32.xlu0 %v3348, 64
        %v3430 = vpop.permute.xlu0 %3429
        %3433 = vrot.lane.b32.xlu0 %v3421, 96
        %v3434 = vpop.permute.xlu0 %3433
        %v3436 = vsel %vm1007, %v3202, %v3426
        %v3437 = vsel %vm1654, %v3436, %v3430
        %v3438 = vsel %vm1656, %v3437, %v3434
        %v3439 = vpack.c.bf16 %v3438, %v3438
        %s3440 = scalar_lea.vmem [#allocation6], 64
        %v3441 = vld [vmem:[%s3440] sm:$0xf]
        %v3442 = vld [vmem:[%s3440 + $0x4] sm:$0xf]
        %v3443 = vld [vmem:[%s3440 + $0x8] sm:$0xf]
        %v3444 = vld [vmem:[%s3440 + $0xc] sm:$0xf]
        %v3445 = vld [vmem:[%s3440 + $0x10] sm:$0xf]
        %v3446 = vld [vmem:[%s3440 + $0x14] sm:$0xf]
        %v3447 = vld [vmem:[%s3440 + $0x18] sm:$0xf]
        %v3448 = vld [vmem:[%s3440 + $0x1c] sm:$0xf]
        %v3449 = vld [vmem:[%s3440 + $0x20] sm:$0xf]
        %v3450 = vld [vmem:[%s3440 + $0x24] sm:$0xf]
        %v3451 = vld [vmem:[%s3440 + $0x28] sm:$0xf]
        %v3452 = vld [vmem:[%s3440 + $0x2c] sm:$0xf]
        %v3453 = vld [vmem:[%s3440 + $0x30] sm:$0xf]
        %v3454 = vld [vmem:[%s3440 + $0x34] sm:$0xf]
        %v3455 = vld [vmem:[%s3440 + $0x38] sm:$0xf]
        %v3456 = vld [vmem:[%s3440 + $0x3c] sm:$0xf]
        %s3457 = scalar_lea.vmem %s5, 1
        %v3458 = vld [vmem:[%s3457] sm:$0x1]
        %v3460 = vlaneseq
        %v3461 = vshrl.u32 %v3460, 7
        %v3462 = vsub.s32 0, %v3461
        %v3463 = vrot.slane %v3458, %v3462
        %v3481 = vunpack.c.l.b16 %v3441
        %v3482 = vunpack.c.l.b16 %v3442
        %v3483 = vunpack.c.l.b16 %v3443
        %v3484 = vunpack.c.l.b16 %v3444
        %v3485 = vunpack.c.l.b16 %v3445
        %v3486 = vunpack.c.l.b16 %v3446
        %v3487 = vunpack.c.l.b16 %v3447
        %v3488 = vunpack.c.l.b16 %v3448
        %v3489 = vunpack.c.l.b16 %v3449
        %v3490 = vunpack.c.l.b16 %v3450
        %v3491 = vunpack.c.l.b16 %v3451
        %v3492 = vunpack.c.l.b16 %v3452
        %v3493 = vunpack.c.l.b16 %v3453
        %v3494 = vunpack.c.l.b16 %v3454
        %v3495 = vunpack.c.l.b16 %v3455
        %v3496 = vunpack.c.l.b16 %v3456
        %v3497 = vpack.c.b16 %v3482, %v3481
        %v3498 = vpack.c.b16 %v3484, %v3483
        %v3499 = vpack.c.b16 %v3486, %v3485
        %v3500 = vpack.c.b16 %v3488, %v3487
        %v3501 = vpack.c.b16 %v3490, %v3489
        %v3502 = vpack.c.b16 %v3492, %v3491
        %v3503 = vpack.c.b16 %v3494, %v3493
        %v3504 = vpack.c.b16 %v3496, %v3495
        %3513 = vmatprep.subr.bf16.mxu0 0
        %3514 = vmatpush1.bf16.msra.mxu0 %v3497
        %3515 = vmatprep.subr.bf16.mxu0 0
        %3516 = vmatpush1.bf16.msra.mxu0 %v3498
        %3517 = vmatprep.subr.bf16.mxu0 0
        %3518 = vmatpush1.bf16.msra.mxu0 %v3499
        %3519 = vmatprep.subr.bf16.mxu0 0
        %3520 = vmatpush1.bf16.msra.mxu0 %v3500
        %3521 = vmatprep.subr.bf16.mxu0 0
        %3522 = vmatpush1.bf16.msra.mxu0 %v3501
        %3523 = vmatprep.subr.bf16.mxu0 0
        %3524 = vmatpush1.bf16.msra.mxu0 %v3502
        %3525 = vmatprep.subr.bf16.mxu0 0
        %3526 = vmatpush1.bf16.msra.mxu0 %v3503
        %3527 = vmatprep.subr.bf16.mxu0 0
        %3528 = vmatpush1.bf16.msra.mxu0 %v3504
        %3529 = vmatprep.subr.bf16.mxu0 0
        %3530 = vmatpush1.bf16.msra.mxu0 0
        %3531 = vmatprep.subr.bf16.mxu0 0
        %3532 = vmatpush1.bf16.msra.mxu0 0
        %3533 = vmatprep.subr.bf16.mxu0 0
        %3534 = vmatpush1.bf16.msra.mxu0 0
        %3535 = vmatprep.subr.bf16.mxu0 0
        %3536 = vmatpush1.bf16.msra.mxu0 0
        %3537 = vmatprep.subr.bf16.mxu0 0
        %3538 = vmatpush1.bf16.msra.mxu0 0
        %3539 = vmatprep.subr.bf16.mxu0 0
        %3540 = vmatpush1.bf16.msra.mxu0 0
        %3541 = vmatprep.subr.bf16.mxu0 0
        %3542 = vmatpush1.bf16.msra.mxu0 0
        %3543 = vmatprep.subr.bf16.mxu0 0
        %3544 = vmatpush1.bf16.msra.mxu0 0
        %3545 = vmatprep.mubr.bf16.mxu0 0
        %3546 = vmatmul.mubr.bf16.gmra.mrb[0].mxu0 %v3439
        %v3547 = vpop.f32.mrb[0].mxu0
        %v3548 = vadd.f32 %v3463, %v3547
        %v3549 = vpop.f32.mrb[0].mxu0
        %v3550 = vpop.f32.mrb[0].mxu0
        %v3551 = vpop.f32.mrb[0].mxu0
        %3552 = vdwg.mxu0
        %v3553 = vadd.f32 %v3548, %v2506
        %s3554 = scalar_lea.vmem %s6, 1
        %v3555 = vld [vmem:[%s3554] sm:$0x1]
        %s3556 = scalar_lea.vmem %s7, 1
        %v3557 = vld [vmem:[%s3556] sm:$0x1]
        %3558 = vadd.xlane.f32.xlu0 %v3553
        %v3559 = vpop.xlane.xlu0 %3558
        %v3560 = vmul.f32 %v3559, %v1775
        %v3561 = vsub.f32 %v3553, %v3560
        %v3562 = vmul.f32 %v3561, %v3561
        %3563 = vadd.xlane.f32.xlu0 %v3562
        %v3564 = vpop.xlane.xlu0 %3563
        %v3565 = vmul.f32 %v3564, %v1775
        %v3566 = vadd.f32 %v3565, 1e-12
        %v3567 = vrsqrt.pop %v3566
        %v3568 = vmul.f32 %v3561, %v3567
        %v3570 = vlaneseq
        %v3571 = vshrl.u32 %v3570, 7
        %v3572 = vsub.s32 0, %v3571
        %v3573 = vrot.slane %v3555, %v3572
        %v3575 = vmul.f32 %v3568, %v3573
        %v3577 = vlaneseq
        %v3578 = vshrl.u32 %v3577, 7
        %v3579 = vsub.s32 0, %v3578
        %v3580 = vrot.slane %v3557, %v3579
        %v3582 = vadd.f32 %v3575, %v3580
        %v3583 = vpack.c.bf16 %v3582, %v3582
        %s3584 = scalar_lea.vmem [#allocation7], 256
        %v3585 = vld [vmem:[%s3584] sm:$0xff]
        %v3586 = vld [vmem:[%s3584 + $0x8] sm:$0xff]
        %v3587 = vld [vmem:[%s3584 + $0x10] sm:$0xff]
        %v3588 = vld [vmem:[%s3584 + $0x18] sm:$0xff]
        %v3589 = vld [vmem:[%s3584 + $0x20] sm:$0xff]
        %v3590 = vld [vmem:[%s3584 + $0x28] sm:$0xff]
        %v3591 = vld [vmem:[%s3584 + $0x30] sm:$0xff]
        %v3592 = vld [vmem:[%s3584 + $0x38] sm:$0xff]
        %v3593 = vld [vmem:[%s3584 + $0x40] sm:$0xff]
        %v3594 = vld [vmem:[%s3584 + $0x48] sm:$0xff]
        %v3595 = vld [vmem:[%s3584 + $0x50] sm:$0xff]
        %v3596 = vld [vmem:[%s3584 + $0x58] sm:$0xff]
        %v3597 = vld [vmem:[%s3584 + $0x60] sm:$0xff]
        %v3598 = vld [vmem:[%s3584 + $0x68] sm:$0xff]
        %v3599 = vld [vmem:[%s3584 + $0x70] sm:$0xff]
        %v3600 = vld [vmem:[%s3584 + $0x78] sm:$0xff]
        %v3601 = vld [vmem:[%s3584 + $0x80] sm:$0xff]
        %v3602 = vld [vmem:[%s3584 + $0x88] sm:$0xff]
        %v3603 = vld [vmem:[%s3584 + $0x90] sm:$0xff]
        %v3604 = vld [vmem:[%s3584 + $0x98] sm:$0xff]
        %v3605 = vld [vmem:[%s3584 + $0xa0] sm:$0xff]
        %v3606 = vld [vmem:[%s3584 + $0xa8] sm:$0xff]
        %v3607 = vld [vmem:[%s3584 + $0xb0] sm:$0xff]
        %v3608 = vld [vmem:[%s3584 + $0xb8] sm:$0xff]
        %v3609 = vld [vmem:[%s3584 + $0xc0] sm:$0xff]
        %v3610 = vld [vmem:[%s3584 + $0xc8] sm:$0xff]
        %v3611 = vld [vmem:[%s3584 + $0xd0] sm:$0xff]
        %v3612 = vld [vmem:[%s3584 + $0xd8] sm:$0xff]
        %v3613 = vld [vmem:[%s3584 + $0xe0] sm:$0xff]
        %v3614 = vld [vmem:[%s3584 + $0xe8] sm:$0xff]
        %v3615 = vld [vmem:[%s3584 + $0xf0] sm:$0xff]
        %v3616 = vld [vmem:[%s3584 + $0xf8] sm:$0xff]
        %s3617 = scalar_lea.vmem %s9, 4
        %v3618 = vld [vmem:[%s3617] sm:$0xf]
        %v3620 = vlaneseq
        %v3621 = vshrl.u32 %v3620, 7
        %v3622 = vsub.s32 0, %v3621
        %v3623 = vrot.slane %v3618, %v3622
        %v3624 = vlaneseq
        %v3625 = vshrl.u32 %v3624, 7
        %v3626 = vsub.s32 1, %v3625
        %v3627 = vrot.slane %v3618, %v3626
        %v3628 = vlaneseq
        %v3629 = vshrl.u32 %v3628, 7
        %v3630 = vsub.s32 2, %v3629
        %v3631 = vrot.slane %v3618, %v3630
        %v3632 = vlaneseq
        %v3633 = vshrl.u32 %v3632, 7
        %v3634 = vsub.s32 3, %v3633
        %v3635 = vrot.slane %v3618, %v3634
        %v3672 = vunpack.c.l.b16 %v3585
        %v3673 = vunpack.c.h.b16 %v3585
        %v3674 = vunpack.c.l.b16 %v3586
        %v3675 = vunpack.c.h.b16 %v3586
        %v3676 = vunpack.c.l.b16 %v3587
        %v3677 = vunpack.c.h.b16 %v3587
        %v3678 = vunpack.c.l.b16 %v3588
        %v3679 = vunpack.c.h.b16 %v3588
        %v3680 = vunpack.c.l.b16 %v3589
        %v3681 = vunpack.c.h.b16 %v3589
        %v3682 = vunpack.c.l.b16 %v3590
        %v3683 = vunpack.c.h.b16 %v3590
        %v3684 = vunpack.c.l.b16 %v3591
        %v3685 = vunpack.c.h.b16 %v3591
        %v3686 = vunpack.c.l.b16 %v3592
        %v3687 = vunpack.c.h.b16 %v3592
        %v3688 = vunpack.c.l.b16 %v3593
        %v3689 = vunpack.c.h.b16 %v3593
        %v3690 = vunpack.c.l.b16 %v3594
        %v3691 = vunpack.c.h.b16 %v3594
        %v3692 = vunpack.c.l.b16 %v3595
        %v3693 = vunpack.c.h.b16 %v3595
        %v3694 = vunpack.c.l.b16 %v3596
        %v3695 = vunpack.c.h.b16 %v3596
        %v3696 = vunpack.c.l.b16 %v3597
        %v3697 = vunpack.c.h.b16 %v3597
        %v3698 = vunpack.c.l.b16 %v3598
        %v3699 = vunpack.c.h.b16 %v3598
        %v3700 = vunpack.c.l.b16 %v3599
        %v3701 = vunpack.c.h.b16 %v3599
        %v3702 = vunpack.c.l.b16 %v3600
        %v3703 = vunpack.c.h.b16 %v3600
        %v3704 = vunpack.c.l.b16 %v3601
        %v3705 = vunpack.c.h.b16 %v3601
        %v3706 = vunpack.c.l.b16 %v3602
        %v3707 = vunpack.c.h.b16 %v3602
        %v3708 = vunpack.c.l.b16 %v3603
        %v3709 = vunpack.c.h.b16 %v3603
        %v3710 = vunpack.c.l.b16 %v3604
        %v3711 = vunpack.c.h.b16 %v3604
        %v3712 = vunpack.c.l.b16 %v3605
        %v3713 = vunpack.c.h.b16 %v3605
        %v3714 = vunpack.c.l.b16 %v3606
        %v3715 = vunpack.c.h.b16 %v3606
        %v3716 = vunpack.c.l.b16 %v3607
        %v3717 = vunpack.c.h.b16 %v3607
        %v3718 = vunpack.c.l.b16 %v3608
        %v3719 = vunpack.c.h.b16 %v3608
        %v3720 = vunpack.c.l.b16 %v3609
        %v3721 = vunpack.c.h.b16 %v3609
        %v3722 = vunpack.c.l.b16 %v3610
        %v3723 = vunpack.c.h.b16 %v3610
        %v3724 = vunpack.c.l.b16 %v3611
        %v3725 = vunpack.c.h.b16 %v3611
        %v3726 = vunpack.c.l.b16 %v3612
        %v3727 = vunpack.c.h.b16 %v3612
        %v3728 = vunpack.c.l.b16 %v3613
        %v3729 = vunpack.c.h.b16 %v3613
        %v3730 = vunpack.c.l.b16 %v3614
        %v3731 = vunpack.c.h.b16 %v3614
        %v3732 = vunpack.c.l.b16 %v3615
        %v3733 = vunpack.c.h.b16 %v3615
        %v3734 = vunpack.c.l.b16 %v3616
        %v3735 = vunpack.c.h.b16 %v3616
        %v3736 = vpack.c.b16 %v3676, %v3672
        %v3737 = vpack.c.b16 %v3677, %v3673
        %v3738 = vpack.c.b16 %v3678, %v3674
        %v3739 = vpack.c.b16 %v3679, %v3675
        %v3740 = vpack.c.b16 %v3684, %v3680
        %v3741 = vpack.c.b16 %v3685, %v3681
        %v3742 = vpack.c.b16 %v3686, %v3682
        %v3743 = vpack.c.b16 %v3687, %v3683
        %v3744 = vpack.c.b16 %v3692, %v3688
        %v3745 = vpack.c.b16 %v3693, %v3689
        %v3746 = vpack.c.b16 %v3694, %v3690
        %v3747 = vpack.c.b16 %v3695, %v3691
        %v3748 = vpack.c.b16 %v3700, %v3696
        %v3749 = vpack.c.b16 %v3701, %v3697
        %v3750 = vpack.c.b16 %v3702, %v3698
        %v3751 = vpack.c.b16 %v3703, %v3699
        %v3752 = vpack.c.b16 %v3708, %v3704
        %v3753 = vpack.c.b16 %v3709, %v3705
        %v3754 = vpack.c.b16 %v3710, %v3706
        %v3755 = vpack.c.b16 %v3711, %v3707
        %v3756 = vpack.c.b16 %v3716, %v3712
        %v3757 = vpack.c.b16 %v3717, %v3713
        %v3758 = vpack.c.b16 %v3718, %v3714
        %v3759 = vpack.c.b16 %v3719, %v3715
        %v3760 = vpack.c.b16 %v3724, %v3720
        %v3761 = vpack.c.b16 %v3725, %v3721
        %v3762 = vpack.c.b16 %v3726, %v3722
        %v3763 = vpack.c.b16 %v3727, %v3723
        %v3764 = vpack.c.b16 %v3732, %v3728
        %v3765 = vpack.c.b16 %v3733, %v3729
        %v3766 = vpack.c.b16 %v3734, %v3730
        %v3767 = vpack.c.b16 %v3735, %v3731
        %3800 = vmatprep.subr.bf16.mxu0 %v3737
        %3801 = vmatpush1.bf16.msra.mxu0 %v3736
        %3802 = vmatprep.subr.bf16.mxu0 %v3741
        %3803 = vmatpush1.bf16.msra.mxu0 %v3740
        %3804 = vmatprep.subr.bf16.mxu0 %v3745
        %3805 = vmatpush1.bf16.msra.mxu0 %v3744
        %3806 = vmatprep.subr.bf16.mxu0 %v3749
        %3807 = vmatpush1.bf16.msra.mxu0 %v3748
        %3808 = vmatprep.subr.bf16.mxu0 %v3753
        %3809 = vmatpush1.bf16.msra.mxu0 %v3752
        %3810 = vmatprep.subr.bf16.mxu0 %v3757
        %3811 = vmatpush1.bf16.msra.mxu0 %v3756
        %3812 = vmatprep.subr.bf16.mxu0 %v3761
        %3813 = vmatpush1.bf16.msra.mxu0 %v3760
        %3814 = vmatprep.subr.bf16.mxu0 %v3765
        %3815 = vmatpush1.bf16.msra.mxu0 %v3764
        %3816 = vmatprep.subr.bf16.mxu0 0
        %3817 = vmatpush1.bf16.msra.mxu0 0
        %3818 = vmatprep.subr.bf16.mxu0 0
        %3819 = vmatpush1.bf16.msra.mxu0 0
        %3820 = vmatprep.subr.bf16.mxu0 0
        %3821 = vmatpush1.bf16.msra.mxu0 0
        %3822 = vmatprep.subr.bf16.mxu0 0
        %3823 = vmatpush1.bf16.msra.mxu0 0
        %3824 = vmatprep.subr.bf16.mxu0 0
        %3825 = vmatpush1.bf16.msra.mxu0 0
        %3826 = vmatprep.subr.bf16.mxu0 0
        %3827 = vmatpush1.bf16.msra.mxu0 0
        %3828 = vmatprep.subr.bf16.mxu0 0
        %3829 = vmatpush1.bf16.msra.mxu0 0
        %3830 = vmatprep.subr.bf16.mxu0 0
        %3831 = vmatpush1.bf16.msra.mxu0 0
        %3832 = vmatprep.mubr.bf16.mxu0 0
        %3833 = vmatmul.mubr.bf16.gmra.mrb[0].mxu0 %v3583
        %v3834 = vpop.f32.mrb[0].mxu0
        %v3835 = vadd.f32 %v3623, %v3834
        %v3836 = vpop.f32.mrb[0].mxu0
        %v3837 = vadd.f32 %v3627, %v3836
        %v3838 = vpop.f32.mrb[0].mxu0
        %v3839 = vpop.f32.mrb[0].mxu0
        %3840 = vdwg.mxu0
        %3841 = vmatprep.subr.bf16.mxu0 %v3739
        %3842 = vmatpush1.bf16.msra.mxu0 %v3738
        %3843 = vmatprep.subr.bf16.mxu0 %v3743
        %3844 = vmatpush1.bf16.msra.mxu0 %v3742
        %3845 = vmatprep.subr.bf16.mxu0 %v3747
        %3846 = vmatpush1.bf16.msra.mxu0 %v3746
        %3847 = vmatprep.subr.bf16.mxu0 %v3751
        %3848 = vmatpush1.bf16.msra.mxu0 %v3750
        %3849 = vmatprep.subr.bf16.mxu0 %v3755
        %3850 = vmatpush1.bf16.msra.mxu0 %v3754
        %3851 = vmatprep.subr.bf16.mxu0 %v3759
        %3852 = vmatpush1.bf16.msra.mxu0 %v3758
        %3853 = vmatprep.subr.bf16.mxu0 %v3763
        %3854 = vmatpush1.bf16.msra.mxu0 %v3762
        %3855 = vmatprep.subr.bf16.mxu0 %v3767
        %3856 = vmatpush1.bf16.msra.mxu0 %v3766
        %3857 = vmatprep.subr.bf16.mxu0 0
        %3858 = vmatpush1.bf16.msra.mxu0 0
        %3859 = vmatprep.subr.bf16.mxu0 0
        %3860 = vmatpush1.bf16.msra.mxu0 0
        %3861 = vmatprep.subr.bf16.mxu0 0
        %3862 = vmatpush1.bf16.msra.mxu0 0
        %3863 = vmatprep.subr.bf16.mxu0 0
        %3864 = vmatpush1.bf16.msra.mxu0 0
        %3865 = vmatprep.subr.bf16.mxu0 0
        %3866 = vmatpush1.bf16.msra.mxu0 0
        %3867 = vmatprep.subr.bf16.mxu0 0
        %3868 = vmatpush1.bf16.msra.mxu0 0
        %3869 = vmatprep.subr.bf16.mxu0 0
        %3870 = vmatpush1.bf16.msra.mxu0 0
        %3871 = vmatprep.subr.bf16.mxu0 0
        %3872 = vmatpush1.bf16.msra.mxu0 0
        %3873 = vmatprep.mubr.bf16.mxu0 0
        %3874 = vmatmul.mubr.bf16.gmra.mrb[0].mxu0 %v3583
        %v3875 = vpop.f32.mrb[0].mxu0
        %v3876 = vadd.f32 %v3631, %v3875
        %v3877 = vpop.f32.mrb[0].mxu0
        %v3878 = vadd.f32 %v3635, %v3877
        %v3879 = vpop.f32.mrb[0].mxu0
        %v3880 = vpop.f32.mrb[0].mxu0
        %3881 = vdwg.mxu0
        %v3882 = vmul.f32 %v3835, 0.5
        %v3883 = vmul.f32 %v3837, 0.5
        %v3884 = vmul.f32 %v3876, 0.5
        %v3885 = vmul.f32 %v3878, 0.5
        %v3886 = vmul.f32 %v3835, %v3835
        %v3887 = vmul.f32 %v3837, %v3837
        %v3888 = vmul.f32 %v3876, %v3876
        %v3889 = vmul.f32 %v3878, %v3878
        %v3890 = vmul.f32 %v3886, %v3835
        %v3891 = vmul.f32 %v3887, %v3837
        %v3892 = vmul.f32 %v3888, %v3876
        %v3893 = vmul.f32 %v3889, %v3878
        %v3894 = vmul.f32 %v3890, 0.044715
        %v3895 = vmul.f32 %v3891, 0.044715
        %v3896 = vmul.f32 %v3892, 0.044715
        %v3897 = vmul.f32 %v3893, 0.044715
        %v3898 = vadd.f32 %v3835, %v3894
        %v3899 = vadd.f32 %v3837, %v3895
        %v3900 = vadd.f32 %v3876, %v3896
        %v3901 = vadd.f32 %v3878, %v3897
        %v3902 = vmul.f32 %v3898, 0.7978846
        %v3903 = vmul.f32 %v3899, 0.7978846
        %v3904 = vmul.f32 %v3900, 0.7978846
        %v3905 = vmul.f32 %v3901, 0.7978846
        %v3906 = vtanh.pop %v3902
        %v3907 = vtanh.pop %v3903
        %v3908 = vtanh.pop %v3904
        %v3909 = vtanh.pop %v3905
        %v3910 = vadd.f32 %v3906, 1.0
        %v3911 = vadd.f32 %v3907, 1.0
        %v3912 = vadd.f32 %v3908, 1.0
        %v3913 = vadd.f32 %v3909, 1.0
        %v3914 = vmul.f32 %v3882, %v3910
        %v3915 = vmul.f32 %v3883, %v3911
        %v3916 = vmul.f32 %v3884, %v3912
        %v3917 = vmul.f32 %v3885, %v3913
        %v3918 = vpack.c.bf16 %v3914, %v3914
        %v3919 = vpack.c.bf16 %v3915, %v3915
        %v3920 = vpack.c.bf16 %v3916, %v3916
        %v3921 = vpack.c.bf16 %v3917, %v3917
        %s3922 = scalar_lea.vmem [#allocation9], 256
        %v3923 = vld [vmem:[%s3922] sm:$0xf]
        %v3924 = vld [vmem:[%s3922 + $0x4] sm:$0xf]
        %v3925 = vld [vmem:[%s3922 + $0x8] sm:$0xf]
        %v3926 = vld [vmem:[%s3922 + $0xc] sm:$0xf]
        %v3927 = vld [vmem:[%s3922 + $0x10] sm:$0xf]
        %v3928 = vld [vmem:[%s3922 + $0x14] sm:$0xf]
        %v3929 = vld [vmem:[%s3922 + $0x18] sm:$0xf]
        %v3930 = vld [vmem:[%s3922 + $0x1c] sm:$0xf]
        %v3931 = vld [vmem:[%s3922 + $0x20] sm:$0xf]
        %v3932 = vld [vmem:[%s3922 + $0x24] sm:$0xf]
        %v3933 = vld [vmem:[%s3922 + $0x28] sm:$0xf]
        %v3934 = vld [vmem:[%s3922 + $0x2c] sm:$0xf]
        %v3935 = vld [vmem:[%s3922 + $0x30] sm:$0xf]
        %v3936 = vld [vmem:[%s3922 + $0x34] sm:$0xf]
        %v3937 = vld [vmem:[%s3922 + $0x38] sm:$0xf]
        %v3938 = vld [vmem:[%s3922 + $0x3c] sm:$0xf]
        %v3939 = vld [vmem:[%s3922 + $0x40] sm:$0xf]
        %v3940 = vld [vmem:[%s3922 + $0x44] sm:$0xf]
        %v3941 = vld [vmem:[%s3922 + $0x48] sm:$0xf]
        %v3942 = vld [vmem:[%s3922 + $0x4c] sm:$0xf]
        %v3943 = vld [vmem:[%s3922 + $0x50] sm:$0xf]
        %v3944 = vld [vmem:[%s3922 + $0x54] sm:$0xf]
        %v3945 = vld [vmem:[%s3922 + $0x58] sm:$0xf]
        %v3946 = vld [vmem:[%s3922 + $0x5c] sm:$0xf]
        %v3947 = vld [vmem:[%s3922 + $0x60] sm:$0xf]
        %v3948 = vld [vmem:[%s3922 + $0x64] sm:$0xf]
        %v3949 = vld [vmem:[%s3922 + $0x68] sm:$0xf]
        %v3950 = vld [vmem:[%s3922 + $0x6c] sm:$0xf]
        %v3951 = vld [vmem:[%s3922 + $0x70] sm:$0xf]
        %v3952 = vld [vmem:[%s3922 + $0x74] sm:$0xf]
        %v3953 = vld [vmem:[%s3922 + $0x78] sm:$0xf]
        %v3954 = vld [vmem:[%s3922 + $0x7c] sm:$0xf]
        %v3955 = vld [vmem:[%s3922 + $0x80] sm:$0xf]
        %v3956 = vld [vmem:[%s3922 + $0x84] sm:$0xf]
        %v3957 = vld [vmem:[%s3922 + $0x88] sm:$0xf]
        %v3958 = vld [vmem:[%s3922 + $0x8c] sm:$0xf]
        %v3959 = vld [vmem:[%s3922 + $0x90] sm:$0xf]
        %v3960 = vld [vmem:[%s3922 + $0x94] sm:$0xf]
        %v3961 = vld [vmem:[%s3922 + $0x98] sm:$0xf]
        %v3962 = vld [vmem:[%s3922 + $0x9c] sm:$0xf]
        %v3963 = vld [vmem:[%s3922 + $0xa0] sm:$0xf]
        %v3964 = vld [vmem:[%s3922 + $0xa4] sm:$0xf]
        %v3965 = vld [vmem:[%s3922 + $0xa8] sm:$0xf]
        %v3966 = vld [vmem:[%s3922 + $0xac] sm:$0xf]
        %v3967 = vld [vmem:[%s3922 + $0xb0] sm:$0xf]
        %v3968 = vld [vmem:[%s3922 + $0xb4] sm:$0xf]
        %v3969 = vld [vmem:[%s3922 + $0xb8] sm:$0xf]
        %v3970 = vld [vmem:[%s3922 + $0xbc] sm:$0xf]
        %v3971 = vld [vmem:[%s3922 + $0xc0] sm:$0xf]
        %v3972 = vld [vmem:[%s3922 + $0xc4] sm:$0xf]
        %v3973 = vld [vmem:[%s3922 + $0xc8] sm:$0xf]
        %v3974 = vld [vmem:[%s3922 + $0xcc] sm:$0xf]
        %v3975 = vld [vmem:[%s3922 + $0xd0] sm:$0xf]
        %v3976 = vld [vmem:[%s3922 + $0xd4] sm:$0xf]
        %v3977 = vld [vmem:[%s3922 + $0xd8] sm:$0xf]
        %v3978 = vld [vmem:[%s3922 + $0xdc] sm:$0xf]
        %v3979 = vld [vmem:[%s3922 + $0xe0] sm:$0xf]
        %v3980 = vld [vmem:[%s3922 + $0xe4] sm:$0xf]
        %v3981 = vld [vmem:[%s3922 + $0xe8] sm:$0xf]
        %v3982 = vld [vmem:[%s3922 + $0xec] sm:$0xf]
        %v3983 = vld [vmem:[%s3922 + $0xf0] sm:$0xf]
        %v3984 = vld [vmem:[%s3922 + $0xf4] sm:$0xf]
        %v3985 = vld [vmem:[%s3922 + $0xf8] sm:$0xf]
        %v3986 = vld [vmem:[%s3922 + $0xfc] sm:$0xf]
        %s3987 = scalar_lea.vmem [#allocation10], 1
        %v3988 = vld [vmem:[%s3987] sm:$0x1]
        %v3990 = vlaneseq
        %v3991 = vshrl.u32 %v3990, 7
        %v3992 = vsub.s32 0, %v3991
        %v3993 = vrot.slane %v3988, %v3992
        %v4059 = vunpack.c.l.b16 %v3923
        %v4060 = vunpack.c.l.b16 %v3924
        %v4061 = vunpack.c.l.b16 %v3925
        %v4062 = vunpack.c.l.b16 %v3926
        %v4063 = vunpack.c.l.b16 %v3927
        %v4064 = vunpack.c.l.b16 %v3928
        %v4065 = vunpack.c.l.b16 %v3929
        %v4066 = vunpack.c.l.b16 %v3930
        %v4067 = vunpack.c.l.b16 %v3931
        %v4068 = vunpack.c.l.b16 %v3932
        %v4069 = vunpack.c.l.b16 %v3933
        %v4070 = vunpack.c.l.b16 %v3934
        %v4071 = vunpack.c.l.b16 %v3935
        %v4072 = vunpack.c.l.b16 %v3936
        %v4073 = vunpack.c.l.b16 %v3937
        %v4074 = vunpack.c.l.b16 %v3938
        %v4075 = vunpack.c.l.b16 %v3939
        %v4076 = vunpack.c.l.b16 %v3940
        %v4077 = vunpack.c.l.b16 %v3941
        %v4078 = vunpack.c.l.b16 %v3942
        %v4079 = vunpack.c.l.b16 %v3943
        %v4080 = vunpack.c.l.b16 %v3944
        %v4081 = vunpack.c.l.b16 %v3945
        %v4082 = vunpack.c.l.b16 %v3946
        %v4083 = vunpack.c.l.b16 %v3947
        %v4084 = vunpack.c.l.b16 %v3948
        %v4085 = vunpack.c.l.b16 %v3949
        %v4086 = vunpack.c.l.b16 %v3950
        %v4087 = vunpack.c.l.b16 %v3951
        %v4088 = vunpack.c.l.b16 %v3952
        %v4089 = vunpack.c.l.b16 %v3953
        %v4090 = vunpack.c.l.b16 %v3954
        %v4091 = vunpack.c.l.b16 %v3955
        %v4092 = vunpack.c.l.b16 %v3956
        %v4093 = vunpack.c.l.b16 %v3957
        %v4094 = vunpack.c.l.b16 %v3958
        %v4095 = vunpack.c.l.b16 %v3959
        %v4096 = vunpack.c.l.b16 %v3960
        %v4097 = vunpack.c.l.b16 %v3961
        %v4098 = vunpack.c.l.b16 %v3962
        %v4099 = vunpack.c.l.b16 %v3963
        %v4100 = vunpack.c.l.b16 %v3964
        %v4101 = vunpack.c.l.b16 %v3965
        %v4102 = vunpack.c.l.b16 %v3966
        %v4103 = vunpack.c.l.b16 %v3967
        %v4104 = vunpack.c.l.b16 %v3968
        %v4105 = vunpack.c.l.b16 %v3969
        %v4106 = vunpack.c.l.b16 %v3970
        %v4107 = vunpack.c.l.b16 %v3971
        %v4108 = vunpack.c.l.b16 %v3972
        %v4109 = vunpack.c.l.b16 %v3973
        %v4110 = vunpack.c.l.b16 %v3974
        %v4111 = vunpack.c.l.b16 %v3975
        %v4112 = vunpack.c.l.b16 %v3976
        %v4113 = vunpack.c.l.b16 %v3977
        %v4114 = vunpack.c.l.b16 %v3978
        %v4115 = vunpack.c.l.b16 %v3979
        %v4116 = vunpack.c.l.b16 %v3980
        %v4117 = vunpack.c.l.b16 %v3981
        %v4118 = vunpack.c.l.b16 %v3982
        %v4119 = vunpack.c.l.b16 %v3983
        %v4120 = vunpack.c.l.b16 %v3984
        %v4121 = vunpack.c.l.b16 %v3985
        %v4122 = vunpack.c.l.b16 %v3986
        %v4123 = vpack.c.b16 %v4060, %v4059
        %v4124 = vpack.c.b16 %v4062, %v4061
        %v4125 = vpack.c.b16 %v4064, %v4063
        %v4126 = vpack.c.b16 %v4066, %v4065
        %v4127 = vpack.c.b16 %v4068, %v4067
        %v4128 = vpack.c.b16 %v4070, %v4069
        %v4129 = vpack.c.b16 %v4072, %v4071
        %v4130 = vpack.c.b16 %v4074, %v4073
        %v4131 = vpack.c.b16 %v4076, %v4075
        %v4132 = vpack.c.b16 %v4078, %v4077
        %v4133 = vpack.c.b16 %v4080, %v4079
        %v4134 = vpack.c.b16 %v4082, %v4081
        %v4135 = vpack.c.b16 %v4084, %v4083
        %v4136 = vpack.c.b16 %v4086, %v4085
        %v4137 = vpack.c.b16 %v4088, %v4087
        %v4138 = vpack.c.b16 %v4090, %v4089
        %v4139 = vpack.c.b16 %v4092, %v4091
        %v4140 = vpack.c.b16 %v4094, %v4093
        %v4141 = vpack.c.b16 %v4096, %v4095
        %v4142 = vpack.c.b16 %v4098, %v4097
        %v4143 = vpack.c.b16 %v4100, %v4099
        %v4144 = vpack.c.b16 %v4102, %v4101
        %v4145 = vpack.c.b16 %v4104, %v4103
        %v4146 = vpack.c.b16 %v4106, %v4105
        %v4147 = vpack.c.b16 %v4108, %v4107
        %v4148 = vpack.c.b16 %v4110, %v4109
        %v4149 = vpack.c.b16 %v4112, %v4111
        %v4150 = vpack.c.b16 %v4114, %v4113
        %v4151 = vpack.c.b16 %v4116, %v4115
        %v4152 = vpack.c.b16 %v4118, %v4117
        %v4153 = vpack.c.b16 %v4120, %v4119
        %v4154 = vpack.c.b16 %v4122, %v4121
        %4187 = vmatprep.subr.bf16.mxu0 0
        %4188 = vmatpush1.bf16.msra.mxu0 %v4123
        %4189 = vmatprep.subr.bf16.mxu0 0
        %4190 = vmatpush1.bf16.msra.mxu0 %v4124
        %4191 = vmatprep.subr.bf16.mxu0 0
        %4192 = vmatpush1.bf16.msra.mxu0 %v4125
        %4193 = vmatprep.subr.bf16.mxu0 0
        %4194 = vmatpush1.bf16.msra.mxu0 %v4126
        %4195 = vmatprep.subr.bf16.mxu0 0
        %4196 = vmatpush1.bf16.msra.mxu0 %v4127
        %4197 = vmatprep.subr.bf16.mxu0 0
        %4198 = vmatpush1.bf16.msra.mxu0 %v4128
        %4199 = vmatprep.subr.bf16.mxu0 0
        %4200 = vmatpush1.bf16.msra.mxu0 %v4129
        %4201 = vmatprep.subr.bf16.mxu0 0
        %4202 = vmatpush1.bf16.msra.mxu0 %v4130
        %4203 = vmatprep.subr.bf16.mxu0 0
        %4204 = vmatpush1.bf16.msra.mxu0 %v4131
        %4205 = vmatprep.subr.bf16.mxu0 0
        %4206 = vmatpush1.bf16.msra.mxu0 %v4132
        %4207 = vmatprep.subr.bf16.mxu0 0
        %4208 = vmatpush1.bf16.msra.mxu0 %v4133
        %4209 = vmatprep.subr.bf16.mxu0 0
        %4210 = vmatpush1.bf16.msra.mxu0 %v4134
        %4211 = vmatprep.subr.bf16.mxu0 0
        %4212 = vmatpush1.bf16.msra.mxu0 %v4135
        %4213 = vmatprep.subr.bf16.mxu0 0
        %4214 = vmatpush1.bf16.msra.mxu0 %v4136
        %4215 = vmatprep.subr.bf16.mxu0 0
        %4216 = vmatpush1.bf16.msra.mxu0 %v4137
        %4217 = vmatprep.subr.bf16.mxu0 0
        %4218 = vmatpush1.bf16.msra.mxu0 %v4138
        %4219 = vmatprep.mubr.bf16.mxu0 %v3919
        %4220 = vmatmul.mubr.bf16.gmra.mrb[0].mxu0 %v3918
        %v4221 = vpop.f32.mrb[0].mxu0
        %v4222 = vadd.f32 %v3993, %v4221
        %v4223 = vpop.f32.mrb[0].mxu0
        %v4224 = vpop.f32.mrb[0].mxu0
        %v4225 = vpop.f32.mrb[0].mxu0
        %4226 = vdwg.mxu0
        %4227 = vmatprep.subr.bf16.mxu0 0
        %4228 = vmatpush1.bf16.msra.mxu0 %v4139
        %4229 = vmatprep.subr.bf16.mxu0 0
        %4230 = vmatpush1.bf16.msra.mxu0 %v4140
        %4231 = vmatprep.subr.bf16.mxu0 0
        %4232 = vmatpush1.bf16.msra.mxu0 %v4141
        %4233 = vmatprep.subr.bf16.mxu0 0
        %4234 = vmatpush1.bf16.msra.mxu0 %v4142
        %4235 = vmatprep.subr.bf16.mxu0 0
        %4236 = vmatpush1.bf16.msra.mxu0 %v4143
        %4237 = vmatprep.subr.bf16.mxu0 0
        %4238 = vmatpush1.bf16.msra.mxu0 %v4144
        %4239 = vmatprep.subr.bf16.mxu0 0
        %4240 = vmatpush1.bf16.msra.mxu0 %v4145
        %4241 = vmatprep.subr.bf16.mxu0 0
        %4242 = vmatpush1.bf16.msra.mxu0 %v4146
        %4243 = vmatprep.subr.bf16.mxu0 0
        %4244 = vmatpush1.bf16.msra.mxu0 %v4147
        %4245 = vmatprep.subr.bf16.mxu0 0
        %4246 = vmatpush1.bf16.msra.mxu0 %v4148
        %4247 = vmatprep.subr.bf16.mxu0 0
        %4248 = vmatpush1.bf16.msra.mxu0 %v4149
        %4249 = vmatprep.subr.bf16.mxu0 0
        %4250 = vmatpush1.bf16.msra.mxu0 %v4150
        %4251 = vmatprep.subr.bf16.mxu0 0
        %4252 = vmatpush1.bf16.msra.mxu0 %v4151
        %4253 = vmatprep.subr.bf16.mxu0 0
        %4254 = vmatpush1.bf16.msra.mxu0 %v4152
        %4255 = vmatprep.subr.bf16.mxu0 0
        %4256 = vmatpush1.bf16.msra.mxu0 %v4153
        %4257 = vmatprep.subr.bf16.mxu0 0
        %4258 = vmatpush1.bf16.msra.mxu0 %v4154
        %4259 = vmatprep.mubr.bf16.mxu0 %v3921
        %4260 = vmatmul.mubr.bf16.gmra.mrb[0].mxu0 %v3920
        %v4261 = vpop.f32.mrb[0].mxu0
        %v4262 = vadd.f32 %v4222, %v4261
        %v4263 = vpop.f32.mrb[0].mxu0
        %v4264 = vpop.f32.mrb[0].mxu0
        %v4265 = vpop.f32.mrb[0].mxu0
        %4266 = vdwg.mxu0
        %v4267 = vadd.f32 %v4262, %v3582
        %s4268 = scalar_lea.vmem [#allocation12], 1
        %v4269 = vld [vmem:[%s4268] sm:$0x1]
        %s4270 = scalar_lea.vmem %s13, 1
        %v4271 = vld [vmem:[%s4270] sm:$0x1]
        %4272 = vadd.xlane.f32.xlu0 %v4267
        %v4273 = vpop.xlane.xlu0 %4272
        %v4274 = vmul.f32 %v4273, %v1775
        %v4275 = vsub.f32 %v4267, %v4274
        %v4276 = vmul.f32 %v4275, %v4275
        %4277 = vadd.xlane.f32.xlu0 %v4276
        %v4278 = vpop.xlane.xlu0 %4277
        %v4279 = vmul.f32 %v4278, %v1775
        %v4280 = vadd.f32 %v4279, 1e-12
        %v4281 = vrsqrt.pop %v4280
        %v4282 = vmul.f32 %v4275, %v4281
        %v4284 = vlaneseq
        %v4285 = vshrl.u32 %v4284, 7
        %v4286 = vsub.s32 0, %v4285
        %v4287 = vrot.slane %v4269, %v4286
        %v4289 = vmul.f32 %v4282, %v4287
        %v4291 = vlaneseq
        %v4292 = vshrl.u32 %v4291, 7
        %v4293 = vsub.s32 0, %v4292
        %v4294 = vrot.slane %v4271, %v4293
        %v4296 = vadd.f32 %v4289, %v4294
        %v4297 = vpack.c.bf16 %v4296, %v4296
        %v4298 = vld [vmem:[%s14] sm:$0xf]
        %v4299 = vld [vmem:[%s14 + $0x4] sm:$0xf]
        %v4300 = vld [vmem:[%s14 + $0x8] sm:$0xf]
        %v4301 = vld [vmem:[%s14 + $0xc] sm:$0xf]
        %v4302 = vld [vmem:[%s14 + $0x10] sm:$0xf]
        %v4303 = vld [vmem:[%s14 + $0x14] sm:$0xf]
        %v4304 = vld [vmem:[%s14 + $0x18] sm:$0xf]
        %v4305 = vld [vmem:[%s14 + $0x1c] sm:$0xf]
        %v4306 = vld [vmem:[%s14 + $0x20] sm:$0xf]
        %v4307 = vld [vmem:[%s14 + $0x24] sm:$0xf]
        %v4308 = vld [vmem:[%s14 + $0x28] sm:$0xf]
        %v4309 = vld [vmem:[%s14 + $0x2c] sm:$0xf]
        %v4310 = vld [vmem:[%s14 + $0x30] sm:$0xf]
        %v4311 = vld [vmem:[%s14 + $0x34] sm:$0xf]
        %v4312 = vld [vmem:[%s14 + $0x38] sm:$0xf]
        %v4313 = vld [vmem:[%s14 + $0x3c] sm:$0xf]
        %v4314 = vld [vmem:[#allocation13] sm:$0x1]
        %v4331 = vunpack.c.l.b16 %v4298
        %v4332 = vunpack.c.l.b16 %v4299
        %v4333 = vunpack.c.l.b16 %v4300
        %v4334 = vunpack.c.l.b16 %v4301
        %v4335 = vunpack.c.l.b16 %v4302
        %v4336 = vunpack.c.l.b16 %v4303
        %v4337 = vunpack.c.l.b16 %v4304
        %v4338 = vunpack.c.l.b16 %v4305
        %v4339 = vunpack.c.l.b16 %v4306
        %v4340 = vunpack.c.l.b16 %v4307
        %v4341 = vunpack.c.l.b16 %v4308
        %v4342 = vunpack.c.l.b16 %v4309
        %v4343 = vunpack.c.l.b16 %v4310
        %v4344 = vunpack.c.l.b16 %v4311
        %v4345 = vunpack.c.l.b16 %v4312
        %v4346 = vunpack.c.l.b16 %v4313
        %v4347 = vpack.c.b16 %v4332, %v4331
        %v4348 = vpack.c.b16 %v4334, %v4333
        %v4349 = vpack.c.b16 %v4336, %v4335
        %v4350 = vpack.c.b16 %v4338, %v4337
        %v4351 = vpack.c.b16 %v4340, %v4339
        %v4352 = vpack.c.b16 %v4342, %v4341
        %v4353 = vpack.c.b16 %v4344, %v4343
        %v4354 = vpack.c.b16 %v4346, %v4345
        %4363 = vmatprep.subr.bf16.mxu0 0
        %4364 = vmatpush1.bf16.msra.mxu0 %v4347
        %4365 = vmatprep.subr.bf16.mxu0 0
        %4366 = vmatpush1.bf16.msra.mxu0 %v4348
        %4367 = vmatprep.subr.bf16.mxu0 0
        %4368 = vmatpush1.bf16.msra.mxu0 %v4349
        %4369 = vmatprep.subr.bf16.mxu0 0
        %4370 = vmatpush1.bf16.msra.mxu0 %v4350
        %4371 = vmatprep.subr.bf16.mxu0 0
        %4372 = vmatpush1.bf16.msra.mxu0 %v4351
        %4373 = vmatprep.subr.bf16.mxu0 0
        %4374 = vmatpush1.bf16.msra.mxu0 %v4352
        %4375 = vmatprep.subr.bf16.mxu0 0
        %4376 = vmatpush1.bf16.msra.mxu0 %v4353
        %4377 = vmatprep.subr.bf16.mxu0 0
        %4378 = vmatpush1.bf16.msra.mxu0 %v4354
        %4379 = vmatprep.subr.bf16.mxu0 0
        %4380 = vmatpush1.bf16.msra.mxu0 0
        %4381 = vmatprep.subr.bf16.mxu0 0
        %4382 = vmatpush1.bf16.msra.mxu0 0
        %4383 = vmatprep.subr.bf16.mxu0 0
        %4384 = vmatpush1.bf16.msra.mxu0 0
        %4385 = vmatprep.subr.bf16.mxu0 0
        %4386 = vmatpush1.bf16.msra.mxu0 0
        %4387 = vmatprep.subr.bf16.mxu0 0
        %4388 = vmatpush1.bf16.msra.mxu0 0
        %4389 = vmatprep.subr.bf16.mxu0 0
        %4390 = vmatpush1.bf16.msra.mxu0 0
        %4391 = vmatprep.subr.bf16.mxu0 0
        %4392 = vmatpush1.bf16.msra.mxu0 0
        %4393 = vmatprep.subr.bf16.mxu0 0
        %4394 = vmatpush1.bf16.msra.mxu0 0
        %4395 = vmatprep.mubr.bf16.mxu0 0
        %4396 = vmatmul.mubr.bf16.gmra.mrb[0].mxu0 %v4297
        %v4397 = vpop.f32.mrb[0].mxu0
        %v4398 = vadd.f32 %v4314, %v4397
        %v4399 = vpop.f32.mrb[0].mxu0
        %v4400 = vpop.f32.mrb[0].mxu0
        %v4401 = vpop.f32.mrb[0].mxu0
        %4402 = vdwg.mxu0
        %v4403 = vtanh.pop %v4398
        %v4404 = vpack.c.bf16 %v4403, %v4403
        %v4405 = vld [vmem:[#allocation15] sm:$0xf]
        %v4406 = vld [vmem:[#allocation15 + $0x4] sm:$0xf]
        %v4407 = vld [vmem:[#allocation15 + $0x8] sm:$0xf]
        %v4408 = vld [vmem:[#allocation15 + $0xc] sm:$0xf]
        %v4409 = vld [vmem:[#allocation15 + $0x10] sm:$0xf]
        %v4410 = vld [vmem:[#allocation15 + $0x14] sm:$0xf]
        %v4411 = vld [vmem:[#allocation15 + $0x18] sm:$0xf]
        %v4412 = vld [vmem:[#allocation15 + $0x1c] sm:$0xf]
        %v4413 = vld [vmem:[#allocation15 + $0x20] sm:$0xf]
        %v4414 = vld [vmem:[#allocation15 + $0x24] sm:$0xf]
        %v4415 = vld [vmem:[#allocation15 + $0x28] sm:$0xf]
        %v4416 = vld [vmem:[#allocation15 + $0x2c] sm:$0xf]
        %v4417 = vld [vmem:[#allocation15 + $0x30] sm:$0xf]
        %v4418 = vld [vmem:[#allocation15 + $0x34] sm:$0xf]
        %v4419 = vld [vmem:[#allocation15 + $0x38] sm:$0xf]
        %v4420 = vld [vmem:[#allocation15 + $0x3c] sm:$0xf]
        %v4421 = vld [vmem:[%s17] sm:$0x1]
        %v4438 = vunpack.c.l.b16 %v4405
        %v4439 = vunpack.c.l.b16 %v4406
        %v4440 = vunpack.c.l.b16 %v4407
        %v4441 = vunpack.c.l.b16 %v4408
        %v4442 = vunpack.c.l.b16 %v4409
        %v4443 = vunpack.c.l.b16 %v4410
        %v4444 = vunpack.c.l.b16 %v4411
        %v4445 = vunpack.c.l.b16 %v4412
        %v4446 = vunpack.c.l.b16 %v4413
        %v4447 = vunpack.c.l.b16 %v4414
        %v4448 = vunpack.c.l.b16 %v4415
        %v4449 = vunpack.c.l.b16 %v4416
        %v4450 = vunpack.c.l.b16 %v4417
        %v4451 = vunpack.c.l.b16 %v4418
        %v4452 = vunpack.c.l.b16 %v4419
        %v4453 = vunpack.c.l.b16 %v4420
        %v4454 = vpack.c.b16 %v4439, %v4438
        %v4455 = vpack.c.b16 %v4441, %v4440
        %v4456 = vpack.c.b16 %v4443, %v4442
        %v4457 = vpack.c.b16 %v4445, %v4444
        %v4458 = vpack.c.b16 %v4447, %v4446
        %v4459 = vpack.c.b16 %v4449, %v4448
        %v4460 = vpack.c.b16 %v4451, %v4450
        %v4461 = vpack.c.b16 %v4453, %v4452
        %4470 = vmatprep.subr.bf16.mxu0 0
        %4471 = vmatpush1.bf16.msra.mxu0 %v4454
        %4472 = vmatprep.subr.bf16.mxu0 0
        %4473 = vmatpush1.bf16.msra.mxu0 %v4455
        %4474 = vmatprep.subr.bf16.mxu0 0
        %4475 = vmatpush1.bf16.msra.mxu0 %v4456
        %4476 = vmatprep.subr.bf16.mxu0 0
        %4477 = vmatpush1.bf16.msra.mxu0 %v4457
        %4478 = vmatprep.subr.bf16.mxu0 0
        %4479 = vmatpush1.bf16.msra.mxu0 %v4458
        %4480 = vmatprep.subr.bf16.mxu0 0
        %4481 = vmatpush1.bf16.msra.mxu0 %v4459
        %4482 = vmatprep.subr.bf16.mxu0 0
        %4483 = vmatpush1.bf16.msra.mxu0 %v4460
        %4484 = vmatprep.subr.bf16.mxu0 0
        %4485 = vmatpush1.bf16.msra.mxu0 %v4461
        %4486 = vmatprep.subr.bf16.mxu0 0
        %4487 = vmatpush1.bf16.msra.mxu0 0
        %4488 = vmatprep.subr.bf16.mxu0 0
        %4489 = vmatpush1.bf16.msra.mxu0 0
        %4490 = vmatprep.subr.bf16.mxu0 0
        %4491 = vmatpush1.bf16.msra.mxu0 0
        %4492 = vmatprep.subr.bf16.mxu0 0
        %4493 = vmatpush1.bf16.msra.mxu0 0
        %4494 = vmatprep.subr.bf16.mxu0 0
        %4495 = vmatpush1.bf16.msra.mxu0 0
        %4496 = vmatprep.subr.bf16.mxu0 0
        %4497 = vmatpush1.bf16.msra.mxu0 0
        %4498 = vmatprep.subr.bf16.mxu0 0
        %4499 = vmatpush1.bf16.msra.mxu0 0
        %4500 = vmatprep.subr.bf16.mxu0 0
        %4501 = vmatpush1.bf16.msra.mxu0 0
        %4502 = vmatprep.mubr.bf16.mxu0 0
        %4503 = vmatmul.mubr.bf16.gmra.mrb[0].mxu0 %v4404
        %v4504 = vpop.f32.mrb[0].mxu0
        %v4505 = vadd.f32 %v4421, %v4504
        %v4506 = vpop.f32.mrb[0].mxu0
        %v4507 = vpop.f32.mrb[0].mxu0
        %v4508 = vpop.f32.mrb[0].mxu0
        %4509 = vdwg.mxu0
        %4510 = vst [vmem:[%s717] sm:$0x1] %v4505
        %p4511 = scmp.lt.s32.totalorder %s34, 1
        %s4512 = scalar_select %p4511, %s34, 1
        %s4513 = scalar_lea.vmem %s18, %s4512
        // Predicated region
        $region129: #{bert_server_forward.1} parent=91 // pred_check
          %p4514 = pneg %p440
        $region130: #{bert_server_forward.1} parent=91 // pred_check_branch
          %4516 = sbr.rel (%p4514) target = $region132
        $region131: #{bert_server_forward.1} parent=91 // pred_region
          _
        $region132: #{bert_server_forward.1} parent=91 // pred_fallthru
          _
      $region92: #{bert_server_forward.1} parent=5 // pred_fallthru
        _
      %p4517 = scmp.le.s32.totalorder 2, %s29
      // Predicated region
      $region133: #{bert_server_forward.1} parent=5 // pred_check
        %p4518 = pneg %p4517
      $region134: #{bert_server_forward.1} parent=5 // pred_check_branch
        %4520 = sbr.rel (%p4518) target = $region136
      $region135: #{bert_server_forward.1} parent=5 // pred_region
        %s4521 = ssub.s32 %s29, 2
        // Predicated region
        $region137: #{bert_server_forward.1} parent=135 // pred_check
          %p4522 = pneg %p446
        $region138: #{bert_server_forward.1} parent=135 // pred_check_branch
          %4524 = sbr.rel (%p4522) target = $region140
        $region139: #{bert_server_forward.1} parent=135 // pred_region
          %p4525 = scmp.lt.s32.totalorder %s35, 1
          %s4526 = scalar_select %p4525, %s35, 1
          %s4527 = scalar_lea.vmem %s18, %s4526
        $region140: #{bert_server_forward.1} parent=135 // pred_fallthru
          _
      $region136: #{bert_server_forward.1} parent=5 // pred_fallthru
        _
    $region6: #{bert_server_forward.1} parent=1 // loop_footer
      %s33 = sadd.s32 1, %s29
    $region7: #{bert_server_forward.1} parent=1 // loop_footer_branch
      %28 = sbr.rel target = $region3
    $region8: #{bert_server_forward.1} parent=1 // loop_exit
      _
    %4528 = vsyncpa [#allocation3], 1
    %s4529 = scalar_lea.sflag [#allocation3], 1
    %4530 = vsyncpa %s4529, 1
    %4531 = vsyncpa [#allocation5], 1
    %4532 = vsyncpa [#allocation8], 1
    %4533 = vsyncpa [#allocation11], 1
    %4534 = vsyncpa [#allocation14], 1

</llo_original>
